<compile_context>
chip_gen: v5e
topology: v5e:2x2
jax: 0.10.0
libtpu: 0.0.40
codegen_flags: <defaults>
</compile_context>

<pallas_src>
import jax
import jax.numpy as jnp
from jax import lax
from jax.experimental import pallas as pl
from jax.experimental.pallas import tpu as pltpu


# ---------------------------------------------------------------------------
# Fused forward kernel: one grid step == TB samples.
# Activation layouts inside the kernel (per batch tile of TB samples):
#   x    : (TB*28, 28)    row = s*28 + h, lane = w              (bf16)
#   y1   : (TB*28, 256)   lane = w*6 + c  (168 real, rest 0)
#   y2   : (TB*10, 256)   row = s*10 + oy, lane = ox*16 + o (160 real, rest 0)
#   h1/h2/logits : (TB, 128)   FC activations, zero-padded lanes
# ---------------------------------------------------------------------------
def _lenet5_kernel(x_ref, e1_ref, b1_ref, g_ref, t2_ref, b2_ref, h_ref,
                   wf1_ref, bf1_ref, wf2_ref, bf2_ref, wf3_ref, bf3_ref,
                   o_ref):
    def mm(a, b):
        # bf16 MXU operands, f32 accumulation (weights are already bf16).
        return jnp.dot(a.astype(jnp.bfloat16), b.astype(jnp.bfloat16),
                       preferred_element_type=jnp.float32)

    x = x_ref[...]                                                 # (TB*28, 28) bf16

    # conv1 (1x1, C_in=1) folded into the channel-expansion matrix E1, + bias + ReLU
    y1 = jnp.maximum(mm(x, e1_ref[...]) + b1_ref[...], 0.0)        # (TB*28, 256)

    # conv2 stage: 5 INDEPENDENT block-diag {pool1-height + kernel-row-shift}
    # selections, lane-concatenated (256-aligned blocks), then ONE matmul against
    # the stacked Toeplitz weight (pool1-width already folded in).
    z = [mm(g_ref[ki], y1) for ki in range(5)]                     # 5 x (TB*10, 256)
    zcat = jnp.concatenate(z, axis=1)                              # (TB*10, 1280)
    y2 = jnp.maximum(mm(zcat, t2_ref[...]) + b2_ref[...], 0.0)     # (TB*10, 256)

    # fc1 stage: 5 INDEPENDENT pool2-height selections, lane concat, then ONE matmul
    # (pool2-width + torch flatten folded into wf1 in the wrapper).
    r = [mm(h_ref[py], y2) for py in range(5)]                     # 5 x (TB, 256)
    rcat = jnp.concatenate(r, axis=1)                              # (TB, 1280)
    h1 = jnp.maximum(mm(rcat, wf1_ref[...]) + bf1_ref[...], 0.0)   # (TB, 128)

    # fc2 / fc3 (lane-padded to 128; padded rows/cols of the weights are zero)
    h2 = jnp.maximum(mm(h1, wf2_ref[...]) + bf2_ref[...], 0.0)     # (TB, 128)
    logits = mm(h2, wf3_ref[...]) + bf3_ref[...]                   # (TB, 128)

    # Masked, numerically stable log_softmax over the 10 real classes.
    lane = lax.broadcasted_iota(jnp.int32, logits.shape, 1)
    logits = jnp.where(lane < 10, logits, -1e30)
    m = jnp.max(logits, axis=-1, keepdims=True)
    zl = logits - m
    lse = jnp.log(jnp.sum(jnp.exp(zl), axis=-1, keepdims=True))

    # One lane-dense 128-wide row per sample; wrapper slices [:, :10].
    o_ref[...] = zl - lse


# ---------------------------------------------------------------------------
# Wrapper: builds the constant expansion / selection / folded-weight matrices
# once in f32 (plain XLA, cheap), casts to bf16, runs the single fused kernel.
# ---------------------------------------------------------------------------
def lenet5_forward(x, params, tb=8):
    (w1, b1, w2, b2, wf1, bf1, wf2, bf2, wf3, bf3) = params
    f32, bf16 = jnp.float32, jnp.bfloat16
    n = x.shape[0]
    n_pad = -(-n // tb) * tb                 # pad batch to a multiple of TB

    # ---- input: batch stacked on rows, pre-cast to bf16 (halves input DMA) ----
    xs = x.reshape(n, 28, 28).astype(f32)
    if n_pad != n:
        xs = jnp.concatenate([xs, jnp.zeros((n_pad - n, 28, 28), f32)], axis=0)
    xs = xs.reshape(n_pad * 28, 28).astype(bf16)

    # ---- conv1 (1x1) folded into a lane-expansion matrix (lane = w*6 + c) ----
    w1v = w1.reshape(6).astype(f32)
    e1 = jnp.kron(jnp.eye(28, dtype=f32), w1v.reshape(1, 6))             # (28, 168)
    e1 = jnp.pad(e1, ((0, 0), (0, 256 - 168)))                           # (28, 256)
    b1row = jnp.pad(jnp.tile(b1.astype(f32), 28), (0, 256 - 168)).reshape(1, 256)

    # ---- pool1(height) + conv2 row shift: block-diag selection matrices over TB ----
    ph1 = 0.5 * jnp.kron(jnp.eye(14, dtype=f32), jnp.ones((1, 2), f32))  # (14, 28)
    g = jnp.stack([jnp.kron(jnp.eye(tb, dtype=f32), ph1[ki:ki + 10, :])
                   for ki in range(5)], axis=0)                          # (5, tb*10, tb*28)

    # ---- conv2 banded Toeplitz with pool1(width) folded in (fold in f32) ----
    pw1 = 0.5 * jnp.kron(jnp.kron(jnp.eye(14, dtype=f32), jnp.ones((2, 1), f32)),
                         jnp.eye(6, dtype=f32))                          # (168, 84)
    d = jnp.arange(14)[:, None] - jnp.arange(10)[None, :]                # pw - ox
    valid = (d >= 0) & (d <= 4)
    dc = jnp.clip(d, 0, 4)
    w2f = w2.astype(f32)
    blocks = []
    for ki in range(5):
        gk = w2f[:, :, ki, :][:, :, dc]                                  # (16, 6, 14, 10)
        gk = jnp.where(valid[None, None], gk, 0.0)
        t2_ki = gk.transpose(2, 1, 3, 0).reshape(84, 160)                # [pw*6+c, ox*16+o]
        t2p_ki = pw1 @ t2_ki                                             # (168, 160)
        blocks.append(jnp.pad(t2p_ki, ((0, 256 - 168), (0, 256 - 160))))  # (256, 256)
    t2big = jnp.concatenate(blocks, axis=0)                              # (1280, 256)
    b2row = jnp.pad(jnp.tile(b2.astype(f32), 10), (0, 256 - 160)).reshape(1, 256)

    # ---- pool2(height) selection, block-diag over TB ----
    ph2 = 0.5 * jnp.kron(jnp.eye(5, dtype=f32), jnp.ones((1, 2), f32))   # (5, 10)
    hsel = jnp.stack([jnp.kron(jnp.eye(tb, dtype=f32), ph2[py:py + 1, :])
                      for py in range(5)], axis=0)                       # (5, tb, tb*10)

    # ---- fc1 with pool2(width) + torch flatten order folded in ----
    wf1_r = wf1.astype(f32).reshape(120, 16, 5, 5)                       # [j, o, py, px]
    a = wf1_r.transpose(2, 3, 1, 0)[:, jnp.arange(10) // 2, :, :]        # [py, ox, o, j]
    wf1core = 0.5 * a.reshape(5, 160, 120)
    wf1big = jnp.pad(wf1core, ((0, 0), (0, 256 - 160), (0, 128 - 120)))
    wf1big = wf1big.reshape(1280, 128)                                   # rows py*256 + ox*16+o
    bf1row = jnp.pad(bf1.astype(f32), (0, 8)).reshape(1, 128)

    wf2p = jnp.zeros((128, 128), f32).at[:120, :84].set(wf2.astype(f32).T)
    bf2row = jnp.pad(bf2.astype(f32), (0, 44)).reshape(1, 128)
    wf3p = jnp.zeros((128, 128), f32).at[:84, :10].set(wf3.astype(f32).T)
    bf3row = jnp.pad(bf3.astype(f32), (0, 118)).reshape(1, 128)

    cast = lambda arr: arr.astype(bf16)      # bf16 MXU operands; biases stay f32
    const2 = lambda i: (0, 0)
    const3 = lambda i: (0, 0, 0)

    out = pl.pallas_call(
        _lenet5_kernel,
        out_shape=jax.ShapeDtypeStruct((n_pad, 128), jnp.float32),
        grid=(n_pad // tb,),
        in_specs=[
            pl.BlockSpec((tb * 28, 28), lambda i: (i, 0)),       # x tile (TB samples)
            pl.BlockSpec((28, 256), const2),                     # e1
            pl.BlockSpec((1, 256), const2),                      # b1row
            pl.BlockSpec((5, tb * 10, tb * 28), const3),         # g (pool1-h + shift)
            pl.BlockSpec((1280, 256), const2),                   # t2big
            pl.BlockSpec((1, 256), const2),                      # b2row
            pl.BlockSpec((5, tb, tb * 10), const3),              # hsel (pool2-h)
            pl.BlockSpec((1280, 128), const2),                   # wf1big
            pl.BlockSpec((1, 128), const2),                      # bf1row
            pl.BlockSpec((128, 128), const2),                    # wf2p
            pl.BlockSpec((1, 128), const2),                      # bf2row
            pl.BlockSpec((128, 128), const2),                    # wf3p
            pl.BlockSpec((1, 128), const2),                      # bf3row
        ],
        out_specs=pl.BlockSpec((tb, 128), lambda i: (i, 0)),
        compiler_params=pltpu.CompilerParams(
            dimension_semantics=("parallel",)),
    )(xs, cast(e1), b1row, cast(g), cast(t2big), b2row, cast(hsel),
      cast(wf1big), bf1row, cast(wf2p), bf2row, cast(wf3p), bf3row)

    # slice away padded batch rows and padded lanes only at the very end
    return out[:n, :10]


# ---------------------------------------------------------------------------
# Plain-JAX reference (f32) for a numerical sanity check
# ---------------------------------------------------------------------------
def lenet5_reference(x, params):
    (w1, b1, w2, b2, wf1, bf1, wf2, bf2, wf3, bf3) = params
    n = x.shape[0]
    y = jax.nn.relu(x * w1.reshape(1, 6, 1, 1) + b1.reshape(1, 6, 1, 1))
    y = y.reshape(n, 6, 14, 2, 14, 2).mean(axis=(3, 5))
    y = lax.conv_general_dilated(y, w2, (1, 1), "VALID",
                                 dimension_numbers=("NCHW", "OIHW", "NCHW"))
    y = jax.nn.relu(y + b2.reshape(1, 16, 1, 1))
    y = y.reshape(n, 16, 5, 2, 5, 2).mean(axis=(3, 5))
    y = y.reshape(n, 400)
    y = jax.nn.relu(y @ wf1.T + bf1)
    y = jax.nn.relu(y @ wf2.T + bf2)
    y = y @ wf3.T + bf3
    return jax.nn.log_softmax(y, axis=1)


# ---------------------------------------------------------------------------
# Deterministic PyTorch-style parameter init
# ---------------------------------------------------------------------------
def init_params(key):
    ks = jax.random.split(key, 10)

    def u(k, shape, fan_in):
        bound = 1.0 / float(fan_in) ** 0.5
        return jax.random.uniform(k, shape, jnp.float32, -bound, bound)

    w1 = u(ks[0], (6, 1, 1, 1), 1)
    b1 = u(ks[1], (6,), 1)
    w2 = u(ks[2], (16, 6, 5, 5), 6 * 25)
    b2 = u(ks[3], (16,), 6 * 25)
    wf1 = u(ks[4], (120, 400), 400)
    bf1 = u(ks[5], (120,), 400)
    wf2 = u(ks[6], (84, 120), 120)
    bf2 = u(ks[7], (84,), 120)
    wf3 = u(ks[8], (10, 84), 84)
    bf3 = u(ks[9], (10,), 84)
    return (w1, b1, w2, b2, wf1, bf1, wf2, bf2, wf3, bf3)


if __name__ == "__main__":
    key = jax.random.PRNGKey(0)
    kx, kp = jax.random.split(key)
    # NCHW; 28x28 spatial is required by fc1 (16*5*5 = 400 features)
    x = jax.random.normal(kx, (2, 1, 28, 28), jnp.float32)
    params = init_params(kp)

    out = jax.jit(lenet5_forward)(x, params)
    out = jax.block_until_ready(out)

    ref = jax.jit(lenet5_reference)(x, params)
    ref = jax.block_until_ready(ref)

    assert out.shape == (2, 10), out.shape
    # log_softmax rows must exponentiate-and-sum to 1
    assert bool(jnp.allclose(jnp.exp(out).sum(axis=1), 1.0, atol=1e-4))
    # matches the f32 reference up to bf16 matmul rounding
    assert bool(jnp.allclose(out, ref, atol=3e-2)), float(jnp.max(jnp.abs(out - ref)))
    print("KERNEL_OK")
</pallas_src>

<mosaic_0001>
module attributes {stable_mosaic.version = 11 : i64} {
  func.func @_lenet5_kernel(%arg0: i32, %arg1: memref<224x28xbf16, #tpu.memory_space<vmem>>, %arg2: memref<28x256xbf16, #tpu.memory_space<vmem>>, %arg3: memref<1x256xf32, #tpu.memory_space<vmem>>, %arg4: memref<5x80x224xbf16, #tpu.memory_space<vmem>>, %arg5: memref<1280x256xbf16, #tpu.memory_space<vmem>>, %arg6: memref<1x256xf32, #tpu.memory_space<vmem>>, %arg7: memref<5x8x80xbf16, #tpu.memory_space<vmem>>, %arg8: memref<1280x128xbf16, #tpu.memory_space<vmem>>, %arg9: memref<1x128xf32, #tpu.memory_space<vmem>>, %arg10: memref<128x128xbf16, #tpu.memory_space<vmem>>, %arg11: memref<1x128xf32, #tpu.memory_space<vmem>>, %arg12: memref<128x128xbf16, #tpu.memory_space<vmem>>, %arg13: memref<1x128xf32, #tpu.memory_space<vmem>>, %arg14: memref<8x128xf32, #tpu.memory_space<vmem>>) attributes {dimension_semantics = [#tpu.dimension_semantics<parallel>], iteration_bounds = array<i64: 1>, scalar_prefetch = 0 : i64, scratch_operands = 0 : i64, tpu.core_type = #tpu.core_type<tc>, window_params = [{transform_indices = @transform_0, window_bounds = array<i64: 224, 28>}, {pipeline_mode = #tpu.pipeline_mode<synchronous>, transform_indices = @transform_1, window_bounds = array<i64: 28, 256>}, {pipeline_mode = #tpu.pipeline_mode<synchronous>, transform_indices = @transform_2, window_bounds = array<i64: 1, 256>}, {pipeline_mode = #tpu.pipeline_mode<synchronous>, transform_indices = @transform_3, window_bounds = array<i64: 5, 80, 224>}, {pipeline_mode = #tpu.pipeline_mode<synchronous>, transform_indices = @transform_4, window_bounds = array<i64: 1280, 256>}, {pipeline_mode = #tpu.pipeline_mode<synchronous>, transform_indices = @transform_5, window_bounds = array<i64: 1, 256>}, {pipeline_mode = #tpu.pipeline_mode<synchronous>, transform_indices = @transform_6, window_bounds = array<i64: 5, 8, 80>}, {pipeline_mode = #tpu.pipeline_mode<synchronous>, transform_indices = @transform_7, window_bounds = array<i64: 1280, 128>}, {pipeline_mode = #tpu.pipeline_mode<synchronous>, transform_indices = @transform_8, window_bounds = array<i64: 1, 128>}, {pipeline_mode = #tpu.pipeline_mode<synchronous>, transform_indices = @transform_9, window_bounds = array<i64: 128, 128>}, {pipeline_mode = #tpu.pipeline_mode<synchronous>, transform_indices = @transform_10, window_bounds = array<i64: 1, 128>}, {pipeline_mode = #tpu.pipeline_mode<synchronous>, transform_indices = @transform_11, window_bounds = array<i64: 128, 128>}, {pipeline_mode = #tpu.pipeline_mode<synchronous>, transform_indices = @transform_12, window_bounds = array<i64: 1, 128>}, {transform_indices = @transform_13, window_bounds = array<i64: 8, 128>}]} {
    %c0 = arith.constant 0 : index
    %c0_0 = arith.constant 0 : index
    %0 = vector.load %arg1[%c0, %c0_0] : memref<224x28xbf16, #tpu.memory_space<vmem>>, vector<224x28xbf16>
    %c0_1 = arith.constant 0 : index
    %c0_2 = arith.constant 0 : index
    %1 = vector.load %arg2[%c0_1, %c0_2] : memref<28x256xbf16, #tpu.memory_space<vmem>>, vector<28x256xbf16>
    %cst = arith.constant dense<0.000000e+00> : vector<224x256xf32>
    %2 = tpu.matmul %0, %1, %cst {dimension_numbers = #tpu.dot_dimension_numbers<[1], [0], [0], [1], [0, 0, 1, 1], [], []>} : vector<224x28xbf16>, vector<28x256xbf16>, vector<224x256xf32> -> vector<224x256xf32>
    %c0_3 = arith.constant 0 : index
    %c0_4 = arith.constant 0 : index
    %3 = vector.load %arg3[%c0_3, %c0_4] : memref<1x256xf32, #tpu.memory_space<vmem>>, vector<1x256xf32>
    %4 = vector.broadcast %3 : vector<1x256xf32> to vector<224x256xf32>
    %5 = arith.addf %2, %4 : vector<224x256xf32>
    %cst_5 = arith.constant 0.000000e+00 : f32
    %6 = vector.broadcast %cst_5 : f32 to vector<224x256xf32>
    %7 = arith.maximumf %5, %6 : vector<224x256xf32>
    %c0_6 = arith.constant 0 : index
    %c0_7 = arith.constant 0 : index
    %c0_8 = arith.constant 0 : index
    %8 = vector.load %arg4[%c0_6, %c0_7, %c0_8] : memref<5x80x224xbf16, #tpu.memory_space<vmem>>, vector<1x80x224xbf16>
    %9 = vector.shape_cast %8 : vector<1x80x224xbf16> to vector<80x224xbf16>
    %10 = arith.truncf %7 : vector<224x256xf32> to vector<224x256xbf16>
    %cst_9 = arith.constant dense<0.000000e+00> : vector<80x256xf32>
    %11 = tpu.matmul %9, %10, %cst_9 {dimension_numbers = #tpu.dot_dimension_numbers<[1], [0], [0], [1], [0, 0, 1, 1], [], []>} : vector<80x224xbf16>, vector<224x256xbf16>, vector<80x256xf32> -> vector<80x256xf32>
    %c1 = arith.constant 1 : index
    %c0_10 = arith.constant 0 : index
    %c0_11 = arith.constant 0 : index
    %12 = vector.load %arg4[%c1, %c0_10, %c0_11] : memref<5x80x224xbf16, #tpu.memory_space<vmem>>, vector<1x80x224xbf16>
    %13 = vector.shape_cast %12 : vector<1x80x224xbf16> to vector<80x224xbf16>
    %14 = arith.truncf %7 : vector<224x256xf32> to vector<224x256xbf16>
    %cst_12 = arith.constant dense<0.000000e+00> : vector<80x256xf32>
    %15 = tpu.matmul %13, %14, %cst_12 {dimension_numbers = #tpu.dot_dimension_numbers<[1], [0], [0], [1], [0, 0, 1, 1], [], []>} : vector<80x224xbf16>, vector<224x256xbf16>, vector<80x256xf32> -> vector<80x256xf32>
    %c2 = arith.constant 2 : index
    %c0_13 = arith.constant 0 : index
    %c0_14 = arith.constant 0 : index
    %16 = vector.load %arg4[%c2, %c0_13, %c0_14] : memref<5x80x224xbf16, #tpu.memory_space<vmem>>, vector<1x80x224xbf16>
    %17 = vector.shape_cast %16 : vector<1x80x224xbf16> to vector<80x224xbf16>
    %18 = arith.truncf %7 : vector<224x256xf32> to vector<224x256xbf16>
    %cst_15 = arith.constant dense<0.000000e+00> : vector<80x256xf32>
    %19 = tpu.matmul %17, %18, %cst_15 {dimension_numbers = #tpu.dot_dimension_numbers<[1], [0], [0], [1], [0, 0, 1, 1], [], []>} : vector<80x224xbf16>, vector<224x256xbf16>, vector<80x256xf32> -> vector<80x256xf32>
    %c3 = arith.constant 3 : index
    %c0_16 = arith.constant 0 : index
    %c0_17 = arith.constant 0 : index
    %20 = vector.load %arg4[%c3, %c0_16, %c0_17] : memref<5x80x224xbf16, #tpu.memory_space<vmem>>, vector<1x80x224xbf16>
    %21 = vector.shape_cast %20 : vector<1x80x224xbf16> to vector<80x224xbf16>
    %22 = arith.truncf %7 : vector<224x256xf32> to vector<224x256xbf16>
    %cst_18 = arith.constant dense<0.000000e+00> : vector<80x256xf32>
    %23 = tpu.matmul %21, %22, %cst_18 {dimension_numbers = #tpu.dot_dimension_numbers<[1], [0], [0], [1], [0, 0, 1, 1], [], []>} : vector<80x224xbf16>, vector<224x256xbf16>, vector<80x256xf32> -> vector<80x256xf32>
    %c4 = arith.constant 4 : index
    %c0_19 = arith.constant 0 : index
    %c0_20 = arith.constant 0 : index
    %24 = vector.load %arg4[%c4, %c0_19, %c0_20] : memref<5x80x224xbf16, #tpu.memory_space<vmem>>, vector<1x80x224xbf16>
    %25 = vector.shape_cast %24 : vector<1x80x224xbf16> to vector<80x224xbf16>
    %26 = arith.truncf %7 : vector<224x256xf32> to vector<224x256xbf16>
    %cst_21 = arith.constant dense<0.000000e+00> : vector<80x256xf32>
    %27 = tpu.matmul %25, %26, %cst_21 {dimension_numbers = #tpu.dot_dimension_numbers<[1], [0], [0], [1], [0, 0, 1, 1], [], []>} : vector<80x224xbf16>, vector<224x256xbf16>, vector<80x256xf32> -> vector<80x256xf32>
    %28 = tpu.concatenate %11, %15, %19, %23, %27 in 1 : vector<80x256xf32>, vector<80x256xf32>, vector<80x256xf32>, vector<80x256xf32>, vector<80x256xf32> -> vector<80x1280xf32>
    %c0_22 = arith.constant 0 : index
    %c0_23 = arith.constant 0 : index
    %29 = vector.load %arg5[%c0_22, %c0_23] : memref<1280x256xbf16, #tpu.memory_space<vmem>>, vector<1280x256xbf16>
    %30 = arith.truncf %28 : vector<80x1280xf32> to vector<80x1280xbf16>
    %cst_24 = arith.constant dense<0.000000e+00> : vector<80x256xf32>
    %31 = tpu.matmul %30, %29, %cst_24 {dimension_numbers = #tpu.dot_dimension_numbers<[1], [0], [0], [1], [0, 0, 1, 1], [], []>} : vector<80x1280xbf16>, vector<1280x256xbf16>, vector<80x256xf32> -> vector<80x256xf32>
    %c0_25 = arith.constant 0 : index
    %c0_26 = arith.constant 0 : index
    %32 = vector.load %arg6[%c0_25, %c0_26] : memref<1x256xf32, #tpu.memory_space<vmem>>, vector<1x256xf32>
    %33 = vector.broadcast %32 : vector<1x256xf32> to vector<80x256xf32>
    %34 = arith.addf %31, %33 : vector<80x256xf32>
    %cst_27 = arith.constant 0.000000e+00 : f32
    %35 = vector.broadcast %cst_27 : f32 to vector<80x256xf32>
    %36 = arith.maximumf %34, %35 : vector<80x256xf32>
    %c0_28 = arith.constant 0 : index
    %c0_29 = arith.constant 0 : index
    %c0_30 = arith.constant 0 : index
    %37 = vector.load %arg7[%c0_28, %c0_29, %c0_30] : memref<5x8x80xbf16, #tpu.memory_space<vmem>>, vector<1x8x80xbf16>
    %38 = vector.shape_cast %37 : vector<1x8x80xbf16> to vector<8x80xbf16>
    %39 = arith.truncf %36 : vector<80x256xf32> to vector<80x256xbf16>
    %cst_31 = arith.constant dense<0.000000e+00> : vector<8x256xf32>
    %40 = tpu.matmul %38, %39, %cst_31 {dimension_numbers = #tpu.dot_dimension_numbers<[1], [0], [0], [1], [0, 0, 1, 1], [], []>} : vector<8x80xbf16>, vector<80x256xbf16>, vector<8x256xf32> -> vector<8x256xf32>
    %c1_32 = arith.constant 1 : index
    %c0_33 = arith.constant 0 : index
    %c0_34 = arith.constant 0 : index
    %41 = vector.load %arg7[%c1_32, %c0_33, %c0_34] : memref<5x8x80xbf16, #tpu.memory_space<vmem>>, vector<1x8x80xbf16>
    %42 = vector.shape_cast %41 : vector<1x8x80xbf16> to vector<8x80xbf16>
    %43 = arith.truncf %36 : vector<80x256xf32> to vector<80x256xbf16>
    %cst_35 = arith.constant dense<0.000000e+00> : vector<8x256xf32>
    %44 = tpu.matmul %42, %43, %cst_35 {dimension_numbers = #tpu.dot_dimension_numbers<[1], [0], [0], [1], [0, 0, 1, 1], [], []>} : vector<8x80xbf16>, vector<80x256xbf16>, vector<8x256xf32> -> vector<8x256xf32>
    %c2_36 = arith.constant 2 : index
    %c0_37 = arith.constant 0 : index
    %c0_38 = arith.constant 0 : index
    %45 = vector.load %arg7[%c2_36, %c0_37, %c0_38] : memref<5x8x80xbf16, #tpu.memory_space<vmem>>, vector<1x8x80xbf16>
    %46 = vector.shape_cast %45 : vector<1x8x80xbf16> to vector<8x80xbf16>
    %47 = arith.truncf %36 : vector<80x256xf32> to vector<80x256xbf16>
    %cst_39 = arith.constant dense<0.000000e+00> : vector<8x256xf32>
    %48 = tpu.matmul %46, %47, %cst_39 {dimension_numbers = #tpu.dot_dimension_numbers<[1], [0], [0], [1], [0, 0, 1, 1], [], []>} : vector<8x80xbf16>, vector<80x256xbf16>, vector<8x256xf32> -> vector<8x256xf32>
    %c3_40 = arith.constant 3 : index
    %c0_41 = arith.constant 0 : index
    %c0_42 = arith.constant 0 : index
    %49 = vector.load %arg7[%c3_40, %c0_41, %c0_42] : memref<5x8x80xbf16, #tpu.memory_space<vmem>>, vector<1x8x80xbf16>
    %50 = vector.shape_cast %49 : vector<1x8x80xbf16> to vector<8x80xbf16>
    %51 = arith.truncf %36 : vector<80x256xf32> to vector<80x256xbf16>
    %cst_43 = arith.constant dense<0.000000e+00> : vector<8x256xf32>
    %52 = tpu.matmul %50, %51, %cst_43 {dimension_numbers = #tpu.dot_dimension_numbers<[1], [0], [0], [1], [0, 0, 1, 1], [], []>} : vector<8x80xbf16>, vector<80x256xbf16>, vector<8x256xf32> -> vector<8x256xf32>
    %c4_44 = arith.constant 4 : index
    %c0_45 = arith.constant 0 : index
    %c0_46 = arith.constant 0 : index
    %53 = vector.load %arg7[%c4_44, %c0_45, %c0_46] : memref<5x8x80xbf16, #tpu.memory_space<vmem>>, vector<1x8x80xbf16>
    %54 = vector.shape_cast %53 : vector<1x8x80xbf16> to vector<8x80xbf16>
    %55 = arith.truncf %36 : vector<80x256xf32> to vector<80x256xbf16>
    %cst_47 = arith.constant dense<0.000000e+00> : vector<8x256xf32>
    %56 = tpu.matmul %54, %55, %cst_47 {dimension_numbers = #tpu.dot_dimension_numbers<[1], [0], [0], [1], [0, 0, 1, 1], [], []>} : vector<8x80xbf16>, vector<80x256xbf16>, vector<8x256xf32> -> vector<8x256xf32>
    %57 = tpu.concatenate %40, %44, %48, %52, %56 in 1 : vector<8x256xf32>, vector<8x256xf32>, vector<8x256xf32>, vector<8x256xf32>, vector<8x256xf32> -> vector<8x1280xf32>
    %c0_48 = arith.constant 0 : index
    %c0_49 = arith.constant 0 : index
    %58 = vector.load %arg8[%c0_48, %c0_49] : memref<1280x128xbf16, #tpu.memory_space<vmem>>, vector<1280x128xbf16>
    %59 = arith.truncf %57 : vector<8x1280xf32> to vector<8x1280xbf16>
    %cst_50 = arith.constant dense<0.000000e+00> : vector<8x128xf32>
    %60 = tpu.matmul %59, %58, %cst_50 {dimension_numbers = #tpu.dot_dimension_numbers<[1], [0], [0], [1], [0, 0, 1, 1], [], []>} : vector<8x1280xbf16>, vector<1280x128xbf16>, vector<8x128xf32> -> vector<8x128xf32>
    %c0_51 = arith.constant 0 : index
    %c0_52 = arith.constant 0 : index
    %61 = vector.load %arg9[%c0_51, %c0_52] : memref<1x128xf32, #tpu.memory_space<vmem>>, vector<1x128xf32>
    %62 = vector.broadcast %61 : vector<1x128xf32> to vector<8x128xf32>
    %63 = arith.addf %60, %62 : vector<8x128xf32>
    %cst_53 = arith.constant 0.000000e+00 : f32
    %64 = vector.broadcast %cst_53 : f32 to vector<8x128xf32>
    %65 = arith.maximumf %63, %64 : vector<8x128xf32>
    %c0_54 = arith.constant 0 : index
    %c0_55 = arith.constant 0 : index
    %66 = vector.load %arg10[%c0_54, %c0_55] : memref<128x128xbf16, #tpu.memory_space<vmem>>, vector<128x128xbf16>
    %67 = arith.truncf %65 : vector<8x128xf32> to vector<8x128xbf16>
    %cst_56 = arith.constant dense<0.000000e+00> : vector<8x128xf32>
    %68 = tpu.matmul %67, %66, %cst_56 {dimension_numbers = #tpu.dot_dimension_numbers<[1], [0], [0], [1], [0, 0, 1, 1], [], []>} : vector<8x128xbf16>, vector<128x128xbf16>, vector<8x128xf32> -> vector<8x128xf32>
    %c0_57 = arith.constant 0 : index
    %c0_58 = arith.constant 0 : index
    %69 = vector.load %arg11[%c0_57, %c0_58] : memref<1x128xf32, #tpu.memory_space<vmem>>, vector<1x128xf32>
    %70 = vector.broadcast %69 : vector<1x128xf32> to vector<8x128xf32>
    %71 = arith.addf %68, %70 : vector<8x128xf32>
    %cst_59 = arith.constant 0.000000e+00 : f32
    %72 = vector.broadcast %cst_59 : f32 to vector<8x128xf32>
    %73 = arith.maximumf %71, %72 : vector<8x128xf32>
    %c0_60 = arith.constant 0 : index
    %c0_61 = arith.constant 0 : index
    %74 = vector.load %arg12[%c0_60, %c0_61] : memref<128x128xbf16, #tpu.memory_space<vmem>>, vector<128x128xbf16>
    %75 = arith.truncf %73 : vector<8x128xf32> to vector<8x128xbf16>
    %cst_62 = arith.constant dense<0.000000e+00> : vector<8x128xf32>
    %76 = tpu.matmul %75, %74, %cst_62 {dimension_numbers = #tpu.dot_dimension_numbers<[1], [0], [0], [1], [0, 0, 1, 1], [], []>} : vector<8x128xbf16>, vector<128x128xbf16>, vector<8x128xf32> -> vector<8x128xf32>
    %c0_63 = arith.constant 0 : index
    %c0_64 = arith.constant 0 : index
    %77 = vector.load %arg13[%c0_63, %c0_64] : memref<1x128xf32, #tpu.memory_space<vmem>>, vector<1x128xf32>
    %78 = vector.broadcast %77 : vector<1x128xf32> to vector<8x128xf32>
    %79 = arith.addf %76, %78 : vector<8x128xf32>
    %80 = tpu.iota {dimensions = array<i32: 1>} : vector<8x128xi32>
    %c10_i32 = arith.constant 10 : i32
    %81 = vector.broadcast %c10_i32 : i32 to vector<8x128xi32>
    %82 = arith.cmpi slt, %80, %81 : vector<8x128xi32>
    %cst_65 = arith.constant -1.000000e+30 : f32
    %83 = vector.broadcast %cst_65 : f32 to vector<8x128xf32>
    %84 = arith.select %82, %79, %83 : vector<8x128xi1>, vector<8x128xf32>
    %cst_66 = arith.constant dense<0xFF800000> : vector<8xf32>
    %85 = vector.multi_reduction <maximumf>, %84, %cst_66 [1] : vector<8x128xf32> to vector<8xf32>
    %86 = vector.shape_cast %85 : vector<8xf32> to vector<8x1xf32>
    %87 = vector.broadcast %86 : vector<8x1xf32> to vector<8x128xf32>
    %88 = arith.subf %84, %87 : vector<8x128xf32>
    %89 = math.exp %88 : vector<8x128xf32>
    %cst_67 = arith.constant dense<0.000000e+00> : vector<8xf32>
    %90 = vector.multi_reduction <add>, %89, %cst_67 [1] : vector<8x128xf32> to vector<8xf32>
    %91 = vector.shape_cast %90 : vector<8xf32> to vector<8x1xf32>
    %92 = math.log %91 : vector<8x1xf32>
    %93 = vector.broadcast %92 : vector<8x1xf32> to vector<8x128xf32>
    %94 = arith.subf %88, %93 : vector<8x128xf32>
    %c0_68 = arith.constant 0 : index
    %c0_69 = arith.constant 0 : index
    %95 = vector.load %arg14[%c0_68, %c0_69] : memref<8x128xf32, #tpu.memory_space<vmem>>, vector<8x128xf32>
    tpu.vector_store %arg14[%c0_68, %c0_69], %94 {strides = array<i32>} : memref<8x128xf32, #tpu.memory_space<vmem>>, vector<8x128xf32>,
    return
  }
  func.func @transform_0(%arg0: i32) -> (i32, i32) {
    %c0_i32 = arith.constant 0 : i32
    %c0_i32_0 = arith.constant 0 : i32
    return %arg0, %c0_i32 : i32, i32
  }
  func.func @transform_1(%arg0: i32) -> (i32, i32) {
    %c0_i32 = arith.constant 0 : i32
    %c0_i32_0 = arith.constant 0 : i32
    %c0_i32_1 = arith.constant 0 : i32
    return %c0_i32, %c0_i32_0 : i32, i32
  }
  func.func @transform_2(%arg0: i32) -> (i32, i32) {
    %c0_i32 = arith.constant 0 : i32
    %c0_i32_0 = arith.constant 0 : i32
    %c0_i32_1 = arith.constant 0 : i32
    return %c0_i32, %c0_i32_0 : i32, i32
  }
  func.func @transform_3(%arg0: i32) -> (i32, i32, i32) {
    %c0_i32 = arith.constant 0 : i32
    %c0_i32_0 = arith.constant 0 : i32
    %c0_i32_1 = arith.constant 0 : i32
    %c0_i32_2 = arith.constant 0 : i32
    return %c0_i32, %c0_i32_0, %c0_i32_1 : i32, i32, i32
  }
  func.func @transform_4(%arg0: i32) -> (i32, i32) {
    %c0_i32 = arith.constant 0 : i32
    %c0_i32_0 = arith.constant 0 : i32
    %c0_i32_1 = arith.constant 0 : i32
    return %c0_i32, %c0_i32_0 : i32, i32
  }
  func.func @transform_5(%arg0: i32) -> (i32, i32) {
    %c0_i32 = arith.constant 0 : i32
    %c0_i32_0 = arith.constant 0 : i32
    %c0_i32_1 = arith.constant 0 : i32
    return %c0_i32, %c0_i32_0 : i32, i32
  }
  func.func @transform_6(%arg0: i32) -> (i32, i32, i32) {
    %c0_i32 = arith.constant 0 : i32
    %c0_i32_0 = arith.constant 0 : i32
    %c0_i32_1 = arith.constant 0 : i32
    %c0_i32_2 = arith.constant 0 : i32
    return %c0_i32, %c0_i32_0, %c0_i32_1 : i32, i32, i32
  }
  func.func @transform_7(%arg0: i32) -> (i32, i32) {
    %c0_i32 = arith.constant 0 : i32
    %c0_i32_0 = arith.constant 0 : i32
    %c0_i32_1 = arith.constant 0 : i32
    return %c0_i32, %c0_i32_0 : i32, i32
  }
  func.func @transform_8(%arg0: i32) -> (i32, i32) {
    %c0_i32 = arith.constant 0 : i32
    %c0_i32_0 = arith.constant 0 : i32
    %c0_i32_1 = arith.constant 0 : i32
    return %c0_i32, %c0_i32_0 : i32, i32
  }
  func.func @transform_9(%arg0: i32) -> (i32, i32) {
    %c0_i32 = arith.constant 0 : i32
    %c0_i32_0 = arith.constant 0 : i32
    %c0_i32_1 = arith.constant 0 : i32
    return %c0_i32, %c0_i32_0 : i32, i32
  }
  func.func @transform_10(%arg0: i32) -> (i32, i32) {
    %c0_i32 = arith.constant 0 : i32
    %c0_i32_0 = arith.constant 0 : i32
    %c0_i32_1 = arith.constant 0 : i32
    return %c0_i32, %c0_i32_0 : i32, i32
  }
  func.func @transform_11(%arg0: i32) -> (i32, i32) {
    %c0_i32 = arith.constant 0 : i32
    %c0_i32_0 = arith.constant 0 : i32
    %c0_i32_1 = arith.constant 0 : i32
    return %c0_i32, %c0_i32_0 : i32, i32
  }
  func.func @transform_12(%arg0: i32) -> (i32, i32) {
    %c0_i32 = arith.constant 0 : i32
    %c0_i32_0 = arith.constant 0 : i32
    %c0_i32_1 = arith.constant 0 : i32
    return %c0_i32, %c0_i32_0 : i32, i32
  }
  func.func @transform_13(%arg0: i32) -> (i32, i32) {
    %c0_i32 = arith.constant 0 : i32
    %c0_i32_0 = arith.constant 0 : i32
    return %arg0, %c0_i32 : i32, i32
  }
}

</mosaic_0001>

<llo_original>
// kernel: tile.18
$region0: #{tile.18}
  #allocation0 [shape = 's32[1]{0}', space=sflag, size = 0x4, scoped, tag = 'scoped memory for tile.18']
  %s0 = inlined_call_operand.vmem [shape: f32[16], index: 0, kind: input, shape index: {}]
  %s1 = inlined_call_operand.vmem [shape: f32[10,16], index: 1, kind: output, shape index: {}]
  // Predicated region
  $region2: #{tile.18} parent=0 // pred_check
    _
  $region3: #{tile.18} parent=0 // pred_check_branch
    %3 = sbr.rel (0) target = $region5
  $region4: #{tile.18} parent=0 // pred_region
    _
  $region5: #{tile.18} parent=0 // pred_fallthru
    _
  %v4 = vld [vmem:[%s0] ss:$0 sm:$0xff]
  %5 = vst [vmem:[%s1] sm:$0xff] %v4
  %s6 = scalar_lea.vmem %s1, 8
  %7 = vst [vmem:[%s6] sm:$0xff] %v4

// kernel: tile.19
$region0: #{tile.19}
  %s0 = inlined_call_operand.vmem [shape: f32[10,16], index: 0, kind: input, shape index: {}]
  %s1 = inlined_call_operand.vmem [shape: f32[160], index: 1, kind: output, shape index: {}]
  $region1: #{tile.19} parent=0
    #allocation0 [shape = 'u8[4096]{0}', space=vmem, size = 0x1000, scoped, tag = 'scoped mem for output reshape']
    %s2 = smov 3
    %v3 = vld [vmem:[%s0] ss:$8 sm:%s2]
    %vm4 = vcmask 130048
    %5 = vst.msk [vmem:[#allocation0] sm:$0x3] %vm4, %v3
    %s6 = scalar_lea.vmem %s0, 7
    %v7 = vld [vmem:[%s6] sm:$0x1]
    %8 = vrot.lane.b32.xlu0 %v7, 112
    %v9 = vpop.permute.xlu0 %8
    %vm10 = vcmask 1048448
    %11 = vst.msk [vmem:[#allocation0] sm:$0x1] %vm10, %v9
    %s12 = scalar_lea.vmem %s0, 6
    %v13 = vld [vmem:[%s12] sm:$0x1]
    %14 = vrot.lane.b32.xlu0 %v13, 96
    %v15 = vpop.permute.xlu0 %14
    %vm16 = vcmask 917248
    %17 = vst.msk [vmem:[#allocation0] sm:$0x1] %vm16, %v15
    %s18 = scalar_lea.vmem %s0, 5
    %v19 = vld [vmem:[%s18] sm:$0x1]
    %20 = vrot.lane.b32.xlu0 %v19, 80
    %v21 = vpop.permute.xlu0 %20
    %vm22 = vcmask 786048
    %23 = vst.msk [vmem:[#allocation0] sm:$0x1] %vm22, %v21
    %s24 = scalar_lea.vmem %s0, 4
    %v25 = vld [vmem:[%s24] sm:$0x1]
    %26 = vrot.lane.b32.xlu0 %v25, 64
    %v27 = vpop.permute.xlu0 %26
    %vm28 = vcmask 654848
    %29 = vst.msk [vmem:[#allocation0] sm:$0x1] %vm28, %v27
    %s30 = scalar_lea.vmem %s0, 3
    %v31 = vld [vmem:[%s30] sm:$0x1]
    %32 = vrot.lane.b32.xlu0 %v31, 48
    %v33 = vpop.permute.xlu0 %32
    %vm34 = vcmask 523648
    %35 = vst.msk [vmem:[#allocation0] sm:$0x1] %vm34, %v33
    %s36 = scalar_lea.vmem %s0, 2
    %v37 = vld [vmem:[%s36] sm:$0x1]
    %38 = vrot.lane.b32.xlu0 %v37, 32
    %v39 = vpop.permute.xlu0 %38
    %vm40 = vcmask 392448
    %41 = vst.msk [vmem:[#allocation0] sm:$0x1] %vm40, %v39
    %s42 = scalar_lea.vmem %s0, 1
    %s43 = smov 3
    %v44 = vld [vmem:[%s42] ss:$8 sm:%s43]
    %45 = vrot.lane.b32.xlu0 %v44, 16
    %v46 = vpop.permute.xlu0 %45
    %vm47 = vcmask 261248
    %48 = vst.msk [vmem:[#allocation0] sm:$0x3] %vm47, %v46
    %s50 = ssub.s32 4, 1
    %v51 = vld [vmem:[#allocation0] sm:%s50]
    %s53 = ssub.s32 4, 1
    %54 = vst [vmem:[%s1] sm:%s53] %v51

// kernel: lenet5_forward.1
$region0: #{lenet5_forward.1}
  #allocation0 [shape = 'u32[]', space=smem, size = 0x4, offset = 0x4, fixed_abs, tag = 'smem constant byte address 0x4 - core index']
  #allocation1 [shape = 'u32[72,128]{1,0:T(1,128)}', space=vmem, size = 0x9000, scoped, tag = 'internal scratch']
  %s0 = inlined_call_operand.vmem [shape: bf16[224,28], index: 0, kind: input, shape index: {}]
  %s1 = inlined_call_operand.vmem [shape: bf16[28,256], index: 1, kind: input, shape index: {}]
  %s2 = inlined_call_operand.vmem [shape: f32[1,256], index: 2, kind: input, shape index: {}]
  %s3 = inlined_call_operand.vmem [shape: bf16[5,80,224], index: 3, kind: input, shape index: {}]
  %s4 = inlined_call_operand.vmem [shape: bf16[1280,256], index: 4, kind: input, shape index: {}]
  %s5 = inlined_call_operand.vmem [shape: f32[1,256], index: 5, kind: input, shape index: {}]
  %s6 = inlined_call_operand.vmem [shape: bf16[5,8,80], index: 6, kind: input, shape index: {}]
  %s7 = inlined_call_operand.vmem [shape: bf16[1280,128], index: 7, kind: input, shape index: {}]
  %s8 = inlined_call_operand.vmem [shape: f32[1,128], index: 8, kind: input, shape index: {}]
  %s9 = inlined_call_operand.vmem [shape: bf16[128,128], index: 9, kind: input, shape index: {}]
  %s10 = inlined_call_operand.vmem [shape: f32[1,128], index: 10, kind: input, shape index: {}]
  %s11 = inlined_call_operand.vmem [shape: bf16[128,128], index: 11, kind: input, shape index: {}]
  %s12 = inlined_call_operand.vmem [shape: f32[1,128], index: 12, kind: input, shape index: {}]
  %s13 = inlined_call_operand.vmem [shape: f32[8,128], index: 13, kind: output, shape index: {}]
  %s14 = sld [smem:[#allocation0]]
  $region62: #{lenet5_forward.1} parent=0
    _
  %s16 = ssub.s32 1, %s14
  %s17 = scalar_select 0, %s16, %s14
  // Predicated region
  $region2: #{lenet5_forward.1} parent=0 // pred_check
    _
  $region3: #{lenet5_forward.1} parent=0 // pred_check_branch
    %19 = sbr.rel (0) target = $region5
  $region4: #{lenet5_forward.1} parent=0 // pred_region
    _
  $region5: #{lenet5_forward.1} parent=0 // pred_fallthru
    _
  // Predicated region
  $region6: #{lenet5_forward.1} parent=0 // pred_check
    _
  $region7: #{lenet5_forward.1} parent=0 // pred_check_branch
    %21 = sbr.rel (0) target = $region9
  $region8: #{lenet5_forward.1} parent=0 // pred_region
    _
  $region9: #{lenet5_forward.1} parent=0 // pred_fallthru
    _
  // Predicated region
  $region10: #{lenet5_forward.1} parent=0 // pred_check
    _
  $region11: #{lenet5_forward.1} parent=0 // pred_check_branch
    %23 = sbr.rel (0) target = $region13
  $region12: #{lenet5_forward.1} parent=0 // pred_region
    _
  $region13: #{lenet5_forward.1} parent=0 // pred_fallthru
    _
  // Predicated region
  $region14: #{lenet5_forward.1} parent=0 // pred_check
    _
  $region15: #{lenet5_forward.1} parent=0 // pred_check_branch
    %25 = sbr.rel (0) target = $region17
  $region16: #{lenet5_forward.1} parent=0 // pred_region
    _
  $region17: #{lenet5_forward.1} parent=0 // pred_fallthru
    _
  // Predicated region
  $region18: #{lenet5_forward.1} parent=0 // pred_check
    _
  $region19: #{lenet5_forward.1} parent=0 // pred_check_branch
    %27 = sbr.rel (0) target = $region21
  $region20: #{lenet5_forward.1} parent=0 // pred_region
    _
  $region21: #{lenet5_forward.1} parent=0 // pred_fallthru
    _
  // Predicated region
  $region22: #{lenet5_forward.1} parent=0 // pred_check
    _
  $region23: #{lenet5_forward.1} parent=0 // pred_check_branch
    %29 = sbr.rel (0) target = $region25
  $region24: #{lenet5_forward.1} parent=0 // pred_region
    _
  $region25: #{lenet5_forward.1} parent=0 // pred_fallthru
    _
  // Predicated region
  $region26: #{lenet5_forward.1} parent=0 // pred_check
    _
  $region27: #{lenet5_forward.1} parent=0 // pred_check_branch
    %31 = sbr.rel (0) target = $region29
  $region28: #{lenet5_forward.1} parent=0 // pred_region
    _
  $region29: #{lenet5_forward.1} parent=0 // pred_fallthru
    _
  // Predicated region
  $region30: #{lenet5_forward.1} parent=0 // pred_check
    _
  $region31: #{lenet5_forward.1} parent=0 // pred_check_branch
    %33 = sbr.rel (0) target = $region33
  $region32: #{lenet5_forward.1} parent=0 // pred_region
    _
  $region33: #{lenet5_forward.1} parent=0 // pred_fallthru
    _
  // Predicated region
  $region34: #{lenet5_forward.1} parent=0 // pred_check
    _
  $region35: #{lenet5_forward.1} parent=0 // pred_check_branch
    %35 = sbr.rel (0) target = $region37
  $region36: #{lenet5_forward.1} parent=0 // pred_region
    _
  $region37: #{lenet5_forward.1} parent=0 // pred_fallthru
    _
  // Predicated region
  $region38: #{lenet5_forward.1} parent=0 // pred_check
    _
  $region39: #{lenet5_forward.1} parent=0 // pred_check_branch
    %37 = sbr.rel (0) target = $region41
  $region40: #{lenet5_forward.1} parent=0 // pred_region
    _
  $region41: #{lenet5_forward.1} parent=0 // pred_fallthru
    _
  // Predicated region
  $region42: #{lenet5_forward.1} parent=0 // pred_check
    _
  $region43: #{lenet5_forward.1} parent=0 // pred_check_branch
    %39 = sbr.rel (0) target = $region45
  $region44: #{lenet5_forward.1} parent=0 // pred_region
    _
  $region45: #{lenet5_forward.1} parent=0 // pred_fallthru
    _
  // Predicated region
  $region46: #{lenet5_forward.1} parent=0 // pred_check
    _
  $region47: #{lenet5_forward.1} parent=0 // pred_check_branch
    %41 = sbr.rel (0) target = $region49
  $region48: #{lenet5_forward.1} parent=0 // pred_region
    _
  $region49: #{lenet5_forward.1} parent=0 // pred_fallthru
    _
  // Predicated region
  $region50: #{lenet5_forward.1} parent=0 // pred_check
    _
  $region51: #{lenet5_forward.1} parent=0 // pred_check_branch
    %43 = sbr.rel (0) target = $region53
  $region52: #{lenet5_forward.1} parent=0 // pred_region
    _
  $region53: #{lenet5_forward.1} parent=0 // pred_fallthru
    _
  %v45 = vld [vmem:[%s0] sm:$0xf]
  %v46 = vld [vmem:[%s0 + $0x4] sm:$0xf]
  %v47 = vld [vmem:[%s0 + $0x8] sm:$0xf]
  %v48 = vld [vmem:[%s0 + $0xc] sm:$0xf]
  %v49 = vld [vmem:[%s0 + $0x10] sm:$0xf]
  %v50 = vld [vmem:[%s0 + $0x14] sm:$0xf]
  %v51 = vld [vmem:[%s0 + $0x18] sm:$0xf]
  %v52 = vld [vmem:[%s0 + $0x1c] sm:$0xf]
  %v53 = vld [vmem:[%s0 + $0x20] sm:$0xf]
  %v54 = vld [vmem:[%s0 + $0x24] sm:$0xf]
  %v55 = vld [vmem:[%s0 + $0x28] sm:$0xf]
  %v56 = vld [vmem:[%s0 + $0x2c] sm:$0xf]
  %v57 = vld [vmem:[%s0 + $0x30] sm:$0xf]
  %v58 = vld [vmem:[%s0 + $0x34] sm:$0xf]
  %v59 = vld [vmem:[%s0 + $0x38] sm:$0xf]
  %v60 = vld [vmem:[%s0 + $0x3c] sm:$0xf]
  %v61 = vld [vmem:[%s0 + $0x40] sm:$0xf]
  %v62 = vld [vmem:[%s0 + $0x44] sm:$0xf]
  %v63 = vld [vmem:[%s0 + $0x48] sm:$0xf]
  %v64 = vld [vmem:[%s0 + $0x4c] sm:$0xf]
  %v65 = vld [vmem:[%s0 + $0x50] sm:$0xf]
  %v66 = vld [vmem:[%s0 + $0x54] sm:$0xf]
  %v67 = vld [vmem:[%s0 + $0x58] sm:$0xf]
  %v68 = vld [vmem:[%s0 + $0x5c] sm:$0xf]
  %v69 = vld [vmem:[%s0 + $0x60] sm:$0xf]
  %v70 = vld [vmem:[%s0 + $0x64] sm:$0xf]
  %v71 = vld [vmem:[%s0 + $0x68] sm:$0xf]
  %v72 = vld [vmem:[%s0 + $0x6c] sm:$0xf]
  %v73 = vld [vmem:[%s1] sm:$0xff]
  %v74 = vld [vmem:[%s1 + $0x8] sm:$0xff]
  %v75 = vld [vmem:[%s1 + $0x10] sm:$0xff]
  %v76 = vld [vmem:[%s1 + $0x18] sm:$0x33]
  %v77 = vld [vmem:[%s2] sm:$0x3]
  %v79 = vperm.slane %v77, 0
  %v80 = vperm.slane %v77, 1
  %v111 = vunpack.c.l.b16 %v45
  %v112 = vunpack.c.l.b16 %v46
  %v113 = vunpack.c.l.b16 %v47
  %v114 = vunpack.c.l.b16 %v48
  %v115 = vunpack.c.l.b16 %v49
  %v116 = vunpack.c.l.b16 %v50
  %v117 = vunpack.c.l.b16 %v51
  %v118 = vunpack.c.l.b16 %v52
  %v119 = vunpack.c.l.b16 %v53
  %v120 = vunpack.c.l.b16 %v54
  %v121 = vunpack.c.l.b16 %v55
  %v122 = vunpack.c.l.b16 %v56
  %v123 = vunpack.c.l.b16 %v57
  %v124 = vunpack.c.l.b16 %v58
  %v125 = vunpack.c.l.b16 %v59
  %v126 = vunpack.c.l.b16 %v60
  %v127 = vunpack.c.l.b16 %v61
  %v128 = vunpack.c.l.b16 %v62
  %v129 = vunpack.c.l.b16 %v63
  %v130 = vunpack.c.l.b16 %v64
  %v131 = vunpack.c.l.b16 %v65
  %v132 = vunpack.c.l.b16 %v66
  %v133 = vunpack.c.l.b16 %v67
  %v134 = vunpack.c.l.b16 %v68
  %v135 = vunpack.c.l.b16 %v69
  %v136 = vunpack.c.l.b16 %v70
  %v137 = vunpack.c.l.b16 %v71
  %v138 = vunpack.c.l.b16 %v72
  %v139 = vpack.c.b16 %v112, %v111
  %v140 = vpack.c.b16 %v114, %v113
  %v141 = vpack.c.b16 %v116, %v115
  %v142 = vpack.c.b16 %v118, %v117
  %v143 = vpack.c.b16 %v120, %v119
  %v144 = vpack.c.b16 %v122, %v121
  %v145 = vpack.c.b16 %v124, %v123
  %v146 = vpack.c.b16 %v126, %v125
  %v147 = vpack.c.b16 %v128, %v127
  %v148 = vpack.c.b16 %v130, %v129
  %v149 = vpack.c.b16 %v132, %v131
  %v150 = vpack.c.b16 %v134, %v133
  %v151 = vpack.c.b16 %v136, %v135
  %v152 = vpack.c.b16 %v138, %v137
  %v157 = vunpack.c.l.b16 %v73
  %v158 = vunpack.c.h.b16 %v73
  %v159 = vunpack.c.l.b16 %v74
  %v160 = vunpack.c.h.b16 %v74
  %v161 = vunpack.c.l.b16 %v75
  %v162 = vunpack.c.h.b16 %v75
  %v163 = vunpack.c.l.b16 %v76
  %v164 = vunpack.c.h.b16 %v76
  %v165 = vpack.c.b16 %v159, %v157
  %v166 = vpack.c.b16 %v160, %v158
  %v167 = vpack.c.b16 %v163, %v161
  %v168 = vpack.c.b16 %v164, %v162
  %vm171 = vcmask 228352
  %v173 = vsel %vm171, %v139, 0
  %v176 = vsel %vm171, %v140, 0
  %v179 = vsel %vm171, %v141, 0
  %v182 = vsel %vm171, %v142, 0
  %v185 = vsel %vm171, %v143, 0
  %v188 = vsel %vm171, %v144, 0
  %v191 = vsel %vm171, %v145, 0
  %v194 = vsel %vm171, %v146, 0
  %v197 = vsel %vm171, %v147, 0
  %v200 = vsel %vm171, %v148, 0
  %v203 = vsel %vm171, %v149, 0
  %v206 = vsel %vm171, %v150, 0
  %v209 = vsel %vm171, %v151, 0
  %v212 = vsel %vm171, %v152, 0
  %vm214 = vcmask 1045504
  %v216 = vsel %vm214, %v167, 0
  %v219 = vsel %vm214, %v168, 0
  %221 = vmatpush.bf16.msra.mxu0 0
  %222 = vmatpush.bf16.msra.mxu0 0
  %223 = vmatpush.bf16.msra.mxu0 0
  %224 = vmatpush.bf16.msra.mxu0 0
  %225 = vmatpush.bf16.msra.mxu0 0
  %226 = vmatpush.bf16.msra.mxu0 0
  %227 = vmatpush.bf16.msra.mxu0 %v216
  %228 = vmatpush.bf16.msra.mxu0 %v165
  %229 = vmatmul.bf16.gmra.mxu0 %v173
  %v230 = vpop.f32.mrf.mxu0
  %v231 = vadd.f32 %v79, %v230
  %v232 = vpop.f32.mrf.mxu0
  %v233 = vadd.f32 %v79, %v232
  %234 = vmatmul.bf16.gmra.mxu0 %v176
  %v235 = vpop.f32.mrf.mxu0
  %v236 = vadd.f32 %v79, %v235
  %v237 = vpop.f32.mrf.mxu0
  %v238 = vadd.f32 %v79, %v237
  %239 = vmatmul.bf16.gmra.mxu0 %v179
  %v240 = vpop.f32.mrf.mxu0
  %v241 = vadd.f32 %v79, %v240
  %v242 = vpop.f32.mrf.mxu0
  %v243 = vadd.f32 %v79, %v242
  %244 = vmatmul.bf16.gmra.mxu0 %v182
  %v245 = vpop.f32.mrf.mxu0
  %v246 = vadd.f32 %v79, %v245
  %v247 = vpop.f32.mrf.mxu0
  %v248 = vadd.f32 %v79, %v247
  %249 = vmatmul.bf16.gmra.mxu0 %v185
  %v250 = vpop.f32.mrf.mxu0
  %v251 = vadd.f32 %v79, %v250
  %v252 = vpop.f32.mrf.mxu0
  %v253 = vadd.f32 %v79, %v252
  %254 = vmatmul.bf16.gmra.mxu0 %v188
  %v255 = vpop.f32.mrf.mxu0
  %v256 = vadd.f32 %v79, %v255
  %v257 = vpop.f32.mrf.mxu0
  %v258 = vadd.f32 %v79, %v257
  %259 = vmatmul.bf16.gmra.mxu0 %v191
  %v260 = vpop.f32.mrf.mxu0
  %v261 = vadd.f32 %v79, %v260
  %v262 = vpop.f32.mrf.mxu0
  %v263 = vadd.f32 %v79, %v262
  %264 = vmatmul.bf16.gmra.mxu0 %v194
  %v265 = vpop.f32.mrf.mxu0
  %v266 = vadd.f32 %v79, %v265
  %v267 = vpop.f32.mrf.mxu0
  %v268 = vadd.f32 %v79, %v267
  %269 = vmatmul.bf16.gmra.mxu0 %v197
  %v270 = vpop.f32.mrf.mxu0
  %v271 = vadd.f32 %v79, %v270
  %v272 = vpop.f32.mrf.mxu0
  %v273 = vadd.f32 %v79, %v272
  %274 = vmatmul.bf16.gmra.mxu0 %v200
  %v275 = vpop.f32.mrf.mxu0
  %v276 = vadd.f32 %v79, %v275
  %v277 = vpop.f32.mrf.mxu0
  %v278 = vadd.f32 %v79, %v277
  %279 = vmatmul.bf16.gmra.mxu0 %v203
  %v280 = vpop.f32.mrf.mxu0
  %v281 = vadd.f32 %v79, %v280
  %v282 = vpop.f32.mrf.mxu0
  %v283 = vadd.f32 %v79, %v282
  %284 = vmatmul.bf16.gmra.mxu0 %v206
  %v285 = vpop.f32.mrf.mxu0
  %v286 = vadd.f32 %v79, %v285
  %v287 = vpop.f32.mrf.mxu0
  %v288 = vadd.f32 %v79, %v287
  %289 = vmatmul.bf16.gmra.mxu0 %v209
  %v290 = vpop.f32.mrf.mxu0
  %v291 = vadd.f32 %v79, %v290
  %v292 = vpop.f32.mrf.mxu0
  %v293 = vadd.f32 %v79, %v292
  %294 = vmatmul.bf16.gmra.mxu0 %v212
  %v295 = vpop.f32.mrf.mxu0
  %v296 = vadd.f32 %v79, %v295
  %v297 = vpop.f32.mrf.mxu0
  %v298 = vadd.f32 %v79, %v297
  %299 = vdwg.mxu0
  %300 = vmatpush.bf16.msra.mxu0 0
  %301 = vmatpush.bf16.msra.mxu0 0
  %302 = vmatpush.bf16.msra.mxu0 0
  %303 = vmatpush.bf16.msra.mxu0 0
  %304 = vmatpush.bf16.msra.mxu0 0
  %305 = vmatpush.bf16.msra.mxu0 0
  %306 = vmatpush.bf16.msra.mxu0 %v219
  %307 = vmatpush.bf16.msra.mxu0 %v166
  %308 = vmatmul.bf16.gmra.mxu0 %v173
  %v309 = vpop.f32.mrf.mxu0
  %v310 = vadd.f32 %v80, %v309
  %v311 = vpop.f32.mrf.mxu0
  %v312 = vadd.f32 %v80, %v311
  %313 = vmatmul.bf16.gmra.mxu0 %v176
  %v314 = vpop.f32.mrf.mxu0
  %v315 = vadd.f32 %v80, %v314
  %v316 = vpop.f32.mrf.mxu0
  %v317 = vadd.f32 %v80, %v316
  %318 = vmatmul.bf16.gmra.mxu0 %v179
  %v319 = vpop.f32.mrf.mxu0
  %v320 = vadd.f32 %v80, %v319
  %v321 = vpop.f32.mrf.mxu0
  %v322 = vadd.f32 %v80, %v321
  %323 = vmatmul.bf16.gmra.mxu0 %v182
  %v324 = vpop.f32.mrf.mxu0
  %v325 = vadd.f32 %v80, %v324
  %v326 = vpop.f32.mrf.mxu0
  %v327 = vadd.f32 %v80, %v326
  %328 = vmatmul.bf16.gmra.mxu0 %v185
  %v329 = vpop.f32.mrf.mxu0
  %v330 = vadd.f32 %v80, %v329
  %v331 = vpop.f32.mrf.mxu0
  %v332 = vadd.f32 %v80, %v331
  %333 = vmatmul.bf16.gmra.mxu0 %v188
  %v334 = vpop.f32.mrf.mxu0
  %v335 = vadd.f32 %v80, %v334
  %v336 = vpop.f32.mrf.mxu0
  %v337 = vadd.f32 %v80, %v336
  %338 = vmatmul.bf16.gmra.mxu0 %v191
  %v339 = vpop.f32.mrf.mxu0
  %v340 = vadd.f32 %v80, %v339
  %v341 = vpop.f32.mrf.mxu0
  %v342 = vadd.f32 %v80, %v341
  %343 = vmatmul.bf16.gmra.mxu0 %v194
  %v344 = vpop.f32.mrf.mxu0
  %v345 = vadd.f32 %v80, %v344
  %v346 = vpop.f32.mrf.mxu0
  %v347 = vadd.f32 %v80, %v346
  %348 = vmatmul.bf16.gmra.mxu0 %v197
  %v349 = vpop.f32.mrf.mxu0
  %v350 = vadd.f32 %v80, %v349
  %v351 = vpop.f32.mrf.mxu0
  %v352 = vadd.f32 %v80, %v351
  %353 = vmatmul.bf16.gmra.mxu0 %v200
  %v354 = vpop.f32.mrf.mxu0
  %v355 = vadd.f32 %v80, %v354
  %v356 = vpop.f32.mrf.mxu0
  %v357 = vadd.f32 %v80, %v356
  %358 = vmatmul.bf16.gmra.mxu0 %v203
  %v359 = vpop.f32.mrf.mxu0
  %v360 = vadd.f32 %v80, %v359
  %v361 = vpop.f32.mrf.mxu0
  %v362 = vadd.f32 %v80, %v361
  %363 = vmatmul.bf16.gmra.mxu0 %v206
  %v364 = vpop.f32.mrf.mxu0
  %v365 = vadd.f32 %v80, %v364
  %v366 = vpop.f32.mrf.mxu0
  %v367 = vadd.f32 %v80, %v366
  %368 = vmatmul.bf16.gmra.mxu0 %v209
  %v369 = vpop.f32.mrf.mxu0
  %v370 = vadd.f32 %v80, %v369
  %v371 = vpop.f32.mrf.mxu0
  %v372 = vadd.f32 %v80, %v371
  %373 = vmatmul.bf16.gmra.mxu0 %v212
  %v374 = vpop.f32.mrf.mxu0
  %v375 = vadd.f32 %v80, %v374
  %v376 = vpop.f32.mrf.mxu0
  %v377 = vadd.f32 %v80, %v376
  %378 = vdwg.mxu0
  %v379 = vmax.f32 %v231, 0.0
  %v380 = vmax.f32 %v310, 0.0
  %v381 = vmax.f32 %v233, 0.0
  %v382 = vmax.f32 %v312, 0.0
  %v383 = vmax.f32 %v236, 0.0
  %v384 = vmax.f32 %v315, 0.0
  %v385 = vmax.f32 %v238, 0.0
  %v386 = vmax.f32 %v317, 0.0
  %v387 = vmax.f32 %v241, 0.0
  %v388 = vmax.f32 %v320, 0.0
  %v389 = vmax.f32 %v243, 0.0
  %v390 = vmax.f32 %v322, 0.0
  %v391 = vmax.f32 %v246, 0.0
  %v392 = vmax.f32 %v325, 0.0
  %v393 = vmax.f32 %v248, 0.0
  %v394 = vmax.f32 %v327, 0.0
  %v395 = vmax.f32 %v251, 0.0
  %v396 = vmax.f32 %v330, 0.0
  %v397 = vmax.f32 %v253, 0.0
  %v398 = vmax.f32 %v332, 0.0
  %v399 = vmax.f32 %v256, 0.0
  %v400 = vmax.f32 %v335, 0.0
  %v401 = vmax.f32 %v258, 0.0
  %v402 = vmax.f32 %v337, 0.0
  %v403 = vmax.f32 %v261, 0.0
  %v404 = vmax.f32 %v340, 0.0
  %v405 = vmax.f32 %v263, 0.0
  %v406 = vmax.f32 %v342, 0.0
  %v407 = vmax.f32 %v266, 0.0
  %v408 = vmax.f32 %v345, 0.0
  %v409 = vmax.f32 %v268, 0.0
  %v410 = vmax.f32 %v347, 0.0
  %v411 = vmax.f32 %v271, 0.0
  %v412 = vmax.f32 %v350, 0.0
  %v413 = vmax.f32 %v273, 0.0
  %v414 = vmax.f32 %v352, 0.0
  %v415 = vmax.f32 %v276, 0.0
  %v416 = vmax.f32 %v355, 0.0
  %v417 = vmax.f32 %v278, 0.0
  %v418 = vmax.f32 %v357, 0.0
  %v419 = vmax.f32 %v281, 0.0
  %v420 = vmax.f32 %v360, 0.0
  %v421 = vmax.f32 %v283, 0.0
  %v422 = vmax.f32 %v362, 0.0
  %v423 = vmax.f32 %v286, 0.0
  %v424 = vmax.f32 %v365, 0.0
  %v425 = vmax.f32 %v288, 0.0
  %v426 = vmax.f32 %v367, 0.0
  %v427 = vmax.f32 %v291, 0.0
  %v428 = vmax.f32 %v370, 0.0
  %v429 = vmax.f32 %v293, 0.0
  %v430 = vmax.f32 %v372, 0.0
  %v431 = vmax.f32 %v296, 0.0
  %v432 = vmax.f32 %v375, 0.0
  %v433 = vmax.f32 %v298, 0.0
  %v434 = vmax.f32 %v377, 0.0
  %v435 = vld [vmem:[%s3] sm:$0xff]
  %v436 = vld [vmem:[%s3 + $0x8] sm:$0xff]
  %v437 = vld [vmem:[%s3 + $0x10] sm:$0xff]
  %v438 = vld [vmem:[%s3 + $0x18] sm:$0xff]
  %v439 = vld [vmem:[%s3 + $0x20] sm:$0xff]
  %v440 = vld [vmem:[%s3 + $0x28] sm:$0xff]
  %v441 = vld [vmem:[%s3 + $0x30] sm:$0xff]
  %v442 = vld [vmem:[%s3 + $0x38] sm:$0xff]
  %v443 = vld [vmem:[%s3 + $0x40] sm:$0xff]
  %v444 = vld [vmem:[%s3 + $0x48] sm:$0xff]
  %v445 = vpack.c.bf16 %v381, %v379
  %v446 = vpack.c.bf16 %v382, %v380
  %v447 = vpack.c.bf16 %v385, %v383
  %v448 = vpack.c.bf16 %v386, %v384
  %v449 = vpack.c.bf16 %v389, %v387
  %v450 = vpack.c.bf16 %v390, %v388
  %v451 = vpack.c.bf16 %v393, %v391
  %v452 = vpack.c.bf16 %v394, %v392
  %v453 = vpack.c.bf16 %v397, %v395
  %v454 = vpack.c.bf16 %v398, %v396
  %v455 = vpack.c.bf16 %v401, %v399
  %v456 = vpack.c.bf16 %v402, %v400
  %v457 = vpack.c.bf16 %v405, %v403
  %v458 = vpack.c.bf16 %v406, %v404
  %v459 = vpack.c.bf16 %v409, %v407
  %v460 = vpack.c.bf16 %v410, %v408
  %v461 = vpack.c.bf16 %v413, %v411
  %v462 = vpack.c.bf16 %v414, %v412
  %v463 = vpack.c.bf16 %v417, %v415
  %v464 = vpack.c.bf16 %v418, %v416
  %v465 = vpack.c.bf16 %v421, %v419
  %v466 = vpack.c.bf16 %v422, %v420
  %v467 = vpack.c.bf16 %v425, %v423
  %v468 = vpack.c.bf16 %v426, %v424
  %v469 = vpack.c.bf16 %v429, %v427
  %v470 = vpack.c.bf16 %v430, %v428
  %v471 = vpack.c.bf16 %v433, %v431
  %v472 = vpack.c.bf16 %v434, %v432
  %v483 = vunpack.c.l.b16 %v435
  %v484 = vunpack.c.h.b16 %v435
  %v485 = vunpack.c.l.b16 %v436
  %v486 = vunpack.c.h.b16 %v436
  %v487 = vunpack.c.l.b16 %v437
  %v488 = vunpack.c.h.b16 %v437
  %v489 = vunpack.c.l.b16 %v438
  %v490 = vunpack.c.h.b16 %v438
  %v491 = vunpack.c.l.b16 %v439
  %v492 = vunpack.c.h.b16 %v439
  %v493 = vunpack.c.l.b16 %v440
  %v494 = vunpack.c.h.b16 %v440
  %v495 = vunpack.c.l.b16 %v441
  %v496 = vunpack.c.h.b16 %v441
  %v497 = vunpack.c.l.b16 %v442
  %v498 = vunpack.c.h.b16 %v442
  %v499 = vunpack.c.l.b16 %v443
  %v500 = vunpack.c.h.b16 %v443
  %v501 = vunpack.c.l.b16 %v444
  %v502 = vunpack.c.h.b16 %v444
  %v503 = vpack.c.b16 %v485, %v483
  %v504 = vpack.c.b16 %v486, %v484
  %v505 = vpack.c.b16 %v489, %v487
  %v506 = vpack.c.b16 %v490, %v488
  %v507 = vpack.c.b16 %v493, %v491
  %v508 = vpack.c.b16 %v494, %v492
  %v509 = vpack.c.b16 %v497, %v495
  %v510 = vpack.c.b16 %v498, %v496
  %v511 = vpack.c.b16 %v501, %v499
  %v512 = vpack.c.b16 %v502, %v500
  %vm518 = vcmask 785408
  %v520 = vsel %vm518, %v504, 0
  %v523 = vsel %vm518, %v506, 0
  %v526 = vsel %vm518, %v508, 0
  %v529 = vsel %vm518, %v510, 0
  %v532 = vsel %vm518, %v512, 0
  %534 = vmatpush.bf16.msra.mxu0 %v459
  %535 = vmatpush.bf16.msra.mxu0 %v457
  %536 = vmatpush.bf16.msra.mxu0 %v455
  %537 = vmatpush.bf16.msra.mxu0 %v453
  %538 = vmatpush.bf16.msra.mxu0 %v451
  %539 = vmatpush.bf16.msra.mxu0 %v449
  %540 = vmatpush.bf16.msra.mxu0 %v447
  %541 = vmatpush.bf16.msra.mxu0 %v445
  %542 = vmatmul.bf16.gmra.mxu0 %v503
  %v543 = vpop.f32.mrf.mxu0
  %v544 = vadd.f32 0.0, %v543
  %v545 = vpop.f32.mrf.mxu0
  %v546 = vadd.f32 0.0, %v545
  %547 = vmatmul.bf16.gmra.mxu0 %v505
  %v548 = vpop.f32.mrf.mxu0
  %v549 = vadd.f32 0.0, %v548
  %v550 = vpop.f32.mrf.mxu0
  %v551 = vadd.f32 0.0, %v550
  %552 = vmatmul.bf16.gmra.mxu0 %v507
  %v553 = vpop.f32.mrf.mxu0
  %v554 = vadd.f32 0.0, %v553
  %v555 = vpop.f32.mrf.mxu0
  %v556 = vadd.f32 0.0, %v555
  %557 = vmatmul.bf16.gmra.mxu0 %v509
  %v558 = vpop.f32.mrf.mxu0
  %v559 = vadd.f32 0.0, %v558
  %v560 = vpop.f32.mrf.mxu0
  %v561 = vadd.f32 0.0, %v560
  %562 = vmatmul.bf16.gmra.mxu0 %v511
  %v563 = vpop.f32.mrf.mxu0
  %v564 = vadd.f32 0.0, %v563
  %v565 = vpop.f32.mrf.mxu0
  %v566 = vadd.f32 0.0, %v565
  %567 = vdwg.mxu0
  %568 = vmatpush.bf16.msra.mxu0 0
  %569 = vmatpush.bf16.msra.mxu0 0
  %570 = vmatpush.bf16.msra.mxu0 %v471
  %571 = vmatpush.bf16.msra.mxu0 %v469
  %572 = vmatpush.bf16.msra.mxu0 %v467
  %573 = vmatpush.bf16.msra.mxu0 %v465
  %574 = vmatpush.bf16.msra.mxu0 %v463
  %575 = vmatpush.bf16.msra.mxu0 %v461
  %576 = vmatmul.bf16.gmra.mxu0 %v520
  %v577 = vpop.f32.mrf.mxu0
  %v578 = vadd.f32 %v544, %v577
  %v579 = vpop.f32.mrf.mxu0
  %v580 = vadd.f32 %v546, %v579
  %581 = vmatmul.bf16.gmra.mxu0 %v523
  %v582 = vpop.f32.mrf.mxu0
  %v583 = vadd.f32 %v549, %v582
  %v584 = vpop.f32.mrf.mxu0
  %v585 = vadd.f32 %v551, %v584
  %586 = vmatmul.bf16.gmra.mxu0 %v526
  %v587 = vpop.f32.mrf.mxu0
  %v588 = vadd.f32 %v554, %v587
  %v589 = vpop.f32.mrf.mxu0
  %v590 = vadd.f32 %v556, %v589
  %591 = vmatmul.bf16.gmra.mxu0 %v529
  %v592 = vpop.f32.mrf.mxu0
  %v593 = vadd.f32 %v559, %v592
  %v594 = vpop.f32.mrf.mxu0
  %v595 = vadd.f32 %v561, %v594
  %596 = vmatmul.bf16.gmra.mxu0 %v532
  %v597 = vpop.f32.mrf.mxu0
  %v598 = vadd.f32 %v564, %v597
  %v599 = vpop.f32.mrf.mxu0
  %v600 = vadd.f32 %v566, %v599
  %601 = vdwg.mxu0
  %602 = vmatpush.bf16.msra.mxu0 %v460
  %603 = vmatpush.bf16.msra.mxu0 %v458
  %604 = vmatpush.bf16.msra.mxu0 %v456
  %605 = vmatpush.bf16.msra.mxu0 %v454
  %606 = vmatpush.bf16.msra.mxu0 %v452
  %607 = vmatpush.bf16.msra.mxu0 %v450
  %608 = vmatpush.bf16.msra.mxu0 %v448
  %609 = vmatpush.bf16.msra.mxu0 %v446
  %610 = vmatmul.bf16.gmra.mxu0 %v503
  %v611 = vpop.f32.mrf.mxu0
  %v612 = vadd.f32 0.0, %v611
  %v613 = vpop.f32.mrf.mxu0
  %v614 = vadd.f32 0.0, %v613
  %615 = vmatmul.bf16.gmra.mxu0 %v505
  %v616 = vpop.f32.mrf.mxu0
  %v617 = vadd.f32 0.0, %v616
  %v618 = vpop.f32.mrf.mxu0
  %v619 = vadd.f32 0.0, %v618
  %620 = vmatmul.bf16.gmra.mxu0 %v507
  %v621 = vpop.f32.mrf.mxu0
  %v622 = vadd.f32 0.0, %v621
  %v623 = vpop.f32.mrf.mxu0
  %v624 = vadd.f32 0.0, %v623
  %625 = vmatmul.bf16.gmra.mxu0 %v509
  %v626 = vpop.f32.mrf.mxu0
  %v627 = vadd.f32 0.0, %v626
  %v628 = vpop.f32.mrf.mxu0
  %v629 = vadd.f32 0.0, %v628
  %630 = vmatmul.bf16.gmra.mxu0 %v511
  %v631 = vpop.f32.mrf.mxu0
  %v632 = vadd.f32 0.0, %v631
  %v633 = vpop.f32.mrf.mxu0
  %v634 = vadd.f32 0.0, %v633
  %635 = vdwg.mxu0
  %636 = vmatpush.bf16.msra.mxu0 0
  %637 = vmatpush.bf16.msra.mxu0 0
  %638 = vmatpush.bf16.msra.mxu0 %v472
  %639 = vmatpush.bf16.msra.mxu0 %v470
  %640 = vmatpush.bf16.msra.mxu0 %v468
  %641 = vmatpush.bf16.msra.mxu0 %v466
  %642 = vmatpush.bf16.msra.mxu0 %v464
  %643 = vmatpush.bf16.msra.mxu0 %v462
  %644 = vmatmul.bf16.gmra.mxu0 %v520
  %v645 = vpop.f32.mrf.mxu0
  %v646 = vadd.f32 %v612, %v645
  %v647 = vpop.f32.mrf.mxu0
  %v648 = vadd.f32 %v614, %v647
  %649 = vmatmul.bf16.gmra.mxu0 %v523
  %v650 = vpop.f32.mrf.mxu0
  %v651 = vadd.f32 %v617, %v650
  %v652 = vpop.f32.mrf.mxu0
  %v653 = vadd.f32 %v619, %v652
  %654 = vmatmul.bf16.gmra.mxu0 %v526
  %v655 = vpop.f32.mrf.mxu0
  %v656 = vadd.f32 %v622, %v655
  %v657 = vpop.f32.mrf.mxu0
  %v658 = vadd.f32 %v624, %v657
  %659 = vmatmul.bf16.gmra.mxu0 %v529
  %v660 = vpop.f32.mrf.mxu0
  %v661 = vadd.f32 %v627, %v660
  %v662 = vpop.f32.mrf.mxu0
  %v663 = vadd.f32 %v629, %v662
  %664 = vmatmul.bf16.gmra.mxu0 %v532
  %v665 = vpop.f32.mrf.mxu0
  %v666 = vadd.f32 %v632, %v665
  %v667 = vpop.f32.mrf.mxu0
  %v668 = vadd.f32 %v634, %v667
  %669 = vdwg.mxu0
  %s670 = scalar_lea.vmem %s3, 80
  %v671 = vld [vmem:[%s670] sm:$0xff]
  %v672 = vld [vmem:[%s670 + $0x8] sm:$0xff]
  %v673 = vld [vmem:[%s670 + $0x10] sm:$0xff]
  %v674 = vld [vmem:[%s670 + $0x18] sm:$0xff]
  %v675 = vld [vmem:[%s670 + $0x20] sm:$0xff]
  %v676 = vld [vmem:[%s670 + $0x28] sm:$0xff]
  %v677 = vld [vmem:[%s670 + $0x30] sm:$0xff]
  %v678 = vld [vmem:[%s670 + $0x38] sm:$0xff]
  %v679 = vld [vmem:[%s670 + $0x40] sm:$0xff]
  %v680 = vld [vmem:[%s670 + $0x48] sm:$0xff]
  %v691 = vunpack.c.l.b16 %v671
  %v692 = vunpack.c.h.b16 %v671
  %v693 = vunpack.c.l.b16 %v672
  %v694 = vunpack.c.h.b16 %v672
  %v695 = vunpack.c.l.b16 %v673
  %v696 = vunpack.c.h.b16 %v673
  %v697 = vunpack.c.l.b16 %v674
  %v698 = vunpack.c.h.b16 %v674
  %v699 = vunpack.c.l.b16 %v675
  %v700 = vunpack.c.h.b16 %v675
  %v701 = vunpack.c.l.b16 %v676
  %v702 = vunpack.c.h.b16 %v676
  %v703 = vunpack.c.l.b16 %v677
  %v704 = vunpack.c.h.b16 %v677
  %v705 = vunpack.c.l.b16 %v678
  %v706 = vunpack.c.h.b16 %v678
  %v707 = vunpack.c.l.b16 %v679
  %v708 = vunpack.c.h.b16 %v679
  %v709 = vunpack.c.l.b16 %v680
  %v710 = vunpack.c.h.b16 %v680
  %v711 = vpack.c.b16 %v693, %v691
  %v712 = vpack.c.b16 %v694, %v692
  %v713 = vpack.c.b16 %v697, %v695
  %v714 = vpack.c.b16 %v698, %v696
  %v715 = vpack.c.b16 %v701, %v699
  %v716 = vpack.c.b16 %v702, %v700
  %v717 = vpack.c.b16 %v705, %v703
  %v718 = vpack.c.b16 %v706, %v704
  %v719 = vpack.c.b16 %v709, %v707
  %v720 = vpack.c.b16 %v710, %v708
  %v727 = vsel %vm518, %v712, 0
  %v730 = vsel %vm518, %v714, 0
  %v733 = vsel %vm518, %v716, 0
  %v736 = vsel %vm518, %v718, 0
  %v739 = vsel %vm518, %v720, 0
  %741 = vmatpush.bf16.msra.mxu0 %v459
  %742 = vmatpush.bf16.msra.mxu0 %v457
  %743 = vmatpush.bf16.msra.mxu0 %v455
  %744 = vmatpush.bf16.msra.mxu0 %v453
  %745 = vmatpush.bf16.msra.mxu0 %v451
  %746 = vmatpush.bf16.msra.mxu0 %v449
  %747 = vmatpush.bf16.msra.mxu0 %v447
  %748 = vmatpush.bf16.msra.mxu0 %v445
  %749 = vmatmul.bf16.gmra.mxu0 %v711
  %v750 = vpop.f32.mrf.mxu0
  %v751 = vadd.f32 0.0, %v750
  %v752 = vpop.f32.mrf.mxu0
  %v753 = vadd.f32 0.0, %v752
  %754 = vmatmul.bf16.gmra.mxu0 %v713
  %v755 = vpop.f32.mrf.mxu0
  %v756 = vadd.f32 0.0, %v755
  %v757 = vpop.f32.mrf.mxu0
  %v758 = vadd.f32 0.0, %v757
  %759 = vmatmul.bf16.gmra.mxu0 %v715
  %v760 = vpop.f32.mrf.mxu0
  %v761 = vadd.f32 0.0, %v760
  %v762 = vpop.f32.mrf.mxu0
  %v763 = vadd.f32 0.0, %v762
  %764 = vmatmul.bf16.gmra.mxu0 %v717
  %v765 = vpop.f32.mrf.mxu0
  %v766 = vadd.f32 0.0, %v765
  %v767 = vpop.f32.mrf.mxu0
  %v768 = vadd.f32 0.0, %v767
  %769 = vmatmul.bf16.gmra.mxu0 %v719
  %v770 = vpop.f32.mrf.mxu0
  %v771 = vadd.f32 0.0, %v770
  %v772 = vpop.f32.mrf.mxu0
  %v773 = vadd.f32 0.0, %v772
  %774 = vdwg.mxu0
  %775 = vmatpush.bf16.msra.mxu0 0
  %776 = vmatpush.bf16.msra.mxu0 0
  %777 = vmatpush.bf16.msra.mxu0 %v471
  %778 = vmatpush.bf16.msra.mxu0 %v469
  %779 = vmatpush.bf16.msra.mxu0 %v467
  %780 = vmatpush.bf16.msra.mxu0 %v465
  %781 = vmatpush.bf16.msra.mxu0 %v463
  %782 = vmatpush.bf16.msra.mxu0 %v461
  %783 = vmatmul.bf16.gmra.mxu0 %v727
  %v784 = vpop.f32.mrf.mxu0
  %v785 = vadd.f32 %v751, %v784
  %v786 = vpop.f32.mrf.mxu0
  %v787 = vadd.f32 %v753, %v786
  %788 = vmatmul.bf16.gmra.mxu0 %v730
  %v789 = vpop.f32.mrf.mxu0
  %v790 = vadd.f32 %v756, %v789
  %v791 = vpop.f32.mrf.mxu0
  %v792 = vadd.f32 %v758, %v791
  %793 = vmatmul.bf16.gmra.mxu0 %v733
  %v794 = vpop.f32.mrf.mxu0
  %v795 = vadd.f32 %v761, %v794
  %v796 = vpop.f32.mrf.mxu0
  %v797 = vadd.f32 %v763, %v796
  %798 = vmatmul.bf16.gmra.mxu0 %v736
  %v799 = vpop.f32.mrf.mxu0
  %v800 = vadd.f32 %v766, %v799
  %v801 = vpop.f32.mrf.mxu0
  %v802 = vadd.f32 %v768, %v801
  %803 = vmatmul.bf16.gmra.mxu0 %v739
  %v804 = vpop.f32.mrf.mxu0
  %v805 = vadd.f32 %v771, %v804
  %v806 = vpop.f32.mrf.mxu0
  %v807 = vadd.f32 %v773, %v806
  %808 = vdwg.mxu0
  %809 = vmatpush.bf16.msra.mxu0 %v460
  %810 = vmatpush.bf16.msra.mxu0 %v458
  %811 = vmatpush.bf16.msra.mxu0 %v456
  %812 = vmatpush.bf16.msra.mxu0 %v454
  %813 = vmatpush.bf16.msra.mxu0 %v452
  %814 = vmatpush.bf16.msra.mxu0 %v450
  %815 = vmatpush.bf16.msra.mxu0 %v448
  %816 = vmatpush.bf16.msra.mxu0 %v446
  %817 = vmatmul.bf16.gmra.mxu0 %v711
  %v818 = vpop.f32.mrf.mxu0
  %v819 = vadd.f32 0.0, %v818
  %v820 = vpop.f32.mrf.mxu0
  %v821 = vadd.f32 0.0, %v820
  %822 = vmatmul.bf16.gmra.mxu0 %v713
  %v823 = vpop.f32.mrf.mxu0
  %v824 = vadd.f32 0.0, %v823
  %v825 = vpop.f32.mrf.mxu0
  %v826 = vadd.f32 0.0, %v825
  %827 = vmatmul.bf16.gmra.mxu0 %v715
  %v828 = vpop.f32.mrf.mxu0
  %v829 = vadd.f32 0.0, %v828
  %v830 = vpop.f32.mrf.mxu0
  %v831 = vadd.f32 0.0, %v830
  %832 = vmatmul.bf16.gmra.mxu0 %v717
  %v833 = vpop.f32.mrf.mxu0
  %v834 = vadd.f32 0.0, %v833
  %v835 = vpop.f32.mrf.mxu0
  %v836 = vadd.f32 0.0, %v835
  %837 = vmatmul.bf16.gmra.mxu0 %v719
  %v838 = vpop.f32.mrf.mxu0
  %v839 = vadd.f32 0.0, %v838
  %v840 = vpop.f32.mrf.mxu0
  %v841 = vadd.f32 0.0, %v840
  %842 = vdwg.mxu0
  %843 = vmatpush.bf16.msra.mxu0 0
  %844 = vmatpush.bf16.msra.mxu0 0
  %845 = vmatpush.bf16.msra.mxu0 %v472
  %846 = vmatpush.bf16.msra.mxu0 %v470
  %847 = vmatpush.bf16.msra.mxu0 %v468
  %848 = vmatpush.bf16.msra.mxu0 %v466
  %849 = vmatpush.bf16.msra.mxu0 %v464
  %850 = vmatpush.bf16.msra.mxu0 %v462
  %851 = vmatmul.bf16.gmra.mxu0 %v727
  %v852 = vpop.f32.mrf.mxu0
  %v853 = vadd.f32 %v819, %v852
  %v854 = vpop.f32.mrf.mxu0
  %v855 = vadd.f32 %v821, %v854
  %856 = vmatmul.bf16.gmra.mxu0 %v730
  %v857 = vpop.f32.mrf.mxu0
  %v858 = vadd.f32 %v824, %v857
  %v859 = vpop.f32.mrf.mxu0
  %v860 = vadd.f32 %v826, %v859
  %861 = vmatmul.bf16.gmra.mxu0 %v733
  %v862 = vpop.f32.mrf.mxu0
  %v863 = vadd.f32 %v829, %v862
  %v864 = vpop.f32.mrf.mxu0
  %v865 = vadd.f32 %v831, %v864
  %866 = vmatmul.bf16.gmra.mxu0 %v736
  %v867 = vpop.f32.mrf.mxu0
  %v868 = vadd.f32 %v834, %v867
  %v869 = vpop.f32.mrf.mxu0
  %v870 = vadd.f32 %v836, %v869
  %871 = vmatmul.bf16.gmra.mxu0 %v739
  %v872 = vpop.f32.mrf.mxu0
  %v873 = vadd.f32 %v839, %v872
  %v874 = vpop.f32.mrf.mxu0
  %v875 = vadd.f32 %v841, %v874
  %876 = vdwg.mxu0
  %s877 = scalar_lea.vmem %s3, 160
  %v878 = vld [vmem:[%s877] sm:$0xff]
  %v879 = vld [vmem:[%s877 + $0x8] sm:$0xff]
  %v880 = vld [vmem:[%s877 + $0x10] sm:$0xff]
  %v881 = vld [vmem:[%s877 + $0x18] sm:$0xff]
  %v882 = vld [vmem:[%s877 + $0x20] sm:$0xff]
  %v883 = vld [vmem:[%s877 + $0x28] sm:$0xff]
  %v884 = vld [vmem:[%s877 + $0x30] sm:$0xff]
  %v885 = vld [vmem:[%s877 + $0x38] sm:$0xff]
  %v886 = vld [vmem:[%s877 + $0x40] sm:$0xff]
  %v887 = vld [vmem:[%s877 + $0x48] sm:$0xff]
  %v898 = vunpack.c.l.b16 %v878
  %v899 = vunpack.c.h.b16 %v878
  %v900 = vunpack.c.l.b16 %v879
  %v901 = vunpack.c.h.b16 %v879
  %v902 = vunpack.c.l.b16 %v880
  %v903 = vunpack.c.h.b16 %v880
  %v904 = vunpack.c.l.b16 %v881
  %v905 = vunpack.c.h.b16 %v881
  %v906 = vunpack.c.l.b16 %v882
  %v907 = vunpack.c.h.b16 %v882
  %v908 = vunpack.c.l.b16 %v883
  %v909 = vunpack.c.h.b16 %v883
  %v910 = vunpack.c.l.b16 %v884
  %v911 = vunpack.c.h.b16 %v884
  %v912 = vunpack.c.l.b16 %v885
  %v913 = vunpack.c.h.b16 %v885
  %v914 = vunpack.c.l.b16 %v886
  %v915 = vunpack.c.h.b16 %v886
  %v916 = vunpack.c.l.b16 %v887
  %v917 = vunpack.c.h.b16 %v887
  %v918 = vpack.c.b16 %v900, %v898
  %v919 = vpack.c.b16 %v901, %v899
  %v920 = vpack.c.b16 %v904, %v902
  %v921 = vpack.c.b16 %v905, %v903
  %v922 = vpack.c.b16 %v908, %v906
  %v923 = vpack.c.b16 %v909, %v907
  %v924 = vpack.c.b16 %v912, %v910
  %v925 = vpack.c.b16 %v913, %v911
  %v926 = vpack.c.b16 %v916, %v914
  %v927 = vpack.c.b16 %v917, %v915
  %v934 = vsel %vm518, %v919, 0
  %v937 = vsel %vm518, %v921, 0
  %v940 = vsel %vm518, %v923, 0
  %v943 = vsel %vm518, %v925, 0
  %v946 = vsel %vm518, %v927, 0
  %948 = vmatpush.bf16.msra.mxu0 %v459
  %949 = vmatpush.bf16.msra.mxu0 %v457
  %950 = vmatpush.bf16.msra.mxu0 %v455
  %951 = vmatpush.bf16.msra.mxu0 %v453
  %952 = vmatpush.bf16.msra.mxu0 %v451
  %953 = vmatpush.bf16.msra.mxu0 %v449
  %954 = vmatpush.bf16.msra.mxu0 %v447
  %955 = vmatpush.bf16.msra.mxu0 %v445
  %956 = vmatmul.bf16.gmra.mxu0 %v918
  %v957 = vpop.f32.mrf.mxu0
  %v958 = vadd.f32 0.0, %v957
  %v959 = vpop.f32.mrf.mxu0
  %v960 = vadd.f32 0.0, %v959
  %961 = vmatmul.bf16.gmra.mxu0 %v920
  %v962 = vpop.f32.mrf.mxu0
  %v963 = vadd.f32 0.0, %v962
  %v964 = vpop.f32.mrf.mxu0
  %v965 = vadd.f32 0.0, %v964
  %966 = vmatmul.bf16.gmra.mxu0 %v922
  %v967 = vpop.f32.mrf.mxu0
  %v968 = vadd.f32 0.0, %v967
  %v969 = vpop.f32.mrf.mxu0
  %v970 = vadd.f32 0.0, %v969
  %971 = vmatmul.bf16.gmra.mxu0 %v924
  %v972 = vpop.f32.mrf.mxu0
  %v973 = vadd.f32 0.0, %v972
  %v974 = vpop.f32.mrf.mxu0
  %v975 = vadd.f32 0.0, %v974
  %976 = vmatmul.bf16.gmra.mxu0 %v926
  %v977 = vpop.f32.mrf.mxu0
  %v978 = vadd.f32 0.0, %v977
  %v979 = vpop.f32.mrf.mxu0
  %v980 = vadd.f32 0.0, %v979
  %981 = vdwg.mxu0
  %982 = vmatpush.bf16.msra.mxu0 0
  %983 = vmatpush.bf16.msra.mxu0 0
  %984 = vmatpush.bf16.msra.mxu0 %v471
  %985 = vmatpush.bf16.msra.mxu0 %v469
  %986 = vmatpush.bf16.msra.mxu0 %v467
  %987 = vmatpush.bf16.msra.mxu0 %v465
  %988 = vmatpush.bf16.msra.mxu0 %v463
  %989 = vmatpush.bf16.msra.mxu0 %v461
  %990 = vmatmul.bf16.gmra.mxu0 %v934
  %v991 = vpop.f32.mrf.mxu0
  %v992 = vadd.f32 %v958, %v991
  %v993 = vpop.f32.mrf.mxu0
  %v994 = vadd.f32 %v960, %v993
  %995 = vmatmul.bf16.gmra.mxu0 %v937
  %v996 = vpop.f32.mrf.mxu0
  %v997 = vadd.f32 %v963, %v996
  %v998 = vpop.f32.mrf.mxu0
  %v999 = vadd.f32 %v965, %v998
  %1000 = vmatmul.bf16.gmra.mxu0 %v940
  %v1001 = vpop.f32.mrf.mxu0
  %v1002 = vadd.f32 %v968, %v1001
  %v1003 = vpop.f32.mrf.mxu0
  %v1004 = vadd.f32 %v970, %v1003
  %1005 = vmatmul.bf16.gmra.mxu0 %v943
  %v1006 = vpop.f32.mrf.mxu0
  %v1007 = vadd.f32 %v973, %v1006
  %v1008 = vpop.f32.mrf.mxu0
  %v1009 = vadd.f32 %v975, %v1008
  %1010 = vmatmul.bf16.gmra.mxu0 %v946
  %v1011 = vpop.f32.mrf.mxu0
  %v1012 = vadd.f32 %v978, %v1011
  %v1013 = vpop.f32.mrf.mxu0
  %v1014 = vadd.f32 %v980, %v1013
  %1015 = vdwg.mxu0
  %1016 = vmatpush.bf16.msra.mxu0 %v460
  %1017 = vmatpush.bf16.msra.mxu0 %v458
  %1018 = vmatpush.bf16.msra.mxu0 %v456
  %1019 = vmatpush.bf16.msra.mxu0 %v454
  %1020 = vmatpush.bf16.msra.mxu0 %v452
  %1021 = vmatpush.bf16.msra.mxu0 %v450
  %1022 = vmatpush.bf16.msra.mxu0 %v448
  %1023 = vmatpush.bf16.msra.mxu0 %v446
  %1024 = vmatmul.bf16.gmra.mxu0 %v918
  %v1025 = vpop.f32.mrf.mxu0
  %v1026 = vadd.f32 0.0, %v1025
  %v1027 = vpop.f32.mrf.mxu0
  %v1028 = vadd.f32 0.0, %v1027
  %1029 = vmatmul.bf16.gmra.mxu0 %v920
  %v1030 = vpop.f32.mrf.mxu0
  %v1031 = vadd.f32 0.0, %v1030
  %v1032 = vpop.f32.mrf.mxu0
  %v1033 = vadd.f32 0.0, %v1032
  %1034 = vmatmul.bf16.gmra.mxu0 %v922
  %v1035 = vpop.f32.mrf.mxu0
  %v1036 = vadd.f32 0.0, %v1035
  %v1037 = vpop.f32.mrf.mxu0
  %v1038 = vadd.f32 0.0, %v1037
  %1039 = vmatmul.bf16.gmra.mxu0 %v924
  %v1040 = vpop.f32.mrf.mxu0
  %v1041 = vadd.f32 0.0, %v1040
  %v1042 = vpop.f32.mrf.mxu0
  %v1043 = vadd.f32 0.0, %v1042
  %1044 = vmatmul.bf16.gmra.mxu0 %v926
  %v1045 = vpop.f32.mrf.mxu0
  %v1046 = vadd.f32 0.0, %v1045
  %v1047 = vpop.f32.mrf.mxu0
  %v1048 = vadd.f32 0.0, %v1047
  %1049 = vdwg.mxu0
  %1050 = vmatpush.bf16.msra.mxu0 0
  %1051 = vmatpush.bf16.msra.mxu0 0
  %1052 = vmatpush.bf16.msra.mxu0 %v472
  %1053 = vmatpush.bf16.msra.mxu0 %v470
  %1054 = vmatpush.bf16.msra.mxu0 %v468
  %1055 = vmatpush.bf16.msra.mxu0 %v466
  %1056 = vmatpush.bf16.msra.mxu0 %v464
  %1057 = vmatpush.bf16.msra.mxu0 %v462
  %1058 = vmatmul.bf16.gmra.mxu0 %v934
  %v1059 = vpop.f32.mrf.mxu0
  %v1060 = vadd.f32 %v1026, %v1059
  %v1061 = vpop.f32.mrf.mxu0
  %v1062 = vadd.f32 %v1028, %v1061
  %1063 = vmatmul.bf16.gmra.mxu0 %v937
  %v1064 = vpop.f32.mrf.mxu0
  %v1065 = vadd.f32 %v1031, %v1064
  %v1066 = vpop.f32.mrf.mxu0
  %v1067 = vadd.f32 %v1033, %v1066
  %1068 = vmatmul.bf16.gmra.mxu0 %v940
  %v1069 = vpop.f32.mrf.mxu0
  %v1070 = vadd.f32 %v1036, %v1069
  %v1071 = vpop.f32.mrf.mxu0
  %v1072 = vadd.f32 %v1038, %v1071
  %1073 = vmatmul.bf16.gmra.mxu0 %v943
  %v1074 = vpop.f32.mrf.mxu0
  %v1075 = vadd.f32 %v1041, %v1074
  %v1076 = vpop.f32.mrf.mxu0
  %v1077 = vadd.f32 %v1043, %v1076
  %1078 = vmatmul.bf16.gmra.mxu0 %v946
  %v1079 = vpop.f32.mrf.mxu0
  %v1080 = vadd.f32 %v1046, %v1079
  %v1081 = vpop.f32.mrf.mxu0
  %v1082 = vadd.f32 %v1048, %v1081
  %1083 = vdwg.mxu0
  %s1084 = scalar_lea.vmem %s3, 240
  %v1085 = vld [vmem:[%s1084] sm:$0xff]
  %v1086 = vld [vmem:[%s1084 + $0x8] sm:$0xff]
  %v1087 = vld [vmem:[%s1084 + $0x10] sm:$0xff]
  %v1088 = vld [vmem:[%s1084 + $0x18] sm:$0xff]
  %v1089 = vld [vmem:[%s1084 + $0x20] sm:$0xff]
  %v1090 = vld [vmem:[%s1084 + $0x28] sm:$0xff]
  %v1091 = vld [vmem:[%s1084 + $0x30] sm:$0xff]
  %v1092 = vld [vmem:[%s1084 + $0x38] sm:$0xff]
  %v1093 = vld [vmem:[%s1084 + $0x40] sm:$0xff]
  %v1094 = vld [vmem:[%s1084 + $0x48] sm:$0xff]
  %v1105 = vunpack.c.l.b16 %v1085
  %v1106 = vunpack.c.h.b16 %v1085
  %v1107 = vunpack.c.l.b16 %v1086
  %v1108 = vunpack.c.h.b16 %v1086
  %v1109 = vunpack.c.l.b16 %v1087
  %v1110 = vunpack.c.h.b16 %v1087
  %v1111 = vunpack.c.l.b16 %v1088
  %v1112 = vunpack.c.h.b16 %v1088
  %v1113 = vunpack.c.l.b16 %v1089
  %v1114 = vunpack.c.h.b16 %v1089
  %v1115 = vunpack.c.l.b16 %v1090
  %v1116 = vunpack.c.h.b16 %v1090
  %v1117 = vunpack.c.l.b16 %v1091
  %v1118 = vunpack.c.h.b16 %v1091
  %v1119 = vunpack.c.l.b16 %v1092
  %v1120 = vunpack.c.h.b16 %v1092
  %v1121 = vunpack.c.l.b16 %v1093
  %v1122 = vunpack.c.h.b16 %v1093
  %v1123 = vunpack.c.l.b16 %v1094
  %v1124 = vunpack.c.h.b16 %v1094
  %v1125 = vpack.c.b16 %v1107, %v1105
  %v1126 = vpack.c.b16 %v1108, %v1106
  %v1127 = vpack.c.b16 %v1111, %v1109
  %v1128 = vpack.c.b16 %v1112, %v1110
  %v1129 = vpack.c.b16 %v1115, %v1113
  %v1130 = vpack.c.b16 %v1116, %v1114
  %v1131 = vpack.c.b16 %v1119, %v1117
  %v1132 = vpack.c.b16 %v1120, %v1118
  %v1133 = vpack.c.b16 %v1123, %v1121
  %v1134 = vpack.c.b16 %v1124, %v1122
  %v1141 = vsel %vm518, %v1126, 0
  %v1144 = vsel %vm518, %v1128, 0
  %v1147 = vsel %vm518, %v1130, 0
  %v1150 = vsel %vm518, %v1132, 0
  %v1153 = vsel %vm518, %v1134, 0
  %1155 = vmatpush.bf16.msra.mxu0 %v459
  %1156 = vmatpush.bf16.msra.mxu0 %v457
  %1157 = vmatpush.bf16.msra.mxu0 %v455
  %1158 = vmatpush.bf16.msra.mxu0 %v453
  %1159 = vmatpush.bf16.msra.mxu0 %v451
  %1160 = vmatpush.bf16.msra.mxu0 %v449
  %1161 = vmatpush.bf16.msra.mxu0 %v447
  %1162 = vmatpush.bf16.msra.mxu0 %v445
  %1163 = vmatmul.bf16.gmra.mxu0 %v1125
  %v1164 = vpop.f32.mrf.mxu0
  %v1165 = vadd.f32 0.0, %v1164
  %v1166 = vpop.f32.mrf.mxu0
  %v1167 = vadd.f32 0.0, %v1166
  %1168 = vmatmul.bf16.gmra.mxu0 %v1127
  %v1169 = vpop.f32.mrf.mxu0
  %v1170 = vadd.f32 0.0, %v1169
  %v1171 = vpop.f32.mrf.mxu0
  %v1172 = vadd.f32 0.0, %v1171
  %1173 = vmatmul.bf16.gmra.mxu0 %v1129
  %v1174 = vpop.f32.mrf.mxu0
  %v1175 = vadd.f32 0.0, %v1174
  %v1176 = vpop.f32.mrf.mxu0
  %v1177 = vadd.f32 0.0, %v1176
  %1178 = vmatmul.bf16.gmra.mxu0 %v1131
  %v1179 = vpop.f32.mrf.mxu0
  %v1180 = vadd.f32 0.0, %v1179
  %v1181 = vpop.f32.mrf.mxu0
  %v1182 = vadd.f32 0.0, %v1181
  %1183 = vmatmul.bf16.gmra.mxu0 %v1133
  %v1184 = vpop.f32.mrf.mxu0
  %v1185 = vadd.f32 0.0, %v1184
  %v1186 = vpop.f32.mrf.mxu0
  %v1187 = vadd.f32 0.0, %v1186
  %1188 = vdwg.mxu0
  %1189 = vmatpush.bf16.msra.mxu0 0
  %1190 = vmatpush.bf16.msra.mxu0 0
  %1191 = vmatpush.bf16.msra.mxu0 %v471
  %1192 = vmatpush.bf16.msra.mxu0 %v469
  %1193 = vmatpush.bf16.msra.mxu0 %v467
  %1194 = vmatpush.bf16.msra.mxu0 %v465
  %1195 = vmatpush.bf16.msra.mxu0 %v463
  %1196 = vmatpush.bf16.msra.mxu0 %v461
  %1197 = vmatmul.bf16.gmra.mxu0 %v1141
  %v1198 = vpop.f32.mrf.mxu0
  %v1199 = vadd.f32 %v1165, %v1198
  %v1200 = vpop.f32.mrf.mxu0
  %v1201 = vadd.f32 %v1167, %v1200
  %1202 = vmatmul.bf16.gmra.mxu0 %v1144
  %v1203 = vpop.f32.mrf.mxu0
  %v1204 = vadd.f32 %v1170, %v1203
  %v1205 = vpop.f32.mrf.mxu0
  %v1206 = vadd.f32 %v1172, %v1205
  %1207 = vmatmul.bf16.gmra.mxu0 %v1147
  %v1208 = vpop.f32.mrf.mxu0
  %v1209 = vadd.f32 %v1175, %v1208
  %v1210 = vpop.f32.mrf.mxu0
  %v1211 = vadd.f32 %v1177, %v1210
  %1212 = vmatmul.bf16.gmra.mxu0 %v1150
  %v1213 = vpop.f32.mrf.mxu0
  %v1214 = vadd.f32 %v1180, %v1213
  %v1215 = vpop.f32.mrf.mxu0
  %v1216 = vadd.f32 %v1182, %v1215
  %1217 = vmatmul.bf16.gmra.mxu0 %v1153
  %v1218 = vpop.f32.mrf.mxu0
  %v1219 = vadd.f32 %v1185, %v1218
  %v1220 = vpop.f32.mrf.mxu0
  %v1221 = vadd.f32 %v1187, %v1220
  %1222 = vdwg.mxu0
  %1223 = vmatpush.bf16.msra.mxu0 %v460
  %1224 = vmatpush.bf16.msra.mxu0 %v458
  %1225 = vmatpush.bf16.msra.mxu0 %v456
  %1226 = vmatpush.bf16.msra.mxu0 %v454
  %1227 = vmatpush.bf16.msra.mxu0 %v452
  %1228 = vmatpush.bf16.msra.mxu0 %v450
  %1229 = vmatpush.bf16.msra.mxu0 %v448
  %1230 = vmatpush.bf16.msra.mxu0 %v446
  %1231 = vmatmul.bf16.gmra.mxu0 %v1125
  %v1232 = vpop.f32.mrf.mxu0
  %v1233 = vadd.f32 0.0, %v1232
  %v1234 = vpop.f32.mrf.mxu0
  %v1235 = vadd.f32 0.0, %v1234
  %1236 = vmatmul.bf16.gmra.mxu0 %v1127
  %v1237 = vpop.f32.mrf.mxu0
  %v1238 = vadd.f32 0.0, %v1237
  %v1239 = vpop.f32.mrf.mxu0
  %v1240 = vadd.f32 0.0, %v1239
  %1241 = vmatmul.bf16.gmra.mxu0 %v1129
  %v1242 = vpop.f32.mrf.mxu0
  %v1243 = vadd.f32 0.0, %v1242
  %v1244 = vpop.f32.mrf.mxu0
  %v1245 = vadd.f32 0.0, %v1244
  %1246 = vmatmul.bf16.gmra.mxu0 %v1131
  %v1247 = vpop.f32.mrf.mxu0
  %v1248 = vadd.f32 0.0, %v1247
  %v1249 = vpop.f32.mrf.mxu0
  %v1250 = vadd.f32 0.0, %v1249
  %1251 = vmatmul.bf16.gmra.mxu0 %v1133
  %v1252 = vpop.f32.mrf.mxu0
  %v1253 = vadd.f32 0.0, %v1252
  %v1254 = vpop.f32.mrf.mxu0
  %v1255 = vadd.f32 0.0, %v1254
  %1256 = vdwg.mxu0
  %1257 = vmatpush.bf16.msra.mxu0 0
  %1258 = vmatpush.bf16.msra.mxu0 0
  %1259 = vmatpush.bf16.msra.mxu0 %v472
  %1260 = vmatpush.bf16.msra.mxu0 %v470
  %1261 = vmatpush.bf16.msra.mxu0 %v468
  %1262 = vmatpush.bf16.msra.mxu0 %v466
  %1263 = vmatpush.bf16.msra.mxu0 %v464
  %1264 = vmatpush.bf16.msra.mxu0 %v462
  %1265 = vmatmul.bf16.gmra.mxu0 %v1141
  %v1266 = vpop.f32.mrf.mxu0
  %v1267 = vadd.f32 %v1233, %v1266
  %v1268 = vpop.f32.mrf.mxu0
  %v1269 = vadd.f32 %v1235, %v1268
  %1270 = vmatmul.bf16.gmra.mxu0 %v1144
  %v1271 = vpop.f32.mrf.mxu0
  %v1272 = vadd.f32 %v1238, %v1271
  %v1273 = vpop.f32.mrf.mxu0
  %v1274 = vadd.f32 %v1240, %v1273
  %1275 = vmatmul.bf16.gmra.mxu0 %v1147
  %v1276 = vpop.f32.mrf.mxu0
  %v1277 = vadd.f32 %v1243, %v1276
  %v1278 = vpop.f32.mrf.mxu0
  %v1279 = vadd.f32 %v1245, %v1278
  %1280 = vmatmul.bf16.gmra.mxu0 %v1150
  %v1281 = vpop.f32.mrf.mxu0
  %v1282 = vadd.f32 %v1248, %v1281
  %v1283 = vpop.f32.mrf.mxu0
  %v1284 = vadd.f32 %v1250, %v1283
  %1285 = vmatmul.bf16.gmra.mxu0 %v1153
  %v1286 = vpop.f32.mrf.mxu0
  %v1287 = vadd.f32 %v1253, %v1286
  %v1288 = vpop.f32.mrf.mxu0
  %v1289 = vadd.f32 %v1255, %v1288
  %1290 = vdwg.mxu0
  %s1291 = scalar_lea.vmem %s3, 320
  %v1292 = vld [vmem:[%s1291] sm:$0xff]
  %v1293 = vld [vmem:[%s1291 + $0x8] sm:$0xff]
  %v1294 = vld [vmem:[%s1291 + $0x10] sm:$0xff]
  %v1295 = vld [vmem:[%s1291 + $0x18] sm:$0xff]
  %v1296 = vld [vmem:[%s1291 + $0x20] sm:$0xff]
  %v1297 = vld [vmem:[%s1291 + $0x28] sm:$0xff]
  %v1298 = vld [vmem:[%s1291 + $0x30] sm:$0xff]
  %v1299 = vld [vmem:[%s1291 + $0x38] sm:$0xff]
  %v1300 = vld [vmem:[%s1291 + $0x40] sm:$0xff]
  %v1301 = vld [vmem:[%s1291 + $0x48] sm:$0xff]
  %v1312 = vunpack.c.l.b16 %v1292
  %v1313 = vunpack.c.h.b16 %v1292
  %v1314 = vunpack.c.l.b16 %v1293
  %v1315 = vunpack.c.h.b16 %v1293
  %v1316 = vunpack.c.l.b16 %v1294
  %v1317 = vunpack.c.h.b16 %v1294
  %v1318 = vunpack.c.l.b16 %v1295
  %v1319 = vunpack.c.h.b16 %v1295
  %v1320 = vunpack.c.l.b16 %v1296
  %v1321 = vunpack.c.h.b16 %v1296
  %v1322 = vunpack.c.l.b16 %v1297
  %v1323 = vunpack.c.h.b16 %v1297
  %v1324 = vunpack.c.l.b16 %v1298
  %v1325 = vunpack.c.h.b16 %v1298
  %v1326 = vunpack.c.l.b16 %v1299
  %v1327 = vunpack.c.h.b16 %v1299
  %v1328 = vunpack.c.l.b16 %v1300
  %v1329 = vunpack.c.h.b16 %v1300
  %v1330 = vunpack.c.l.b16 %v1301
  %v1331 = vunpack.c.h.b16 %v1301
  %v1332 = vpack.c.b16 %v1314, %v1312
  %v1333 = vpack.c.b16 %v1315, %v1313
  %v1334 = vpack.c.b16 %v1318, %v1316
  %v1335 = vpack.c.b16 %v1319, %v1317
  %v1336 = vpack.c.b16 %v1322, %v1320
  %v1337 = vpack.c.b16 %v1323, %v1321
  %v1338 = vpack.c.b16 %v1326, %v1324
  %v1339 = vpack.c.b16 %v1327, %v1325
  %v1340 = vpack.c.b16 %v1330, %v1328
  %v1341 = vpack.c.b16 %v1331, %v1329
  %v1348 = vsel %vm518, %v1333, 0
  %v1351 = vsel %vm518, %v1335, 0
  %v1354 = vsel %vm518, %v1337, 0
  %v1357 = vsel %vm518, %v1339, 0
  %v1360 = vsel %vm518, %v1341, 0
  %1362 = vmatpush.bf16.msra.mxu0 %v459
  %1363 = vmatpush.bf16.msra.mxu0 %v457
  %1364 = vmatpush.bf16.msra.mxu0 %v455
  %1365 = vmatpush.bf16.msra.mxu0 %v453
  %1366 = vmatpush.bf16.msra.mxu0 %v451
  %1367 = vmatpush.bf16.msra.mxu0 %v449
  %1368 = vmatpush.bf16.msra.mxu0 %v447
  %1369 = vmatpush.bf16.msra.mxu0 %v445
  %1370 = vmatmul.bf16.gmra.mxu0 %v1332
  %v1371 = vpop.f32.mrf.mxu0
  %v1372 = vadd.f32 0.0, %v1371
  %v1373 = vpop.f32.mrf.mxu0
  %v1374 = vadd.f32 0.0, %v1373
  %1375 = vmatmul.bf16.gmra.mxu0 %v1334
  %v1376 = vpop.f32.mrf.mxu0
  %v1377 = vadd.f32 0.0, %v1376
  %v1378 = vpop.f32.mrf.mxu0
  %v1379 = vadd.f32 0.0, %v1378
  %1380 = vmatmul.bf16.gmra.mxu0 %v1336
  %v1381 = vpop.f32.mrf.mxu0
  %v1382 = vadd.f32 0.0, %v1381
  %v1383 = vpop.f32.mrf.mxu0
  %v1384 = vadd.f32 0.0, %v1383
  %1385 = vmatmul.bf16.gmra.mxu0 %v1338
  %v1386 = vpop.f32.mrf.mxu0
  %v1387 = vadd.f32 0.0, %v1386
  %v1388 = vpop.f32.mrf.mxu0
  %v1389 = vadd.f32 0.0, %v1388
  %1390 = vmatmul.bf16.gmra.mxu0 %v1340
  %v1391 = vpop.f32.mrf.mxu0
  %v1392 = vadd.f32 0.0, %v1391
  %v1393 = vpop.f32.mrf.mxu0
  %v1394 = vadd.f32 0.0, %v1393
  %1395 = vdwg.mxu0
  %1396 = vmatpush.bf16.msra.mxu0 0
  %1397 = vmatpush.bf16.msra.mxu0 0
  %1398 = vmatpush.bf16.msra.mxu0 %v471
  %1399 = vmatpush.bf16.msra.mxu0 %v469
  %1400 = vmatpush.bf16.msra.mxu0 %v467
  %1401 = vmatpush.bf16.msra.mxu0 %v465
  %1402 = vmatpush.bf16.msra.mxu0 %v463
  %1403 = vmatpush.bf16.msra.mxu0 %v461
  %1404 = vmatmul.bf16.gmra.mxu0 %v1348
  %v1405 = vpop.f32.mrf.mxu0
  %v1406 = vadd.f32 %v1372, %v1405
  %v1407 = vpop.f32.mrf.mxu0
  %v1408 = vadd.f32 %v1374, %v1407
  %1409 = vmatmul.bf16.gmra.mxu0 %v1351
  %v1410 = vpop.f32.mrf.mxu0
  %v1411 = vadd.f32 %v1377, %v1410
  %v1412 = vpop.f32.mrf.mxu0
  %v1413 = vadd.f32 %v1379, %v1412
  %1414 = vmatmul.bf16.gmra.mxu0 %v1354
  %v1415 = vpop.f32.mrf.mxu0
  %v1416 = vadd.f32 %v1382, %v1415
  %v1417 = vpop.f32.mrf.mxu0
  %v1418 = vadd.f32 %v1384, %v1417
  %1419 = vmatmul.bf16.gmra.mxu0 %v1357
  %v1420 = vpop.f32.mrf.mxu0
  %v1421 = vadd.f32 %v1387, %v1420
  %v1422 = vpop.f32.mrf.mxu0
  %v1423 = vadd.f32 %v1389, %v1422
  %1424 = vmatmul.bf16.gmra.mxu0 %v1360
  %v1425 = vpop.f32.mrf.mxu0
  %v1426 = vadd.f32 %v1392, %v1425
  %v1427 = vpop.f32.mrf.mxu0
  %v1428 = vadd.f32 %v1394, %v1427
  %1429 = vdwg.mxu0
  %1430 = vmatpush.bf16.msra.mxu0 %v460
  %1431 = vmatpush.bf16.msra.mxu0 %v458
  %1432 = vmatpush.bf16.msra.mxu0 %v456
  %1433 = vmatpush.bf16.msra.mxu0 %v454
  %1434 = vmatpush.bf16.msra.mxu0 %v452
  %1435 = vmatpush.bf16.msra.mxu0 %v450
  %1436 = vmatpush.bf16.msra.mxu0 %v448
  %1437 = vmatpush.bf16.msra.mxu0 %v446
  %1438 = vmatmul.bf16.gmra.mxu0 %v1332
  %v1439 = vpop.f32.mrf.mxu0
  %v1440 = vadd.f32 0.0, %v1439
  %v1441 = vpop.f32.mrf.mxu0
  %v1442 = vadd.f32 0.0, %v1441
  %1443 = vmatmul.bf16.gmra.mxu0 %v1334
  %v1444 = vpop.f32.mrf.mxu0
  %v1445 = vadd.f32 0.0, %v1444
  %v1446 = vpop.f32.mrf.mxu0
  %v1447 = vadd.f32 0.0, %v1446
  %1448 = vmatmul.bf16.gmra.mxu0 %v1336
  %v1449 = vpop.f32.mrf.mxu0
  %v1450 = vadd.f32 0.0, %v1449
  %v1451 = vpop.f32.mrf.mxu0
  %v1452 = vadd.f32 0.0, %v1451
  %1453 = vmatmul.bf16.gmra.mxu0 %v1338
  %v1454 = vpop.f32.mrf.mxu0
  %v1455 = vadd.f32 0.0, %v1454
  %v1456 = vpop.f32.mrf.mxu0
  %v1457 = vadd.f32 0.0, %v1456
  %1458 = vmatmul.bf16.gmra.mxu0 %v1340
  %v1459 = vpop.f32.mrf.mxu0
  %v1460 = vadd.f32 0.0, %v1459
  %v1461 = vpop.f32.mrf.mxu0
  %v1462 = vadd.f32 0.0, %v1461
  %1463 = vdwg.mxu0
  %1464 = vmatpush.bf16.msra.mxu0 0
  %1465 = vmatpush.bf16.msra.mxu0 0
  %1466 = vmatpush.bf16.msra.mxu0 %v472
  %1467 = vmatpush.bf16.msra.mxu0 %v470
  %1468 = vmatpush.bf16.msra.mxu0 %v468
  %1469 = vmatpush.bf16.msra.mxu0 %v466
  %1470 = vmatpush.bf16.msra.mxu0 %v464
  %1471 = vmatpush.bf16.msra.mxu0 %v462
  %1472 = vmatmul.bf16.gmra.mxu0 %v1348
  %v1473 = vpop.f32.mrf.mxu0
  %v1474 = vadd.f32 %v1440, %v1473
  %v1475 = vpop.f32.mrf.mxu0
  %v1476 = vadd.f32 %v1442, %v1475
  %1477 = vmatmul.bf16.gmra.mxu0 %v1351
  %v1478 = vpop.f32.mrf.mxu0
  %v1479 = vadd.f32 %v1445, %v1478
  %v1480 = vpop.f32.mrf.mxu0
  %v1481 = vadd.f32 %v1447, %v1480
  %1482 = vmatmul.bf16.gmra.mxu0 %v1354
  %v1483 = vpop.f32.mrf.mxu0
  %v1484 = vadd.f32 %v1450, %v1483
  %v1485 = vpop.f32.mrf.mxu0
  %v1486 = vadd.f32 %v1452, %v1485
  %1487 = vmatmul.bf16.gmra.mxu0 %v1357
  %v1488 = vpop.f32.mrf.mxu0
  %v1489 = vadd.f32 %v1455, %v1488
  %v1490 = vpop.f32.mrf.mxu0
  %v1491 = vadd.f32 %v1457, %v1490
  %1492 = vmatmul.bf16.gmra.mxu0 %v1360
  %v1493 = vpop.f32.mrf.mxu0
  %v1494 = vadd.f32 %v1460, %v1493
  %v1495 = vpop.f32.mrf.mxu0
  %v1496 = vadd.f32 %v1462, %v1495
  %1497 = vdwg.mxu0
  %v1498 = vld [vmem:[%s4] sm:$0xff]
  %v1499 = vld [vmem:[%s4 + $0x8] sm:$0xff]
  %v1500 = vld [vmem:[%s4 + $0x10] sm:$0xff]
  %v1501 = vld [vmem:[%s4 + $0x18] sm:$0xff]
  %v1502 = vld [vmem:[%s4 + $0x20] sm:$0xff]
  %v1503 = vld [vmem:[%s4 + $0x28] sm:$0xff]
  %v1504 = vld [vmem:[%s4 + $0x30] sm:$0xff]
  %v1505 = vld [vmem:[%s4 + $0x38] sm:$0xff]
  %v1506 = vld [vmem:[%s4 + $0x40] sm:$0xff]
  %v1507 = vld [vmem:[%s4 + $0x48] sm:$0xff]
  %v1508 = vld [vmem:[%s4 + $0x50] sm:$0xff]
  %v1509 = vld [vmem:[%s4 + $0x58] sm:$0xff]
  %v1510 = vld [vmem:[%s4 + $0x60] sm:$0xff]
  %v1511 = vld [vmem:[%s4 + $0x68] sm:$0xff]
  %v1512 = vld [vmem:[%s4 + $0x70] sm:$0xff]
  %v1513 = vld [vmem:[%s4 + $0x78] sm:$0xff]
  %v1514 = vld [vmem:[%s4 + $0x80] sm:$0xff]
  %v1515 = vld [vmem:[%s4 + $0x88] sm:$0xff]
  %v1516 = vld [vmem:[%s4 + $0x90] sm:$0xff]
  %v1517 = vld [vmem:[%s4 + $0x98] sm:$0xff]
  %v1518 = vld [vmem:[%s4 + $0xa0] sm:$0xff]
  %v1519 = vld [vmem:[%s4 + $0xa8] sm:$0xff]
  %v1520 = vld [vmem:[%s4 + $0xb0] sm:$0xff]
  %v1521 = vld [vmem:[%s4 + $0xb8] sm:$0xff]
  %v1522 = vld [vmem:[%s4 + $0xc0] sm:$0xff]
  %v1523 = vld [vmem:[%s4 + $0xc8] sm:$0xff]
  %v1524 = vld [vmem:[%s4 + $0xd0] sm:$0xff]
  %v1525 = vld [vmem:[%s4 + $0xd8] sm:$0xff]
  %v1526 = vld [vmem:[%s4 + $0xe0] sm:$0xff]
  %v1527 = vld [vmem:[%s4 + $0xe8] sm:$0xff]
  %v1528 = vld [vmem:[%s4 + $0xf0] sm:$0xff]
  %v1529 = vld [vmem:[%s4 + $0xf8] sm:$0xff]
  %v1530 = vld [vmem:[%s4 + $0x100] sm:$0xff]
  %v1531 = vld [vmem:[%s4 + $0x108] sm:$0xff]
  %v1532 = vld [vmem:[%s4 + $0x110] sm:$0xff]
  %v1533 = vld [vmem:[%s4 + $0x118] sm:$0xff]
  %v1534 = vld [vmem:[%s4 + $0x120] sm:$0xff]
  %v1535 = vld [vmem:[%s4 + $0x128] sm:$0xff]
  %v1536 = vld [vmem:[%s4 + $0x130] sm:$0xff]
  %v1537 = vld [vmem:[%s4 + $0x138] sm:$0xff]
  %v1538 = vld [vmem:[%s4 + $0x140] sm:$0xff]
  %v1539 = vld [vmem:[%s4 + $0x148] sm:$0xff]
  %v1540 = vld [vmem:[%s4 + $0x150] sm:$0xff]
  %v1541 = vld [vmem:[%s4 + $0x158] sm:$0xff]
  %v1542 = vld [vmem:[%s4 + $0x160] sm:$0xff]
  %v1543 = vld [vmem:[%s4 + $0x168] sm:$0xff]
  %v1544 = vld [vmem:[%s4 + $0x170] sm:$0xff]
  %v1545 = vld [vmem:[%s4 + $0x178] sm:$0xff]
  %v1546 = vld [vmem:[%s4 + $0x180] sm:$0xff]
  %v1547 = vld [vmem:[%s4 + $0x188] sm:$0xff]
  %v1548 = vld [vmem:[%s4 + $0x190] sm:$0xff]
  %v1549 = vld [vmem:[%s4 + $0x198] sm:$0xff]
  %v1550 = vld [vmem:[%s4 + $0x1a0] sm:$0xff]
  %v1551 = vld [vmem:[%s4 + $0x1a8] sm:$0xff]
  %v1552 = vld [vmem:[%s4 + $0x1b0] sm:$0xff]
  %v1553 = vld [vmem:[%s4 + $0x1b8] sm:$0xff]
  %v1554 = vld [vmem:[%s4 + $0x1c0] sm:$0xff]
  %v1555 = vld [vmem:[%s4 + $0x1c8] sm:$0xff]
  %v1556 = vld [vmem:[%s4 + $0x1d0] sm:$0xff]
  %v1557 = vld [vmem:[%s4 + $0x1d8] sm:$0xff]
  %v1558 = vld [vmem:[%s4 + $0x1e0] sm:$0xff]
  %v1559 = vld [vmem:[%s4 + $0x1e8] sm:$0xff]
  %v1560 = vld [vmem:[%s4 + $0x1f0] sm:$0xff]
  %v1561 = vld [vmem:[%s4 + $0x1f8] sm:$0xff]
  %v1562 = vld [vmem:[%s4 + $0x200] sm:$0xff]
  %v1563 = vld [vmem:[%s4 + $0x208] sm:$0xff]
  %v1564 = vld [vmem:[%s4 + $0x210] sm:$0xff]
  %v1565 = vld [vmem:[%s4 + $0x218] sm:$0xff]
  %v1566 = vld [vmem:[%s4 + $0x220] sm:$0xff]
  %v1567 = vld [vmem:[%s4 + $0x228] sm:$0xff]
  %v1568 = vld [vmem:[%s4 + $0x230] sm:$0xff]
  %v1569 = vld [vmem:[%s4 + $0x238] sm:$0xff]
  %v1570 = vld [vmem:[%s4 + $0x240] sm:$0xff]
  %v1571 = vld [vmem:[%s4 + $0x248] sm:$0xff]
  %v1572 = vld [vmem:[%s4 + $0x250] sm:$0xff]
  %v1573 = vld [vmem:[%s4 + $0x258] sm:$0xff]
  %v1574 = vld [vmem:[%s4 + $0x260] sm:$0xff]
  %v1575 = vld [vmem:[%s4 + $0x268] sm:$0xff]
  %v1576 = vld [vmem:[%s4 + $0x270] sm:$0xff]
  %v1577 = vld [vmem:[%s4 + $0x278] sm:$0xff]
  %v1578 = vld [vmem:[%s4 + $0x280] sm:$0xff]
  %v1579 = vld [vmem:[%s4 + $0x288] sm:$0xff]
  %v1580 = vld [vmem:[%s4 + $0x290] sm:$0xff]
  %v1581 = vld [vmem:[%s4 + $0x298] sm:$0xff]
  %v1582 = vld [vmem:[%s4 + $0x2a0] sm:$0xff]
  %v1583 = vld [vmem:[%s4 + $0x2a8] sm:$0xff]
  %v1584 = vld [vmem:[%s4 + $0x2b0] sm:$0xff]
  %v1585 = vld [vmem:[%s4 + $0x2b8] sm:$0xff]
  %v1586 = vld [vmem:[%s4 + $0x2c0] sm:$0xff]
  %v1587 = vld [vmem:[%s4 + $0x2c8] sm:$0xff]
  %v1588 = vld [vmem:[%s4 + $0x2d0] sm:$0xff]
  %v1589 = vld [vmem:[%s4 + $0x2d8] sm:$0xff]
  %v1590 = vld [vmem:[%s4 + $0x2e0] sm:$0xff]
  %v1591 = vld [vmem:[%s4 + $0x2e8] sm:$0xff]
  %v1592 = vld [vmem:[%s4 + $0x2f0] sm:$0xff]
  %v1593 = vld [vmem:[%s4 + $0x2f8] sm:$0xff]
  %v1594 = vld [vmem:[%s4 + $0x300] sm:$0xff]
  %v1595 = vld [vmem:[%s4 + $0x308] sm:$0xff]
  %v1596 = vld [vmem:[%s4 + $0x310] sm:$0xff]
  %v1597 = vld [vmem:[%s4 + $0x318] sm:$0xff]
  %v1598 = vld [vmem:[%s4 + $0x320] sm:$0xff]
  %v1599 = vld [vmem:[%s4 + $0x328] sm:$0xff]
  %v1600 = vld [vmem:[%s4 + $0x330] sm:$0xff]
  %v1601 = vld [vmem:[%s4 + $0x338] sm:$0xff]
  %v1602 = vld [vmem:[%s4 + $0x340] sm:$0xff]
  %v1603 = vld [vmem:[%s4 + $0x348] sm:$0xff]
  %v1604 = vld [vmem:[%s4 + $0x350] sm:$0xff]
  %v1605 = vld [vmem:[%s4 + $0x358] sm:$0xff]
  %v1606 = vld [vmem:[%s4 + $0x360] sm:$0xff]
  %v1607 = vld [vmem:[%s4 + $0x368] sm:$0xff]
  %v1608 = vld [vmem:[%s4 + $0x370] sm:$0xff]
  %v1609 = vld [vmem:[%s4 + $0x378] sm:$0xff]
  %v1610 = vld [vmem:[%s4 + $0x380] sm:$0xff]
  %v1611 = vld [vmem:[%s4 + $0x388] sm:$0xff]
  %v1612 = vld [vmem:[%s4 + $0x390] sm:$0xff]
  %v1613 = vld [vmem:[%s4 + $0x398] sm:$0xff]
  %v1614 = vld [vmem:[%s4 + $0x3a0] sm:$0xff]
  %v1615 = vld [vmem:[%s4 + $0x3a8] sm:$0xff]
  %v1616 = vld [vmem:[%s4 + $0x3b0] sm:$0xff]
  %v1617 = vld [vmem:[%s4 + $0x3b8] sm:$0xff]
  %v1618 = vld [vmem:[%s4 + $0x3c0] sm:$0xff]
  %v1619 = vld [vmem:[%s4 + $0x3c8] sm:$0xff]
  %v1620 = vld [vmem:[%s4 + $0x3d0] sm:$0xff]
  %v1621 = vld [vmem:[%s4 + $0x3d8] sm:$0xff]
  %v1622 = vld [vmem:[%s4 + $0x3e0] sm:$0xff]
  %v1623 = vld [vmem:[%s4 + $0x3e8] sm:$0xff]
  %v1624 = vld [vmem:[%s4 + $0x3f0] sm:$0xff]
  %v1625 = vld [vmem:[%s4 + $0x3f8] sm:$0xff]
  %v1626 = vld [vmem:[%s4 + $0x400] sm:$0xff]
  %v1627 = vld [vmem:[%s4 + $0x408] sm:$0xff]
  %v1628 = vld [vmem:[%s4 + $0x410] sm:$0xff]
  %v1629 = vld [vmem:[%s4 + $0x418] sm:$0xff]
  %v1630 = vld [vmem:[%s4 + $0x420] sm:$0xff]
  %v1631 = vld [vmem:[%s4 + $0x428] sm:$0xff]
  %v1632 = vld [vmem:[%s4 + $0x430] sm:$0xff]
  %v1633 = vld [vmem:[%s4 + $0x438] sm:$0xff]
  %v1634 = vld [vmem:[%s4 + $0x440] sm:$0xff]
  %v1635 = vld [vmem:[%s4 + $0x448] sm:$0xff]
  %v1636 = vld [vmem:[%s4 + $0x450] sm:$0xff]
  %v1637 = vld [vmem:[%s4 + $0x458] sm:$0xff]
  %v1638 = vld [vmem:[%s4 + $0x460] sm:$0xff]
  %v1639 = vld [vmem:[%s4 + $0x468] sm:$0xff]
  %v1640 = vld [vmem:[%s4 + $0x470] sm:$0xff]
  %v1641 = vld [vmem:[%s4 + $0x478] sm:$0xff]
  %v1642 = vld [vmem:[%s4 + $0x480] sm:$0xff]
  %v1643 = vld [vmem:[%s4 + $0x488] sm:$0xff]
  %v1644 = vld [vmem:[%s4 + $0x490] sm:$0xff]
  %v1645 = vld [vmem:[%s4 + $0x498] sm:$0xff]
  %v1646 = vld [vmem:[%s4 + $0x4a0] sm:$0xff]
  %v1647 = vld [vmem:[%s4 + $0x4a8] sm:$0xff]
  %v1648 = vld [vmem:[%s4 + $0x4b0] sm:$0xff]
  %v1649 = vld [vmem:[%s4 + $0x4b8] sm:$0xff]
  %v1650 = vld [vmem:[%s4 + $0x4c0] sm:$0xff]
  %v1651 = vld [vmem:[%s4 + $0x4c8] sm:$0xff]
  %v1652 = vld [vmem:[%s4 + $0x4d0] sm:$0xff]
  %v1653 = vld [vmem:[%s4 + $0x4d8] sm:$0xff]
  %v1654 = vld [vmem:[%s4 + $0x4e0] sm:$0xff]
  %v1655 = vld [vmem:[%s4 + $0x4e8] sm:$0xff]
  %v1656 = vld [vmem:[%s4 + $0x4f0] sm:$0xff]
  %v1657 = vld [vmem:[%s4 + $0x4f8] sm:$0xff]
  %v1658 = vpack.c.bf16 %v580, %v578
  %v1659 = vpack.c.bf16 %v648, %v646
  %v1660 = vpack.c.bf16 %v787, %v785
  %v1661 = vpack.c.bf16 %v855, %v853
  %v1662 = vpack.c.bf16 %v994, %v992
  %v1663 = vpack.c.bf16 %v1062, %v1060
  %v1664 = vpack.c.bf16 %v1201, %v1199
  %v1665 = vpack.c.bf16 %v1269, %v1267
  %v1666 = vpack.c.bf16 %v1408, %v1406
  %v1667 = vpack.c.bf16 %v1476, %v1474
  %v1668 = vpack.c.bf16 %v585, %v583
  %v1669 = vpack.c.bf16 %v653, %v651
  %v1670 = vpack.c.bf16 %v792, %v790
  %v1671 = vpack.c.bf16 %v860, %v858
  %v1672 = vpack.c.bf16 %v999, %v997
  %v1673 = vpack.c.bf16 %v1067, %v1065
  %v1674 = vpack.c.bf16 %v1206, %v1204
  %v1675 = vpack.c.bf16 %v1274, %v1272
  %v1676 = vpack.c.bf16 %v1413, %v1411
  %v1677 = vpack.c.bf16 %v1481, %v1479
  %v1678 = vpack.c.bf16 %v590, %v588
  %v1679 = vpack.c.bf16 %v658, %v656
  %v1680 = vpack.c.bf16 %v797, %v795
  %v1681 = vpack.c.bf16 %v865, %v863
  %v1682 = vpack.c.bf16 %v1004, %v1002
  %v1683 = vpack.c.bf16 %v1072, %v1070
  %v1684 = vpack.c.bf16 %v1211, %v1209
  %v1685 = vpack.c.bf16 %v1279, %v1277
  %v1686 = vpack.c.bf16 %v1418, %v1416
  %v1687 = vpack.c.bf16 %v1486, %v1484
  %v1688 = vpack.c.bf16 %v595, %v593
  %v1689 = vpack.c.bf16 %v663, %v661
  %v1690 = vpack.c.bf16 %v802, %v800
  %v1691 = vpack.c.bf16 %v870, %v868
  %v1692 = vpack.c.bf16 %v1009, %v1007
  %v1693 = vpack.c.bf16 %v1077, %v1075
  %v1694 = vpack.c.bf16 %v1216, %v1214
  %v1695 = vpack.c.bf16 %v1284, %v1282
  %v1696 = vpack.c.bf16 %v1423, %v1421
  %v1697 = vpack.c.bf16 %v1491, %v1489
  %v1698 = vpack.c.bf16 %v600, %v598
  %v1699 = vpack.c.bf16 %v668, %v666
  %v1700 = vpack.c.bf16 %v807, %v805
  %v1701 = vpack.c.bf16 %v875, %v873
  %v1702 = vpack.c.bf16 %v1014, %v1012
  %v1703 = vpack.c.bf16 %v1082, %v1080
  %v1704 = vpack.c.bf16 %v1221, %v1219
  %v1705 = vpack.c.bf16 %v1289, %v1287
  %v1706 = vpack.c.bf16 %v1428, %v1426
  %v1707 = vpack.c.bf16 %v1496, %v1494
  %v1708 = vld [vmem:[%s5] sm:$0x3]
  %v1710 = vperm.slane %v1708, 0
  %v1711 = vperm.slane %v1708, 1
  %v1874 = vunpack.c.l.b16 %v1498
  %v1875 = vunpack.c.h.b16 %v1498
  %v1876 = vunpack.c.l.b16 %v1499
  %v1877 = vunpack.c.h.b16 %v1499
  %v1878 = vunpack.c.l.b16 %v1500
  %v1879 = vunpack.c.h.b16 %v1500
  %v1880 = vunpack.c.l.b16 %v1501
  %v1881 = vunpack.c.h.b16 %v1501
  %v1882 = vunpack.c.l.b16 %v1502
  %v1883 = vunpack.c.h.b16 %v1502
  %v1884 = vunpack.c.l.b16 %v1503
  %v1885 = vunpack.c.h.b16 %v1503
  %v1886 = vunpack.c.l.b16 %v1504
  %v1887 = vunpack.c.h.b16 %v1504
  %v1888 = vunpack.c.l.b16 %v1505
  %v1889 = vunpack.c.h.b16 %v1505
  %v1890 = vunpack.c.l.b16 %v1506
  %v1891 = vunpack.c.h.b16 %v1506
  %v1892 = vunpack.c.l.b16 %v1507
  %v1893 = vunpack.c.h.b16 %v1507
  %v1894 = vunpack.c.l.b16 %v1508
  %v1895 = vunpack.c.h.b16 %v1508
  %v1896 = vunpack.c.l.b16 %v1509
  %v1897 = vunpack.c.h.b16 %v1509
  %v1898 = vunpack.c.l.b16 %v1510
  %v1899 = vunpack.c.h.b16 %v1510
  %v1900 = vunpack.c.l.b16 %v1511
  %v1901 = vunpack.c.h.b16 %v1511
  %v1902 = vunpack.c.l.b16 %v1512
  %v1903 = vunpack.c.h.b16 %v1512
  %v1904 = vunpack.c.l.b16 %v1513
  %v1905 = vunpack.c.h.b16 %v1513
  %v1906 = vunpack.c.l.b16 %v1514
  %v1907 = vunpack.c.h.b16 %v1514
  %v1908 = vunpack.c.l.b16 %v1515
  %v1909 = vunpack.c.h.b16 %v1515
  %v1910 = vunpack.c.l.b16 %v1516
  %v1911 = vunpack.c.h.b16 %v1516
  %v1912 = vunpack.c.l.b16 %v1517
  %v1913 = vunpack.c.h.b16 %v1517
  %v1914 = vunpack.c.l.b16 %v1518
  %v1915 = vunpack.c.h.b16 %v1518
  %v1916 = vunpack.c.l.b16 %v1519
  %v1917 = vunpack.c.h.b16 %v1519
  %v1918 = vunpack.c.l.b16 %v1520
  %v1919 = vunpack.c.h.b16 %v1520
  %v1920 = vunpack.c.l.b16 %v1521
  %v1921 = vunpack.c.h.b16 %v1521
  %v1922 = vunpack.c.l.b16 %v1522
  %v1923 = vunpack.c.h.b16 %v1522
  %v1924 = vunpack.c.l.b16 %v1523
  %v1925 = vunpack.c.h.b16 %v1523
  %v1926 = vunpack.c.l.b16 %v1524
  %v1927 = vunpack.c.h.b16 %v1524
  %v1928 = vunpack.c.l.b16 %v1525
  %v1929 = vunpack.c.h.b16 %v1525
  %v1930 = vunpack.c.l.b16 %v1526
  %v1931 = vunpack.c.h.b16 %v1526
  %v1932 = vunpack.c.l.b16 %v1527
  %v1933 = vunpack.c.h.b16 %v1527
  %v1934 = vunpack.c.l.b16 %v1528
  %v1935 = vunpack.c.h.b16 %v1528
  %v1936 = vunpack.c.l.b16 %v1529
  %v1937 = vunpack.c.h.b16 %v1529
  %v1938 = vunpack.c.l.b16 %v1530
  %v1939 = vunpack.c.h.b16 %v1530
  %v1940 = vunpack.c.l.b16 %v1531
  %v1941 = vunpack.c.h.b16 %v1531
  %v1942 = vunpack.c.l.b16 %v1532
  %v1943 = vunpack.c.h.b16 %v1532
  %v1944 = vunpack.c.l.b16 %v1533
  %v1945 = vunpack.c.h.b16 %v1533
  %v1946 = vunpack.c.l.b16 %v1534
  %v1947 = vunpack.c.h.b16 %v1534
  %v1948 = vunpack.c.l.b16 %v1535
  %v1949 = vunpack.c.h.b16 %v1535
  %v1950 = vunpack.c.l.b16 %v1536
  %v1951 = vunpack.c.h.b16 %v1536
  %v1952 = vunpack.c.l.b16 %v1537
  %v1953 = vunpack.c.h.b16 %v1537
  %v1954 = vunpack.c.l.b16 %v1538
  %v1955 = vunpack.c.h.b16 %v1538
  %v1956 = vunpack.c.l.b16 %v1539
  %v1957 = vunpack.c.h.b16 %v1539
  %v1958 = vunpack.c.l.b16 %v1540
  %v1959 = vunpack.c.h.b16 %v1540
  %v1960 = vunpack.c.l.b16 %v1541
  %v1961 = vunpack.c.h.b16 %v1541
  %v1962 = vunpack.c.l.b16 %v1542
  %v1963 = vunpack.c.h.b16 %v1542
  %v1964 = vunpack.c.l.b16 %v1543
  %v1965 = vunpack.c.h.b16 %v1543
  %v1966 = vunpack.c.l.b16 %v1544
  %v1967 = vunpack.c.h.b16 %v1544
  %v1968 = vunpack.c.l.b16 %v1545
  %v1969 = vunpack.c.h.b16 %v1545
  %v1970 = vunpack.c.l.b16 %v1546
  %v1971 = vunpack.c.h.b16 %v1546
  %v1972 = vunpack.c.l.b16 %v1547
  %v1973 = vunpack.c.h.b16 %v1547
  %v1974 = vunpack.c.l.b16 %v1548
  %v1975 = vunpack.c.h.b16 %v1548
  %v1976 = vunpack.c.l.b16 %v1549
  %v1977 = vunpack.c.h.b16 %v1549
  %v1978 = vunpack.c.l.b16 %v1550
  %v1979 = vunpack.c.h.b16 %v1550
  %v1980 = vunpack.c.l.b16 %v1551
  %v1981 = vunpack.c.h.b16 %v1551
  %v1982 = vunpack.c.l.b16 %v1552
  %v1983 = vunpack.c.h.b16 %v1552
  %v1984 = vunpack.c.l.b16 %v1553
  %v1985 = vunpack.c.h.b16 %v1553
  %v1986 = vunpack.c.l.b16 %v1554
  %v1987 = vunpack.c.h.b16 %v1554
  %v1988 = vunpack.c.l.b16 %v1555
  %v1989 = vunpack.c.h.b16 %v1555
  %v1990 = vunpack.c.l.b16 %v1556
  %v1991 = vunpack.c.h.b16 %v1556
  %v1992 = vunpack.c.l.b16 %v1557
  %v1993 = vunpack.c.h.b16 %v1557
  %v1994 = vunpack.c.l.b16 %v1558
  %v1995 = vunpack.c.h.b16 %v1558
  %v1996 = vunpack.c.l.b16 %v1559
  %v1997 = vunpack.c.h.b16 %v1559
  %v1998 = vunpack.c.l.b16 %v1560
  %v1999 = vunpack.c.h.b16 %v1560
  %v2000 = vunpack.c.l.b16 %v1561
  %v2001 = vunpack.c.h.b16 %v1561
  %v2002 = vunpack.c.l.b16 %v1562
  %v2003 = vunpack.c.h.b16 %v1562
  %v2004 = vunpack.c.l.b16 %v1563
  %v2005 = vunpack.c.h.b16 %v1563
  %v2006 = vunpack.c.l.b16 %v1564
  %v2007 = vunpack.c.h.b16 %v1564
  %v2008 = vunpack.c.l.b16 %v1565
  %v2009 = vunpack.c.h.b16 %v1565
  %v2010 = vunpack.c.l.b16 %v1566
  %v2011 = vunpack.c.h.b16 %v1566
  %v2012 = vunpack.c.l.b16 %v1567
  %v2013 = vunpack.c.h.b16 %v1567
  %v2014 = vunpack.c.l.b16 %v1568
  %v2015 = vunpack.c.h.b16 %v1568
  %v2016 = vunpack.c.l.b16 %v1569
  %v2017 = vunpack.c.h.b16 %v1569
  %v2018 = vunpack.c.l.b16 %v1570
  %v2019 = vunpack.c.h.b16 %v1570
  %v2020 = vunpack.c.l.b16 %v1571
  %v2021 = vunpack.c.h.b16 %v1571
  %v2022 = vunpack.c.l.b16 %v1572
  %v2023 = vunpack.c.h.b16 %v1572
  %v2024 = vunpack.c.l.b16 %v1573
  %v2025 = vunpack.c.h.b16 %v1573
  %v2026 = vunpack.c.l.b16 %v1574
  %v2027 = vunpack.c.h.b16 %v1574
  %v2028 = vunpack.c.l.b16 %v1575
  %v2029 = vunpack.c.h.b16 %v1575
  %v2030 = vunpack.c.l.b16 %v1576
  %v2031 = vunpack.c.h.b16 %v1576
  %v2032 = vunpack.c.l.b16 %v1577
  %v2033 = vunpack.c.h.b16 %v1577
  %v2034 = vunpack.c.l.b16 %v1578
  %v2035 = vunpack.c.h.b16 %v1578
  %v2036 = vunpack.c.l.b16 %v1579
  %v2037 = vunpack.c.h.b16 %v1579
  %v2038 = vunpack.c.l.b16 %v1580
  %v2039 = vunpack.c.h.b16 %v1580
  %v2040 = vunpack.c.l.b16 %v1581
  %v2041 = vunpack.c.h.b16 %v1581
  %v2042 = vunpack.c.l.b16 %v1582
  %v2043 = vunpack.c.h.b16 %v1582
  %v2044 = vunpack.c.l.b16 %v1583
  %v2045 = vunpack.c.h.b16 %v1583
  %v2046 = vunpack.c.l.b16 %v1584
  %v2047 = vunpack.c.h.b16 %v1584
  %v2048 = vunpack.c.l.b16 %v1585
  %v2049 = vunpack.c.h.b16 %v1585
  %v2050 = vunpack.c.l.b16 %v1586
  %v2051 = vunpack.c.h.b16 %v1586
  %v2052 = vunpack.c.l.b16 %v1587
  %v2053 = vunpack.c.h.b16 %v1587
  %v2054 = vunpack.c.l.b16 %v1588
  %v2055 = vunpack.c.h.b16 %v1588
  %v2056 = vunpack.c.l.b16 %v1589
  %v2057 = vunpack.c.h.b16 %v1589
  %v2058 = vunpack.c.l.b16 %v1590
  %v2059 = vunpack.c.h.b16 %v1590
  %v2060 = vunpack.c.l.b16 %v1591
  %v2061 = vunpack.c.h.b16 %v1591
  %v2062 = vunpack.c.l.b16 %v1592
  %v2063 = vunpack.c.h.b16 %v1592
  %v2064 = vunpack.c.l.b16 %v1593
  %v2065 = vunpack.c.h.b16 %v1593
  %v2066 = vunpack.c.l.b16 %v1594
  %v2067 = vunpack.c.h.b16 %v1594
  %v2068 = vunpack.c.l.b16 %v1595
  %v2069 = vunpack.c.h.b16 %v1595
  %v2070 = vunpack.c.l.b16 %v1596
  %v2071 = vunpack.c.h.b16 %v1596
  %v2072 = vunpack.c.l.b16 %v1597
  %v2073 = vunpack.c.h.b16 %v1597
  %v2074 = vunpack.c.l.b16 %v1598
  %v2075 = vunpack.c.h.b16 %v1598
  %v2076 = vunpack.c.l.b16 %v1599
  %v2077 = vunpack.c.h.b16 %v1599
  %v2078 = vunpack.c.l.b16 %v1600
  %v2079 = vunpack.c.h.b16 %v1600
  %v2080 = vunpack.c.l.b16 %v1601
  %v2081 = vunpack.c.h.b16 %v1601
  %v2082 = vunpack.c.l.b16 %v1602
  %v2083 = vunpack.c.h.b16 %v1602
  %v2084 = vunpack.c.l.b16 %v1603
  %v2085 = vunpack.c.h.b16 %v1603
  %v2086 = vunpack.c.l.b16 %v1604
  %v2087 = vunpack.c.h.b16 %v1604
  %v2088 = vunpack.c.l.b16 %v1605
  %v2089 = vunpack.c.h.b16 %v1605
  %v2090 = vunpack.c.l.b16 %v1606
  %v2091 = vunpack.c.h.b16 %v1606
  %v2092 = vunpack.c.l.b16 %v1607
  %v2093 = vunpack.c.h.b16 %v1607
  %v2094 = vunpack.c.l.b16 %v1608
  %v2095 = vunpack.c.h.b16 %v1608
  %v2096 = vunpack.c.l.b16 %v1609
  %v2097 = vunpack.c.h.b16 %v1609
  %v2098 = vunpack.c.l.b16 %v1610
  %v2099 = vunpack.c.h.b16 %v1610
  %v2100 = vunpack.c.l.b16 %v1611
  %v2101 = vunpack.c.h.b16 %v1611
  %v2102 = vunpack.c.l.b16 %v1612
  %v2103 = vunpack.c.h.b16 %v1612
  %v2104 = vunpack.c.l.b16 %v1613
  %v2105 = vunpack.c.h.b16 %v1613
  %v2106 = vunpack.c.l.b16 %v1614
  %v2107 = vunpack.c.h.b16 %v1614
  %v2108 = vunpack.c.l.b16 %v1615
  %v2109 = vunpack.c.h.b16 %v1615
  %v2110 = vunpack.c.l.b16 %v1616
  %v2111 = vunpack.c.h.b16 %v1616
  %v2112 = vunpack.c.l.b16 %v1617
  %v2113 = vunpack.c.h.b16 %v1617
  %v2114 = vunpack.c.l.b16 %v1618
  %v2115 = vunpack.c.h.b16 %v1618
  %v2116 = vunpack.c.l.b16 %v1619
  %v2117 = vunpack.c.h.b16 %v1619
  %v2118 = vunpack.c.l.b16 %v1620
  %v2119 = vunpack.c.h.b16 %v1620
  %v2120 = vunpack.c.l.b16 %v1621
  %v2121 = vunpack.c.h.b16 %v1621
  %v2122 = vunpack.c.l.b16 %v1622
  %v2123 = vunpack.c.h.b16 %v1622
  %v2124 = vunpack.c.l.b16 %v1623
  %v2125 = vunpack.c.h.b16 %v1623
  %v2126 = vunpack.c.l.b16 %v1624
  %v2127 = vunpack.c.h.b16 %v1624
  %v2128 = vunpack.c.l.b16 %v1625
  %v2129 = vunpack.c.h.b16 %v1625
  %v2130 = vunpack.c.l.b16 %v1626
  %v2131 = vunpack.c.h.b16 %v1626
  %v2132 = vunpack.c.l.b16 %v1627
  %v2133 = vunpack.c.h.b16 %v1627
  %v2134 = vunpack.c.l.b16 %v1628
  %v2135 = vunpack.c.h.b16 %v1628
  %v2136 = vunpack.c.l.b16 %v1629
  %v2137 = vunpack.c.h.b16 %v1629
  %v2138 = vunpack.c.l.b16 %v1630
  %v2139 = vunpack.c.h.b16 %v1630
  %v2140 = vunpack.c.l.b16 %v1631
  %v2141 = vunpack.c.h.b16 %v1631
  %v2142 = vunpack.c.l.b16 %v1632
  %v2143 = vunpack.c.h.b16 %v1632
  %v2144 = vunpack.c.l.b16 %v1633
  %v2145 = vunpack.c.h.b16 %v1633
  %v2146 = vunpack.c.l.b16 %v1634
  %v2147 = vunpack.c.h.b16 %v1634
  %v2148 = vunpack.c.l.b16 %v1635
  %v2149 = vunpack.c.h.b16 %v1635
  %v2150 = vunpack.c.l.b16 %v1636
  %v2151 = vunpack.c.h.b16 %v1636
  %v2152 = vunpack.c.l.b16 %v1637
  %v2153 = vunpack.c.h.b16 %v1637
  %v2154 = vunpack.c.l.b16 %v1638
  %v2155 = vunpack.c.h.b16 %v1638
  %v2156 = vunpack.c.l.b16 %v1639
  %v2157 = vunpack.c.h.b16 %v1639
  %v2158 = vunpack.c.l.b16 %v1640
  %v2159 = vunpack.c.h.b16 %v1640
  %v2160 = vunpack.c.l.b16 %v1641
  %v2161 = vunpack.c.h.b16 %v1641
  %v2162 = vunpack.c.l.b16 %v1642
  %v2163 = vunpack.c.h.b16 %v1642
  %v2164 = vunpack.c.l.b16 %v1643
  %v2165 = vunpack.c.h.b16 %v1643
  %v2166 = vunpack.c.l.b16 %v1644
  %v2167 = vunpack.c.h.b16 %v1644
  %v2168 = vunpack.c.l.b16 %v1645
  %v2169 = vunpack.c.h.b16 %v1645
  %v2170 = vunpack.c.l.b16 %v1646
  %v2171 = vunpack.c.h.b16 %v1646
  %v2172 = vunpack.c.l.b16 %v1647
  %v2173 = vunpack.c.h.b16 %v1647
  %v2174 = vunpack.c.l.b16 %v1648
  %v2175 = vunpack.c.h.b16 %v1648
  %v2176 = vunpack.c.l.b16 %v1649
  %v2177 = vunpack.c.h.b16 %v1649
  %v2178 = vunpack.c.l.b16 %v1650
  %v2179 = vunpack.c.h.b16 %v1650
  %v2180 = vunpack.c.l.b16 %v1651
  %v2181 = vunpack.c.h.b16 %v1651
  %v2182 = vunpack.c.l.b16 %v1652
  %v2183 = vunpack.c.h.b16 %v1652
  %v2184 = vunpack.c.l.b16 %v1653
  %v2185 = vunpack.c.h.b16 %v1653
  %v2186 = vunpack.c.l.b16 %v1654
  %v2187 = vunpack.c.h.b16 %v1654
  %v2188 = vunpack.c.l.b16 %v1655
  %v2189 = vunpack.c.h.b16 %v1655
  %v2190 = vunpack.c.l.b16 %v1656
  %v2191 = vunpack.c.h.b16 %v1656
  %v2192 = vunpack.c.l.b16 %v1657
  %v2193 = vunpack.c.h.b16 %v1657
  %v2194 = vpack.c.b16 %v1876, %v1874
  %v2195 = vpack.c.b16 %v1877, %v1875
  %v2196 = vpack.c.b16 %v1880, %v1878
  %v2197 = vpack.c.b16 %v1881, %v1879
  %v2198 = vpack.c.b16 %v1884, %v1882
  %v2199 = vpack.c.b16 %v1885, %v1883
  %v2200 = vpack.c.b16 %v1888, %v1886
  %v2201 = vpack.c.b16 %v1889, %v1887
  %v2202 = vpack.c.b16 %v1892, %v1890
  %v2203 = vpack.c.b16 %v1893, %v1891
  %v2204 = vpack.c.b16 %v1896, %v1894
  %v2205 = vpack.c.b16 %v1897, %v1895
  %v2206 = vpack.c.b16 %v1900, %v1898
  %v2207 = vpack.c.b16 %v1901, %v1899
  %v2208 = vpack.c.b16 %v1904, %v1902
  %v2209 = vpack.c.b16 %v1905, %v1903
  %v2210 = vpack.c.b16 %v1908, %v1906
  %v2211 = vpack.c.b16 %v1909, %v1907
  %v2212 = vpack.c.b16 %v1912, %v1910
  %v2213 = vpack.c.b16 %v1913, %v1911
  %v2214 = vpack.c.b16 %v1916, %v1914
  %v2215 = vpack.c.b16 %v1917, %v1915
  %v2216 = vpack.c.b16 %v1920, %v1918
  %v2217 = vpack.c.b16 %v1921, %v1919
  %v2218 = vpack.c.b16 %v1924, %v1922
  %v2219 = vpack.c.b16 %v1925, %v1923
  %v2220 = vpack.c.b16 %v1928, %v1926
  %v2221 = vpack.c.b16 %v1929, %v1927
  %v2222 = vpack.c.b16 %v1932, %v1930
  %v2223 = vpack.c.b16 %v1933, %v1931
  %v2224 = vpack.c.b16 %v1936, %v1934
  %v2225 = vpack.c.b16 %v1937, %v1935
  %v2226 = vpack.c.b16 %v1940, %v1938
  %v2227 = vpack.c.b16 %v1941, %v1939
  %v2228 = vpack.c.b16 %v1944, %v1942
  %v2229 = vpack.c.b16 %v1945, %v1943
  %v2230 = vpack.c.b16 %v1948, %v1946
  %v2231 = vpack.c.b16 %v1949, %v1947
  %v2232 = vpack.c.b16 %v1952, %v1950
  %v2233 = vpack.c.b16 %v1953, %v1951
  %v2234 = vpack.c.b16 %v1956, %v1954
  %v2235 = vpack.c.b16 %v1957, %v1955
  %v2236 = vpack.c.b16 %v1960, %v1958
  %v2237 = vpack.c.b16 %v1961, %v1959
  %v2238 = vpack.c.b16 %v1964, %v1962
  %v2239 = vpack.c.b16 %v1965, %v1963
  %v2240 = vpack.c.b16 %v1968, %v1966
  %v2241 = vpack.c.b16 %v1969, %v1967
  %v2242 = vpack.c.b16 %v1972, %v1970
  %v2243 = vpack.c.b16 %v1973, %v1971
  %v2244 = vpack.c.b16 %v1976, %v1974
  %v2245 = vpack.c.b16 %v1977, %v1975
  %v2246 = vpack.c.b16 %v1980, %v1978
  %v2247 = vpack.c.b16 %v1981, %v1979
  %v2248 = vpack.c.b16 %v1984, %v1982
  %v2249 = vpack.c.b16 %v1985, %v1983
  %v2250 = vpack.c.b16 %v1988, %v1986
  %v2251 = vpack.c.b16 %v1989, %v1987
  %v2252 = vpack.c.b16 %v1992, %v1990
  %v2253 = vpack.c.b16 %v1993, %v1991
  %v2254 = vpack.c.b16 %v1996, %v1994
  %v2255 = vpack.c.b16 %v1997, %v1995
  %v2256 = vpack.c.b16 %v2000, %v1998
  %v2257 = vpack.c.b16 %v2001, %v1999
  %v2258 = vpack.c.b16 %v2004, %v2002
  %v2259 = vpack.c.b16 %v2005, %v2003
  %v2260 = vpack.c.b16 %v2008, %v2006
  %v2261 = vpack.c.b16 %v2009, %v2007
  %v2262 = vpack.c.b16 %v2012, %v2010
  %v2263 = vpack.c.b16 %v2013, %v2011
  %v2264 = vpack.c.b16 %v2016, %v2014
  %v2265 = vpack.c.b16 %v2017, %v2015
  %v2266 = vpack.c.b16 %v2020, %v2018
  %v2267 = vpack.c.b16 %v2021, %v2019
  %v2268 = vpack.c.b16 %v2024, %v2022
  %v2269 = vpack.c.b16 %v2025, %v2023
  %v2270 = vpack.c.b16 %v2028, %v2026
  %v2271 = vpack.c.b16 %v2029, %v2027
  %v2272 = vpack.c.b16 %v2032, %v2030
  %v2273 = vpack.c.b16 %v2033, %v2031
  %v2274 = vpack.c.b16 %v2036, %v2034
  %v2275 = vpack.c.b16 %v2037, %v2035
  %v2276 = vpack.c.b16 %v2040, %v2038
  %v2277 = vpack.c.b16 %v2041, %v2039
  %v2278 = vpack.c.b16 %v2044, %v2042
  %v2279 = vpack.c.b16 %v2045, %v2043
  %v2280 = vpack.c.b16 %v2048, %v2046
  %v2281 = vpack.c.b16 %v2049, %v2047
  %v2282 = vpack.c.b16 %v2052, %v2050
  %v2283 = vpack.c.b16 %v2053, %v2051
  %v2284 = vpack.c.b16 %v2056, %v2054
  %v2285 = vpack.c.b16 %v2057, %v2055
  %v2286 = vpack.c.b16 %v2060, %v2058
  %v2287 = vpack.c.b16 %v2061, %v2059
  %v2288 = vpack.c.b16 %v2064, %v2062
  %v2289 = vpack.c.b16 %v2065, %v2063
  %v2290 = vpack.c.b16 %v2068, %v2066
  %v2291 = vpack.c.b16 %v2069, %v2067
  %v2292 = vpack.c.b16 %v2072, %v2070
  %v2293 = vpack.c.b16 %v2073, %v2071
  %v2294 = vpack.c.b16 %v2076, %v2074
  %v2295 = vpack.c.b16 %v2077, %v2075
  %v2296 = vpack.c.b16 %v2080, %v2078
  %v2297 = vpack.c.b16 %v2081, %v2079
  %v2298 = vpack.c.b16 %v2084, %v2082
  %v2299 = vpack.c.b16 %v2085, %v2083
  %v2300 = vpack.c.b16 %v2088, %v2086
  %v2301 = vpack.c.b16 %v2089, %v2087
  %v2302 = vpack.c.b16 %v2092, %v2090
  %v2303 = vpack.c.b16 %v2093, %v2091
  %v2304 = vpack.c.b16 %v2096, %v2094
  %v2305 = vpack.c.b16 %v2097, %v2095
  %v2306 = vpack.c.b16 %v2100, %v2098
  %v2307 = vpack.c.b16 %v2101, %v2099
  %v2308 = vpack.c.b16 %v2104, %v2102
  %v2309 = vpack.c.b16 %v2105, %v2103
  %v2310 = vpack.c.b16 %v2108, %v2106
  %v2311 = vpack.c.b16 %v2109, %v2107
  %v2312 = vpack.c.b16 %v2112, %v2110
  %v2313 = vpack.c.b16 %v2113, %v2111
  %v2314 = vpack.c.b16 %v2116, %v2114
  %v2315 = vpack.c.b16 %v2117, %v2115
  %v2316 = vpack.c.b16 %v2120, %v2118
  %v2317 = vpack.c.b16 %v2121, %v2119
  %v2318 = vpack.c.b16 %v2124, %v2122
  %v2319 = vpack.c.b16 %v2125, %v2123
  %v2320 = vpack.c.b16 %v2128, %v2126
  %v2321 = vpack.c.b16 %v2129, %v2127
  %v2322 = vpack.c.b16 %v2132, %v2130
  %v2323 = vpack.c.b16 %v2133, %v2131
  %v2324 = vpack.c.b16 %v2136, %v2134
  %v2325 = vpack.c.b16 %v2137, %v2135
  %v2326 = vpack.c.b16 %v2140, %v2138
  %v2327 = vpack.c.b16 %v2141, %v2139
  %v2328 = vpack.c.b16 %v2144, %v2142
  %v2329 = vpack.c.b16 %v2145, %v2143
  %v2330 = vpack.c.b16 %v2148, %v2146
  %v2331 = vpack.c.b16 %v2149, %v2147
  %v2332 = vpack.c.b16 %v2152, %v2150
  %v2333 = vpack.c.b16 %v2153, %v2151
  %v2334 = vpack.c.b16 %v2156, %v2154
  %v2335 = vpack.c.b16 %v2157, %v2155
  %v2336 = vpack.c.b16 %v2160, %v2158
  %v2337 = vpack.c.b16 %v2161, %v2159
  %v2338 = vpack.c.b16 %v2164, %v2162
  %v2339 = vpack.c.b16 %v2165, %v2163
  %v2340 = vpack.c.b16 %v2168, %v2166
  %v2341 = vpack.c.b16 %v2169, %v2167
  %v2342 = vpack.c.b16 %v2172, %v2170
  %v2343 = vpack.c.b16 %v2173, %v2171
  %v2344 = vpack.c.b16 %v2176, %v2174
  %v2345 = vpack.c.b16 %v2177, %v2175
  %v2346 = vpack.c.b16 %v2180, %v2178
  %v2347 = vpack.c.b16 %v2181, %v2179
  %v2348 = vpack.c.b16 %v2184, %v2182
  %v2349 = vpack.c.b16 %v2185, %v2183
  %v2350 = vpack.c.b16 %v2188, %v2186
  %v2351 = vpack.c.b16 %v2189, %v2187
  %v2352 = vpack.c.b16 %v2192, %v2190
  %v2353 = vpack.c.b16 %v2193, %v2191
  %2514 = vmatpush.bf16.msra.mxu0 %v2208
  %2515 = vmatpush.bf16.msra.mxu0 %v2206
  %2516 = vmatpush.bf16.msra.mxu0 %v2204
  %2517 = vmatpush.bf16.msra.mxu0 %v2202
  %2518 = vmatpush.bf16.msra.mxu0 %v2200
  %2519 = vmatpush.bf16.msra.mxu0 %v2198
  %2520 = vmatpush.bf16.msra.mxu0 %v2196
  %2521 = vmatpush.bf16.msra.mxu0 %v2194
  %2522 = vmatmul.bf16.gmra.mxu0 %v1658
  %v2523 = vpop.f32.mrf.mxu0
  %v2524 = vadd.f32 %v1710, %v2523
  %v2525 = vpop.f32.mrf.mxu0
  %v2526 = vadd.f32 %v1710, %v2525
  %2527 = vmatmul.bf16.gmra.mxu0 %v1668
  %v2528 = vpop.f32.mrf.mxu0
  %v2529 = vadd.f32 %v1710, %v2528
  %v2530 = vpop.f32.mrf.mxu0
  %v2531 = vadd.f32 %v1710, %v2530
  %2532 = vmatmul.bf16.gmra.mxu0 %v1678
  %v2533 = vpop.f32.mrf.mxu0
  %v2534 = vadd.f32 %v1710, %v2533
  %v2535 = vpop.f32.mrf.mxu0
  %v2536 = vadd.f32 %v1710, %v2535
  %2537 = vmatmul.bf16.gmra.mxu0 %v1688
  %v2538 = vpop.f32.mrf.mxu0
  %v2539 = vadd.f32 %v1710, %v2538
  %v2540 = vpop.f32.mrf.mxu0
  %v2541 = vadd.f32 %v1710, %v2540
  %2542 = vmatmul.bf16.gmra.mxu0 %v1698
  %v2543 = vpop.f32.mrf.mxu0
  %v2544 = vadd.f32 %v1710, %v2543
  %v2545 = vpop.f32.mrf.mxu0
  %v2546 = vadd.f32 %v1710, %v2545
  %2547 = vdwg.mxu0
  %2548 = vmatpush.bf16.msra.mxu0 %v2224
  %2549 = vmatpush.bf16.msra.mxu0 %v2222
  %2550 = vmatpush.bf16.msra.mxu0 %v2220
  %2551 = vmatpush.bf16.msra.mxu0 %v2218
  %2552 = vmatpush.bf16.msra.mxu0 %v2216
  %2553 = vmatpush.bf16.msra.mxu0 %v2214
  %2554 = vmatpush.bf16.msra.mxu0 %v2212
  %2555 = vmatpush.bf16.msra.mxu0 %v2210
  %2556 = vmatmul.bf16.gmra.mxu0 %v1659
  %v2557 = vpop.f32.mrf.mxu0
  %v2558 = vadd.f32 %v2524, %v2557
  %v2559 = vpop.f32.mrf.mxu0
  %v2560 = vadd.f32 %v2526, %v2559
  %2561 = vmatmul.bf16.gmra.mxu0 %v1669
  %v2562 = vpop.f32.mrf.mxu0
  %v2563 = vadd.f32 %v2529, %v2562
  %v2564 = vpop.f32.mrf.mxu0
  %v2565 = vadd.f32 %v2531, %v2564
  %2566 = vmatmul.bf16.gmra.mxu0 %v1679
  %v2567 = vpop.f32.mrf.mxu0
  %v2568 = vadd.f32 %v2534, %v2567
  %v2569 = vpop.f32.mrf.mxu0
  %v2570 = vadd.f32 %v2536, %v2569
  %2571 = vmatmul.bf16.gmra.mxu0 %v1689
  %v2572 = vpop.f32.mrf.mxu0
  %v2573 = vadd.f32 %v2539, %v2572
  %v2574 = vpop.f32.mrf.mxu0
  %v2575 = vadd.f32 %v2541, %v2574
  %2576 = vmatmul.bf16.gmra.mxu0 %v1699
  %v2577 = vpop.f32.mrf.mxu0
  %v2578 = vadd.f32 %v2544, %v2577
  %v2579 = vpop.f32.mrf.mxu0
  %v2580 = vadd.f32 %v2546, %v2579
  %2581 = vdwg.mxu0
  %2582 = vmatpush.bf16.msra.mxu0 %v2240
  %2583 = vmatpush.bf16.msra.mxu0 %v2238
  %2584 = vmatpush.bf16.msra.mxu0 %v2236
  %2585 = vmatpush.bf16.msra.mxu0 %v2234
  %2586 = vmatpush.bf16.msra.mxu0 %v2232
  %2587 = vmatpush.bf16.msra.mxu0 %v2230
  %2588 = vmatpush.bf16.msra.mxu0 %v2228
  %2589 = vmatpush.bf16.msra.mxu0 %v2226
  %2590 = vmatmul.bf16.gmra.mxu0 %v1660
  %v2591 = vpop.f32.mrf.mxu0
  %v2592 = vadd.f32 %v2558, %v2591
  %v2593 = vpop.f32.mrf.mxu0
  %v2594 = vadd.f32 %v2560, %v2593
  %2595 = vmatmul.bf16.gmra.mxu0 %v1670
  %v2596 = vpop.f32.mrf.mxu0
  %v2597 = vadd.f32 %v2563, %v2596
  %v2598 = vpop.f32.mrf.mxu0
  %v2599 = vadd.f32 %v2565, %v2598
  %2600 = vmatmul.bf16.gmra.mxu0 %v1680
  %v2601 = vpop.f32.mrf.mxu0
  %v2602 = vadd.f32 %v2568, %v2601
  %v2603 = vpop.f32.mrf.mxu0
  %v2604 = vadd.f32 %v2570, %v2603
  %2605 = vmatmul.bf16.gmra.mxu0 %v1690
  %v2606 = vpop.f32.mrf.mxu0
  %v2607 = vadd.f32 %v2573, %v2606
  %v2608 = vpop.f32.mrf.mxu0
  %v2609 = vadd.f32 %v2575, %v2608
  %2610 = vmatmul.bf16.gmra.mxu0 %v1700
  %v2611 = vpop.f32.mrf.mxu0
  %v2612 = vadd.f32 %v2578, %v2611
  %v2613 = vpop.f32.mrf.mxu0
  %v2614 = vadd.f32 %v2580, %v2613
  %2615 = vdwg.mxu0
  %2616 = vmatpush.bf16.msra.mxu0 %v2256
  %2617 = vmatpush.bf16.msra.mxu0 %v2254
  %2618 = vmatpush.bf16.msra.mxu0 %v2252
  %2619 = vmatpush.bf16.msra.mxu0 %v2250
  %2620 = vmatpush.bf16.msra.mxu0 %v2248
  %2621 = vmatpush.bf16.msra.mxu0 %v2246
  %2622 = vmatpush.bf16.msra.mxu0 %v2244
  %2623 = vmatpush.bf16.msra.mxu0 %v2242
  %2624 = vmatmul.bf16.gmra.mxu0 %v1661
  %v2625 = vpop.f32.mrf.mxu0
  %v2626 = vadd.f32 %v2592, %v2625
  %v2627 = vpop.f32.mrf.mxu0
  %v2628 = vadd.f32 %v2594, %v2627
  %2629 = vmatmul.bf16.gmra.mxu0 %v1671
  %v2630 = vpop.f32.mrf.mxu0
  %v2631 = vadd.f32 %v2597, %v2630
  %v2632 = vpop.f32.mrf.mxu0
  %v2633 = vadd.f32 %v2599, %v2632
  %2634 = vmatmul.bf16.gmra.mxu0 %v1681
  %v2635 = vpop.f32.mrf.mxu0
  %v2636 = vadd.f32 %v2602, %v2635
  %v2637 = vpop.f32.mrf.mxu0
  %v2638 = vadd.f32 %v2604, %v2637
  %2639 = vmatmul.bf16.gmra.mxu0 %v1691
  %v2640 = vpop.f32.mrf.mxu0
  %v2641 = vadd.f32 %v2607, %v2640
  %v2642 = vpop.f32.mrf.mxu0
  %v2643 = vadd.f32 %v2609, %v2642
  %2644 = vmatmul.bf16.gmra.mxu0 %v1701
  %v2645 = vpop.f32.mrf.mxu0
  %v2646 = vadd.f32 %v2612, %v2645
  %v2647 = vpop.f32.mrf.mxu0
  %v2648 = vadd.f32 %v2614, %v2647
  %2649 = vdwg.mxu0
  %2650 = vmatpush.bf16.msra.mxu0 %v2272
  %2651 = vmatpush.bf16.msra.mxu0 %v2270
  %2652 = vmatpush.bf16.msra.mxu0 %v2268
  %2653 = vmatpush.bf16.msra.mxu0 %v2266
  %2654 = vmatpush.bf16.msra.mxu0 %v2264
  %2655 = vmatpush.bf16.msra.mxu0 %v2262
  %2656 = vmatpush.bf16.msra.mxu0 %v2260
  %2657 = vmatpush.bf16.msra.mxu0 %v2258
  %2658 = vmatmul.bf16.gmra.mxu0 %v1662
  %v2659 = vpop.f32.mrf.mxu0
  %v2660 = vadd.f32 %v2626, %v2659
  %v2661 = vpop.f32.mrf.mxu0
  %v2662 = vadd.f32 %v2628, %v2661
  %2663 = vmatmul.bf16.gmra.mxu0 %v1672
  %v2664 = vpop.f32.mrf.mxu0
  %v2665 = vadd.f32 %v2631, %v2664
  %v2666 = vpop.f32.mrf.mxu0
  %v2667 = vadd.f32 %v2633, %v2666
  %2668 = vmatmul.bf16.gmra.mxu0 %v1682
  %v2669 = vpop.f32.mrf.mxu0
  %v2670 = vadd.f32 %v2636, %v2669
  %v2671 = vpop.f32.mrf.mxu0
  %v2672 = vadd.f32 %v2638, %v2671
  %2673 = vmatmul.bf16.gmra.mxu0 %v1692
  %v2674 = vpop.f32.mrf.mxu0
  %v2675 = vadd.f32 %v2641, %v2674
  %v2676 = vpop.f32.mrf.mxu0
  %v2677 = vadd.f32 %v2643, %v2676
  %2678 = vmatmul.bf16.gmra.mxu0 %v1702
  %v2679 = vpop.f32.mrf.mxu0
  %v2680 = vadd.f32 %v2646, %v2679
  %v2681 = vpop.f32.mrf.mxu0
  %v2682 = vadd.f32 %v2648, %v2681
  %2683 = vdwg.mxu0
  %2684 = vmatpush.bf16.msra.mxu0 %v2288
  %2685 = vmatpush.bf16.msra.mxu0 %v2286
  %2686 = vmatpush.bf16.msra.mxu0 %v2284
  %2687 = vmatpush.bf16.msra.mxu0 %v2282
  %2688 = vmatpush.bf16.msra.mxu0 %v2280
  %2689 = vmatpush.bf16.msra.mxu0 %v2278
  %2690 = vmatpush.bf16.msra.mxu0 %v2276
  %2691 = vmatpush.bf16.msra.mxu0 %v2274
  %2692 = vmatmul.bf16.gmra.mxu0 %v1663
  %v2693 = vpop.f32.mrf.mxu0
  %v2694 = vadd.f32 %v2660, %v2693
  %v2695 = vpop.f32.mrf.mxu0
  %v2696 = vadd.f32 %v2662, %v2695
  %2697 = vmatmul.bf16.gmra.mxu0 %v1673
  %v2698 = vpop.f32.mrf.mxu0
  %v2699 = vadd.f32 %v2665, %v2698
  %v2700 = vpop.f32.mrf.mxu0
  %v2701 = vadd.f32 %v2667, %v2700
  %2702 = vmatmul.bf16.gmra.mxu0 %v1683
  %v2703 = vpop.f32.mrf.mxu0
  %v2704 = vadd.f32 %v2670, %v2703
  %v2705 = vpop.f32.mrf.mxu0
  %v2706 = vadd.f32 %v2672, %v2705
  %2707 = vmatmul.bf16.gmra.mxu0 %v1693
  %v2708 = vpop.f32.mrf.mxu0
  %v2709 = vadd.f32 %v2675, %v2708
  %v2710 = vpop.f32.mrf.mxu0
  %v2711 = vadd.f32 %v2677, %v2710
  %2712 = vmatmul.bf16.gmra.mxu0 %v1703
  %v2713 = vpop.f32.mrf.mxu0
  %v2714 = vadd.f32 %v2680, %v2713
  %v2715 = vpop.f32.mrf.mxu0
  %v2716 = vadd.f32 %v2682, %v2715
  %2717 = vdwg.mxu0
  %2718 = vmatpush.bf16.msra.mxu0 %v2304
  %2719 = vmatpush.bf16.msra.mxu0 %v2302
  %2720 = vmatpush.bf16.msra.mxu0 %v2300
  %2721 = vmatpush.bf16.msra.mxu0 %v2298
  %2722 = vmatpush.bf16.msra.mxu0 %v2296
  %2723 = vmatpush.bf16.msra.mxu0 %v2294
  %2724 = vmatpush.bf16.msra.mxu0 %v2292
  %2725 = vmatpush.bf16.msra.mxu0 %v2290
  %2726 = vmatmul.bf16.gmra.mxu0 %v1664
  %v2727 = vpop.f32.mrf.mxu0
  %v2728 = vadd.f32 %v2694, %v2727
  %v2729 = vpop.f32.mrf.mxu0
  %v2730 = vadd.f32 %v2696, %v2729
  %2731 = vmatmul.bf16.gmra.mxu0 %v1674
  %v2732 = vpop.f32.mrf.mxu0
  %v2733 = vadd.f32 %v2699, %v2732
  %v2734 = vpop.f32.mrf.mxu0
  %v2735 = vadd.f32 %v2701, %v2734
  %2736 = vmatmul.bf16.gmra.mxu0 %v1684
  %v2737 = vpop.f32.mrf.mxu0
  %v2738 = vadd.f32 %v2704, %v2737
  %v2739 = vpop.f32.mrf.mxu0
  %v2740 = vadd.f32 %v2706, %v2739
  %2741 = vmatmul.bf16.gmra.mxu0 %v1694
  %v2742 = vpop.f32.mrf.mxu0
  %v2743 = vadd.f32 %v2709, %v2742
  %v2744 = vpop.f32.mrf.mxu0
  %v2745 = vadd.f32 %v2711, %v2744
  %2746 = vmatmul.bf16.gmra.mxu0 %v1704
  %v2747 = vpop.f32.mrf.mxu0
  %v2748 = vadd.f32 %v2714, %v2747
  %v2749 = vpop.f32.mrf.mxu0
  %v2750 = vadd.f32 %v2716, %v2749
  %2751 = vdwg.mxu0
  %2752 = vmatpush.bf16.msra.mxu0 %v2320
  %2753 = vmatpush.bf16.msra.mxu0 %v2318
  %2754 = vmatpush.bf16.msra.mxu0 %v2316
  %2755 = vmatpush.bf16.msra.mxu0 %v2314
  %2756 = vmatpush.bf16.msra.mxu0 %v2312
  %2757 = vmatpush.bf16.msra.mxu0 %v2310
  %2758 = vmatpush.bf16.msra.mxu0 %v2308
  %2759 = vmatpush.bf16.msra.mxu0 %v2306
  %2760 = vmatmul.bf16.gmra.mxu0 %v1665
  %v2761 = vpop.f32.mrf.mxu0
  %v2762 = vadd.f32 %v2728, %v2761
  %v2763 = vpop.f32.mrf.mxu0
  %v2764 = vadd.f32 %v2730, %v2763
  %2765 = vmatmul.bf16.gmra.mxu0 %v1675
  %v2766 = vpop.f32.mrf.mxu0
  %v2767 = vadd.f32 %v2733, %v2766
  %v2768 = vpop.f32.mrf.mxu0
  %v2769 = vadd.f32 %v2735, %v2768
  %2770 = vmatmul.bf16.gmra.mxu0 %v1685
  %v2771 = vpop.f32.mrf.mxu0
  %v2772 = vadd.f32 %v2738, %v2771
  %v2773 = vpop.f32.mrf.mxu0
  %v2774 = vadd.f32 %v2740, %v2773
  %2775 = vmatmul.bf16.gmra.mxu0 %v1695
  %v2776 = vpop.f32.mrf.mxu0
  %v2777 = vadd.f32 %v2743, %v2776
  %v2778 = vpop.f32.mrf.mxu0
  %v2779 = vadd.f32 %v2745, %v2778
  %2780 = vmatmul.bf16.gmra.mxu0 %v1705
  %v2781 = vpop.f32.mrf.mxu0
  %v2782 = vadd.f32 %v2748, %v2781
  %v2783 = vpop.f32.mrf.mxu0
  %v2784 = vadd.f32 %v2750, %v2783
  %2785 = vdwg.mxu0
  %2786 = vmatpush.bf16.msra.mxu0 %v2336
  %2787 = vmatpush.bf16.msra.mxu0 %v2334
  %2788 = vmatpush.bf16.msra.mxu0 %v2332
  %2789 = vmatpush.bf16.msra.mxu0 %v2330
  %2790 = vmatpush.bf16.msra.mxu0 %v2328
  %2791 = vmatpush.bf16.msra.mxu0 %v2326
  %2792 = vmatpush.bf16.msra.mxu0 %v2324
  %2793 = vmatpush.bf16.msra.mxu0 %v2322
  %2794 = vmatmul.bf16.gmra.mxu0 %v1666
  %v2795 = vpop.f32.mrf.mxu0
  %v2796 = vadd.f32 %v2762, %v2795
  %v2797 = vpop.f32.mrf.mxu0
  %v2798 = vadd.f32 %v2764, %v2797
  %2799 = vmatmul.bf16.gmra.mxu0 %v1676
  %v2800 = vpop.f32.mrf.mxu0
  %v2801 = vadd.f32 %v2767, %v2800
  %v2802 = vpop.f32.mrf.mxu0
  %v2803 = vadd.f32 %v2769, %v2802
  %2804 = vmatmul.bf16.gmra.mxu0 %v1686
  %v2805 = vpop.f32.mrf.mxu0
  %v2806 = vadd.f32 %v2772, %v2805
  %v2807 = vpop.f32.mrf.mxu0
  %v2808 = vadd.f32 %v2774, %v2807
  %2809 = vmatmul.bf16.gmra.mxu0 %v1696
  %v2810 = vpop.f32.mrf.mxu0
  %v2811 = vadd.f32 %v2777, %v2810
  %v2812 = vpop.f32.mrf.mxu0
  %v2813 = vadd.f32 %v2779, %v2812
  %2814 = vmatmul.bf16.gmra.mxu0 %v1706
  %v2815 = vpop.f32.mrf.mxu0
  %v2816 = vadd.f32 %v2782, %v2815
  %v2817 = vpop.f32.mrf.mxu0
  %v2818 = vadd.f32 %v2784, %v2817
  %2819 = vdwg.mxu0
  %2820 = vmatpush.bf16.msra.mxu0 %v2352
  %2821 = vmatpush.bf16.msra.mxu0 %v2350
  %2822 = vmatpush.bf16.msra.mxu0 %v2348
  %2823 = vmatpush.bf16.msra.mxu0 %v2346
  %2824 = vmatpush.bf16.msra.mxu0 %v2344
  %2825 = vmatpush.bf16.msra.mxu0 %v2342
  %2826 = vmatpush.bf16.msra.mxu0 %v2340
  %2827 = vmatpush.bf16.msra.mxu0 %v2338
  %2828 = vmatmul.bf16.gmra.mxu0 %v1667
  %v2829 = vpop.f32.mrf.mxu0
  %v2830 = vadd.f32 %v2796, %v2829
  %v2831 = vpop.f32.mrf.mxu0
  %v2832 = vadd.f32 %v2798, %v2831
  %2833 = vmatmul.bf16.gmra.mxu0 %v1677
  %v2834 = vpop.f32.mrf.mxu0
  %v2835 = vadd.f32 %v2801, %v2834
  %v2836 = vpop.f32.mrf.mxu0
  %v2837 = vadd.f32 %v2803, %v2836
  %2838 = vmatmul.bf16.gmra.mxu0 %v1687
  %v2839 = vpop.f32.mrf.mxu0
  %v2840 = vadd.f32 %v2806, %v2839
  %v2841 = vpop.f32.mrf.mxu0
  %v2842 = vadd.f32 %v2808, %v2841
  %2843 = vmatmul.bf16.gmra.mxu0 %v1697
  %v2844 = vpop.f32.mrf.mxu0
  %v2845 = vadd.f32 %v2811, %v2844
  %v2846 = vpop.f32.mrf.mxu0
  %v2847 = vadd.f32 %v2813, %v2846
  %2848 = vmatmul.bf16.gmra.mxu0 %v1707
  %v2849 = vpop.f32.mrf.mxu0
  %v2850 = vadd.f32 %v2816, %v2849
  %v2851 = vpop.f32.mrf.mxu0
  %v2852 = vadd.f32 %v2818, %v2851
  %2853 = vdwg.mxu0
  %2854 = vmatpush.bf16.msra.mxu0 %v2209
  %2855 = vmatpush.bf16.msra.mxu0 %v2207
  %2856 = vmatpush.bf16.msra.mxu0 %v2205
  %2857 = vmatpush.bf16.msra.mxu0 %v2203
  %2858 = vmatpush.bf16.msra.mxu0 %v2201
  %2859 = vmatpush.bf16.msra.mxu0 %v2199
  %2860 = vmatpush.bf16.msra.mxu0 %v2197
  %2861 = vmatpush.bf16.msra.mxu0 %v2195
  %2862 = vmatmul.bf16.gmra.mxu0 %v1658
  %v2863 = vpop.f32.mrf.mxu0
  %v2864 = vadd.f32 %v1711, %v2863
  %v2865 = vpop.f32.mrf.mxu0
  %v2866 = vadd.f32 %v1711, %v2865
  %2867 = vmatmul.bf16.gmra.mxu0 %v1668
  %v2868 = vpop.f32.mrf.mxu0
  %v2869 = vadd.f32 %v1711, %v2868
  %v2870 = vpop.f32.mrf.mxu0
  %v2871 = vadd.f32 %v1711, %v2870
  %2872 = vmatmul.bf16.gmra.mxu0 %v1678
  %v2873 = vpop.f32.mrf.mxu0
  %v2874 = vadd.f32 %v1711, %v2873
  %v2875 = vpop.f32.mrf.mxu0
  %v2876 = vadd.f32 %v1711, %v2875
  %2877 = vmatmul.bf16.gmra.mxu0 %v1688
  %v2878 = vpop.f32.mrf.mxu0
  %v2879 = vadd.f32 %v1711, %v2878
  %v2880 = vpop.f32.mrf.mxu0
  %v2881 = vadd.f32 %v1711, %v2880
  %2882 = vmatmul.bf16.gmra.mxu0 %v1698
  %v2883 = vpop.f32.mrf.mxu0
  %v2884 = vadd.f32 %v1711, %v2883
  %v2885 = vpop.f32.mrf.mxu0
  %v2886 = vadd.f32 %v1711, %v2885
  %2887 = vdwg.mxu0
  %2888 = vmatpush.bf16.msra.mxu0 %v2225
  %2889 = vmatpush.bf16.msra.mxu0 %v2223
  %2890 = vmatpush.bf16.msra.mxu0 %v2221
  %2891 = vmatpush.bf16.msra.mxu0 %v2219
  %2892 = vmatpush.bf16.msra.mxu0 %v2217
  %2893 = vmatpush.bf16.msra.mxu0 %v2215
  %2894 = vmatpush.bf16.msra.mxu0 %v2213
  %2895 = vmatpush.bf16.msra.mxu0 %v2211
  %2896 = vmatmul.bf16.gmra.mxu0 %v1659
  %v2897 = vpop.f32.mrf.mxu0
  %v2898 = vadd.f32 %v2864, %v2897
  %v2899 = vpop.f32.mrf.mxu0
  %v2900 = vadd.f32 %v2866, %v2899
  %2901 = vmatmul.bf16.gmra.mxu0 %v1669
  %v2902 = vpop.f32.mrf.mxu0
  %v2903 = vadd.f32 %v2869, %v2902
  %v2904 = vpop.f32.mrf.mxu0
  %v2905 = vadd.f32 %v2871, %v2904
  %2906 = vmatmul.bf16.gmra.mxu0 %v1679
  %v2907 = vpop.f32.mrf.mxu0
  %v2908 = vadd.f32 %v2874, %v2907
  %v2909 = vpop.f32.mrf.mxu0
  %v2910 = vadd.f32 %v2876, %v2909
  %2911 = vmatmul.bf16.gmra.mxu0 %v1689
  %v2912 = vpop.f32.mrf.mxu0
  %v2913 = vadd.f32 %v2879, %v2912
  %v2914 = vpop.f32.mrf.mxu0
  %v2915 = vadd.f32 %v2881, %v2914
  %2916 = vmatmul.bf16.gmra.mxu0 %v1699
  %v2917 = vpop.f32.mrf.mxu0
  %v2918 = vadd.f32 %v2884, %v2917
  %v2919 = vpop.f32.mrf.mxu0
  %v2920 = vadd.f32 %v2886, %v2919
  %2921 = vdwg.mxu0
  %2922 = vmatpush.bf16.msra.mxu0 %v2241
  %2923 = vmatpush.bf16.msra.mxu0 %v2239
  %2924 = vmatpush.bf16.msra.mxu0 %v2237
  %2925 = vmatpush.bf16.msra.mxu0 %v2235
  %2926 = vmatpush.bf16.msra.mxu0 %v2233
  %2927 = vmatpush.bf16.msra.mxu0 %v2231
  %2928 = vmatpush.bf16.msra.mxu0 %v2229
  %2929 = vmatpush.bf16.msra.mxu0 %v2227
  %2930 = vmatmul.bf16.gmra.mxu0 %v1660
  %v2931 = vpop.f32.mrf.mxu0
  %v2932 = vadd.f32 %v2898, %v2931
  %v2933 = vpop.f32.mrf.mxu0
  %v2934 = vadd.f32 %v2900, %v2933
  %2935 = vmatmul.bf16.gmra.mxu0 %v1670
  %v2936 = vpop.f32.mrf.mxu0
  %v2937 = vadd.f32 %v2903, %v2936
  %v2938 = vpop.f32.mrf.mxu0
  %v2939 = vadd.f32 %v2905, %v2938
  %2940 = vmatmul.bf16.gmra.mxu0 %v1680
  %v2941 = vpop.f32.mrf.mxu0
  %v2942 = vadd.f32 %v2908, %v2941
  %v2943 = vpop.f32.mrf.mxu0
  %v2944 = vadd.f32 %v2910, %v2943
  %2945 = vmatmul.bf16.gmra.mxu0 %v1690
  %v2946 = vpop.f32.mrf.mxu0
  %v2947 = vadd.f32 %v2913, %v2946
  %v2948 = vpop.f32.mrf.mxu0
  %v2949 = vadd.f32 %v2915, %v2948
  %2950 = vmatmul.bf16.gmra.mxu0 %v1700
  %v2951 = vpop.f32.mrf.mxu0
  %v2952 = vadd.f32 %v2918, %v2951
  %v2953 = vpop.f32.mrf.mxu0
  %v2954 = vadd.f32 %v2920, %v2953
  %2955 = vdwg.mxu0
  %2956 = vmatpush.bf16.msra.mxu0 %v2257
  %2957 = vmatpush.bf16.msra.mxu0 %v2255
  %2958 = vmatpush.bf16.msra.mxu0 %v2253
  %2959 = vmatpush.bf16.msra.mxu0 %v2251
  %2960 = vmatpush.bf16.msra.mxu0 %v2249
  %2961 = vmatpush.bf16.msra.mxu0 %v2247
  %2962 = vmatpush.bf16.msra.mxu0 %v2245
  %2963 = vmatpush.bf16.msra.mxu0 %v2243
  %2964 = vmatmul.bf16.gmra.mxu0 %v1661
  %v2965 = vpop.f32.mrf.mxu0
  %v2966 = vadd.f32 %v2932, %v2965
  %v2967 = vpop.f32.mrf.mxu0
  %v2968 = vadd.f32 %v2934, %v2967
  %2969 = vmatmul.bf16.gmra.mxu0 %v1671
  %v2970 = vpop.f32.mrf.mxu0
  %v2971 = vadd.f32 %v2937, %v2970
  %v2972 = vpop.f32.mrf.mxu0
  %v2973 = vadd.f32 %v2939, %v2972
  %2974 = vmatmul.bf16.gmra.mxu0 %v1681
  %v2975 = vpop.f32.mrf.mxu0
  %v2976 = vadd.f32 %v2942, %v2975
  %v2977 = vpop.f32.mrf.mxu0
  %v2978 = vadd.f32 %v2944, %v2977
  %2979 = vmatmul.bf16.gmra.mxu0 %v1691
  %v2980 = vpop.f32.mrf.mxu0
  %v2981 = vadd.f32 %v2947, %v2980
  %v2982 = vpop.f32.mrf.mxu0
  %v2983 = vadd.f32 %v2949, %v2982
  %2984 = vmatmul.bf16.gmra.mxu0 %v1701
  %v2985 = vpop.f32.mrf.mxu0
  %v2986 = vadd.f32 %v2952, %v2985
  %v2987 = vpop.f32.mrf.mxu0
  %v2988 = vadd.f32 %v2954, %v2987
  %2989 = vdwg.mxu0
  %2990 = vmatpush.bf16.msra.mxu0 %v2273
  %2991 = vmatpush.bf16.msra.mxu0 %v2271
  %2992 = vmatpush.bf16.msra.mxu0 %v2269
  %2993 = vmatpush.bf16.msra.mxu0 %v2267
  %2994 = vmatpush.bf16.msra.mxu0 %v2265
  %2995 = vmatpush.bf16.msra.mxu0 %v2263
  %2996 = vmatpush.bf16.msra.mxu0 %v2261
  %2997 = vmatpush.bf16.msra.mxu0 %v2259
  %2998 = vmatmul.bf16.gmra.mxu0 %v1662
  %v2999 = vpop.f32.mrf.mxu0
  %v3000 = vadd.f32 %v2966, %v2999
  %v3001 = vpop.f32.mrf.mxu0
  %v3002 = vadd.f32 %v2968, %v3001
  %3003 = vmatmul.bf16.gmra.mxu0 %v1672
  %v3004 = vpop.f32.mrf.mxu0
  %v3005 = vadd.f32 %v2971, %v3004
  %v3006 = vpop.f32.mrf.mxu0
  %v3007 = vadd.f32 %v2973, %v3006
  %3008 = vmatmul.bf16.gmra.mxu0 %v1682
  %v3009 = vpop.f32.mrf.mxu0
  %v3010 = vadd.f32 %v2976, %v3009
  %v3011 = vpop.f32.mrf.mxu0
  %v3012 = vadd.f32 %v2978, %v3011
  %3013 = vmatmul.bf16.gmra.mxu0 %v1692
  %v3014 = vpop.f32.mrf.mxu0
  %v3015 = vadd.f32 %v2981, %v3014
  %v3016 = vpop.f32.mrf.mxu0
  %v3017 = vadd.f32 %v2983, %v3016
  %3018 = vmatmul.bf16.gmra.mxu0 %v1702
  %v3019 = vpop.f32.mrf.mxu0
  %v3020 = vadd.f32 %v2986, %v3019
  %v3021 = vpop.f32.mrf.mxu0
  %v3022 = vadd.f32 %v2988, %v3021
  %3023 = vdwg.mxu0
  %3024 = vmatpush.bf16.msra.mxu0 %v2289
  %3025 = vmatpush.bf16.msra.mxu0 %v2287
  %3026 = vmatpush.bf16.msra.mxu0 %v2285
  %3027 = vmatpush.bf16.msra.mxu0 %v2283
  %3028 = vmatpush.bf16.msra.mxu0 %v2281
  %3029 = vmatpush.bf16.msra.mxu0 %v2279
  %3030 = vmatpush.bf16.msra.mxu0 %v2277
  %3031 = vmatpush.bf16.msra.mxu0 %v2275
  %3032 = vmatmul.bf16.gmra.mxu0 %v1663
  %v3033 = vpop.f32.mrf.mxu0
  %v3034 = vadd.f32 %v3000, %v3033
  %v3035 = vpop.f32.mrf.mxu0
  %v3036 = vadd.f32 %v3002, %v3035
  %3037 = vmatmul.bf16.gmra.mxu0 %v1673
  %v3038 = vpop.f32.mrf.mxu0
  %v3039 = vadd.f32 %v3005, %v3038
  %v3040 = vpop.f32.mrf.mxu0
  %v3041 = vadd.f32 %v3007, %v3040
  %3042 = vmatmul.bf16.gmra.mxu0 %v1683
  %v3043 = vpop.f32.mrf.mxu0
  %v3044 = vadd.f32 %v3010, %v3043
  %v3045 = vpop.f32.mrf.mxu0
  %v3046 = vadd.f32 %v3012, %v3045
  %3047 = vmatmul.bf16.gmra.mxu0 %v1693
  %v3048 = vpop.f32.mrf.mxu0
  %v3049 = vadd.f32 %v3015, %v3048
  %v3050 = vpop.f32.mrf.mxu0
  %v3051 = vadd.f32 %v3017, %v3050
  %3052 = vmatmul.bf16.gmra.mxu0 %v1703
  %v3053 = vpop.f32.mrf.mxu0
  %v3054 = vadd.f32 %v3020, %v3053
  %v3055 = vpop.f32.mrf.mxu0
  %v3056 = vadd.f32 %v3022, %v3055
  %3057 = vdwg.mxu0
  %3058 = vmatpush.bf16.msra.mxu0 %v2305
  %3059 = vmatpush.bf16.msra.mxu0 %v2303
  %3060 = vmatpush.bf16.msra.mxu0 %v2301
  %3061 = vmatpush.bf16.msra.mxu0 %v2299
  %3062 = vmatpush.bf16.msra.mxu0 %v2297
  %3063 = vmatpush.bf16.msra.mxu0 %v2295
  %3064 = vmatpush.bf16.msra.mxu0 %v2293
  %3065 = vmatpush.bf16.msra.mxu0 %v2291
  %3066 = vmatmul.bf16.gmra.mxu0 %v1664
  %v3067 = vpop.f32.mrf.mxu0
  %v3068 = vadd.f32 %v3034, %v3067
  %v3069 = vpop.f32.mrf.mxu0
  %v3070 = vadd.f32 %v3036, %v3069
  %3071 = vmatmul.bf16.gmra.mxu0 %v1674
  %v3072 = vpop.f32.mrf.mxu0
  %v3073 = vadd.f32 %v3039, %v3072
  %v3074 = vpop.f32.mrf.mxu0
  %v3075 = vadd.f32 %v3041, %v3074
  %3076 = vmatmul.bf16.gmra.mxu0 %v1684
  %v3077 = vpop.f32.mrf.mxu0
  %v3078 = vadd.f32 %v3044, %v3077
  %v3079 = vpop.f32.mrf.mxu0
  %v3080 = vadd.f32 %v3046, %v3079
  %3081 = vmatmul.bf16.gmra.mxu0 %v1694
  %v3082 = vpop.f32.mrf.mxu0
  %v3083 = vadd.f32 %v3049, %v3082
  %v3084 = vpop.f32.mrf.mxu0
  %v3085 = vadd.f32 %v3051, %v3084
  %3086 = vmatmul.bf16.gmra.mxu0 %v1704
  %v3087 = vpop.f32.mrf.mxu0
  %v3088 = vadd.f32 %v3054, %v3087
  %v3089 = vpop.f32.mrf.mxu0
  %v3090 = vadd.f32 %v3056, %v3089
  %3091 = vdwg.mxu0
  %3092 = vmatpush.bf16.msra.mxu0 %v2321
  %3093 = vmatpush.bf16.msra.mxu0 %v2319
  %3094 = vmatpush.bf16.msra.mxu0 %v2317
  %3095 = vmatpush.bf16.msra.mxu0 %v2315
  %3096 = vmatpush.bf16.msra.mxu0 %v2313
  %3097 = vmatpush.bf16.msra.mxu0 %v2311
  %3098 = vmatpush.bf16.msra.mxu0 %v2309
  %3099 = vmatpush.bf16.msra.mxu0 %v2307
  %3100 = vmatmul.bf16.gmra.mxu0 %v1665
  %v3101 = vpop.f32.mrf.mxu0
  %v3102 = vadd.f32 %v3068, %v3101
  %v3103 = vpop.f32.mrf.mxu0
  %v3104 = vadd.f32 %v3070, %v3103
  %3105 = vmatmul.bf16.gmra.mxu0 %v1675
  %v3106 = vpop.f32.mrf.mxu0
  %v3107 = vadd.f32 %v3073, %v3106
  %v3108 = vpop.f32.mrf.mxu0
  %v3109 = vadd.f32 %v3075, %v3108
  %3110 = vmatmul.bf16.gmra.mxu0 %v1685
  %v3111 = vpop.f32.mrf.mxu0
  %v3112 = vadd.f32 %v3078, %v3111
  %v3113 = vpop.f32.mrf.mxu0
  %v3114 = vadd.f32 %v3080, %v3113
  %3115 = vmatmul.bf16.gmra.mxu0 %v1695
  %v3116 = vpop.f32.mrf.mxu0
  %v3117 = vadd.f32 %v3083, %v3116
  %v3118 = vpop.f32.mrf.mxu0
  %v3119 = vadd.f32 %v3085, %v3118
  %3120 = vmatmul.bf16.gmra.mxu0 %v1705
  %v3121 = vpop.f32.mrf.mxu0
  %v3122 = vadd.f32 %v3088, %v3121
  %v3123 = vpop.f32.mrf.mxu0
  %v3124 = vadd.f32 %v3090, %v3123
  %3125 = vdwg.mxu0
  %3126 = vmatpush.bf16.msra.mxu0 %v2337
  %3127 = vmatpush.bf16.msra.mxu0 %v2335
  %3128 = vmatpush.bf16.msra.mxu0 %v2333
  %3129 = vmatpush.bf16.msra.mxu0 %v2331
  %3130 = vmatpush.bf16.msra.mxu0 %v2329
  %3131 = vmatpush.bf16.msra.mxu0 %v2327
  %3132 = vmatpush.bf16.msra.mxu0 %v2325
  %3133 = vmatpush.bf16.msra.mxu0 %v2323
  %3134 = vmatmul.bf16.gmra.mxu0 %v1666
  %v3135 = vpop.f32.mrf.mxu0
  %v3136 = vadd.f32 %v3102, %v3135
  %v3137 = vpop.f32.mrf.mxu0
  %v3138 = vadd.f32 %v3104, %v3137
  %3139 = vmatmul.bf16.gmra.mxu0 %v1676
  %v3140 = vpop.f32.mrf.mxu0
  %v3141 = vadd.f32 %v3107, %v3140
  %v3142 = vpop.f32.mrf.mxu0
  %v3143 = vadd.f32 %v3109, %v3142
  %3144 = vmatmul.bf16.gmra.mxu0 %v1686
  %v3145 = vpop.f32.mrf.mxu0
  %v3146 = vadd.f32 %v3112, %v3145
  %v3147 = vpop.f32.mrf.mxu0
  %v3148 = vadd.f32 %v3114, %v3147
  %3149 = vmatmul.bf16.gmra.mxu0 %v1696
  %v3150 = vpop.f32.mrf.mxu0
  %v3151 = vadd.f32 %v3117, %v3150
  %v3152 = vpop.f32.mrf.mxu0
  %v3153 = vadd.f32 %v3119, %v3152
  %3154 = vmatmul.bf16.gmra.mxu0 %v1706
  %v3155 = vpop.f32.mrf.mxu0
  %v3156 = vadd.f32 %v3122, %v3155
  %v3157 = vpop.f32.mrf.mxu0
  %v3158 = vadd.f32 %v3124, %v3157
  %3159 = vdwg.mxu0
  %3160 = vmatpush.bf16.msra.mxu0 %v2353
  %3161 = vmatpush.bf16.msra.mxu0 %v2351
  %3162 = vmatpush.bf16.msra.mxu0 %v2349
  %3163 = vmatpush.bf16.msra.mxu0 %v2347
  %3164 = vmatpush.bf16.msra.mxu0 %v2345
  %3165 = vmatpush.bf16.msra.mxu0 %v2343
  %3166 = vmatpush.bf16.msra.mxu0 %v2341
  %3167 = vmatpush.bf16.msra.mxu0 %v2339
  %3168 = vmatmul.bf16.gmra.mxu0 %v1667
  %v3169 = vpop.f32.mrf.mxu0
  %v3170 = vadd.f32 %v3136, %v3169
  %v3171 = vpop.f32.mrf.mxu0
  %v3172 = vadd.f32 %v3138, %v3171
  %3173 = vmatmul.bf16.gmra.mxu0 %v1677
  %v3174 = vpop.f32.mrf.mxu0
  %v3175 = vadd.f32 %v3141, %v3174
  %v3176 = vpop.f32.mrf.mxu0
  %v3177 = vadd.f32 %v3143, %v3176
  %3178 = vmatmul.bf16.gmra.mxu0 %v1687
  %v3179 = vpop.f32.mrf.mxu0
  %v3180 = vadd.f32 %v3146, %v3179
  %v3181 = vpop.f32.mrf.mxu0
  %v3182 = vadd.f32 %v3148, %v3181
  %3183 = vmatmul.bf16.gmra.mxu0 %v1697
  %v3184 = vpop.f32.mrf.mxu0
  %v3185 = vadd.f32 %v3151, %v3184
  %v3186 = vpop.f32.mrf.mxu0
  %v3187 = vadd.f32 %v3153, %v3186
  %3188 = vmatmul.bf16.gmra.mxu0 %v1707
  %v3189 = vpop.f32.mrf.mxu0
  %v3190 = vadd.f32 %v3156, %v3189
  %v3191 = vpop.f32.mrf.mxu0
  %v3192 = vadd.f32 %v3158, %v3191
  %3193 = vdwg.mxu0
  %v3194 = vmax.f32 %v2830, 0.0
  %v3195 = vmax.f32 %v3170, 0.0
  %v3196 = vmax.f32 %v2832, 0.0
  %v3197 = vmax.f32 %v3172, 0.0
  %v3198 = vmax.f32 %v2835, 0.0
  %v3199 = vmax.f32 %v3175, 0.0
  %v3200 = vmax.f32 %v2837, 0.0
  %v3201 = vmax.f32 %v3177, 0.0
  %v3202 = vmax.f32 %v2840, 0.0
  %v3203 = vmax.f32 %v3180, 0.0
  %v3204 = vmax.f32 %v2842, 0.0
  %v3205 = vmax.f32 %v3182, 0.0
  %v3206 = vmax.f32 %v2845, 0.0
  %v3207 = vmax.f32 %v3185, 0.0
  %v3208 = vmax.f32 %v2847, 0.0
  %v3209 = vmax.f32 %v3187, 0.0
  %v3210 = vmax.f32 %v2850, 0.0
  %v3211 = vmax.f32 %v3190, 0.0
  %v3212 = vmax.f32 %v2852, 0.0
  %v3213 = vmax.f32 %v3192, 0.0
  %v3214 = vld [vmem:[%s6] sm:$0xf]
  %v3215 = vpack.c.bf16 %v3196, %v3194
  %v3216 = vpack.c.bf16 %v3197, %v3195
  %v3217 = vpack.c.bf16 %v3200, %v3198
  %v3218 = vpack.c.bf16 %v3201, %v3199
  %v3219 = vpack.c.bf16 %v3204, %v3202
  %v3220 = vpack.c.bf16 %v3205, %v3203
  %v3221 = vpack.c.bf16 %v3208, %v3206
  %v3222 = vpack.c.bf16 %v3209, %v3207
  %v3223 = vpack.c.bf16 %v3212, %v3210
  %v3224 = vpack.c.bf16 %v3213, %v3211
  %vm3225 = vcmask 654336
  %v3227 = vsel %vm3225, %v3214, 0
  %3229 = vmatpush.bf16.msra.mxu0 0
  %3230 = vmatpush.bf16.msra.mxu0 0
  %3231 = vmatpush.bf16.msra.mxu0 0
  %3232 = vmatpush.bf16.msra.mxu0 %v3223
  %3233 = vmatpush.bf16.msra.mxu0 %v3221
  %3234 = vmatpush.bf16.msra.mxu0 %v3219
  %3235 = vmatpush.bf16.msra.mxu0 %v3217
  %3236 = vmatpush.bf16.msra.mxu0 %v3215
  %3237 = vmatmul.bf16.gmra.mxu0 %v3227
  %v3238 = vpop.f32.mrf.mxu0
  %v3239 = vadd.f32 0.0, %v3238
  %v3240 = vpop.f32.mrf.mxu0
  %3241 = vdwg.mxu0
  %3242 = vmatpush.bf16.msra.mxu0 0
  %3243 = vmatpush.bf16.msra.mxu0 0
  %3244 = vmatpush.bf16.msra.mxu0 0
  %3245 = vmatpush.bf16.msra.mxu0 %v3224
  %3246 = vmatpush.bf16.msra.mxu0 %v3222
  %3247 = vmatpush.bf16.msra.mxu0 %v3220
  %3248 = vmatpush.bf16.msra.mxu0 %v3218
  %3249 = vmatpush.bf16.msra.mxu0 %v3216
  %3250 = vmatmul.bf16.gmra.mxu0 %v3227
  %v3251 = vpop.f32.mrf.mxu0
  %v3252 = vadd.f32 0.0, %v3251
  %v3253 = vpop.f32.mrf.mxu0
  %3254 = vdwg.mxu0
  %s3255 = scalar_lea.vmem %s6, 4
  %v3256 = vld [vmem:[%s3255] sm:$0xf]
  %v3258 = vsel %vm3225, %v3256, 0
  %3260 = vmatpush.bf16.msra.mxu0 0
  %3261 = vmatpush.bf16.msra.mxu0 0
  %3262 = vmatpush.bf16.msra.mxu0 0
  %3263 = vmatpush.bf16.msra.mxu0 %v3223
  %3264 = vmatpush.bf16.msra.mxu0 %v3221
  %3265 = vmatpush.bf16.msra.mxu0 %v3219
  %3266 = vmatpush.bf16.msra.mxu0 %v3217
  %3267 = vmatpush.bf16.msra.mxu0 %v3215
  %3268 = vmatmul.bf16.gmra.mxu0 %v3258
  %v3269 = vpop.f32.mrf.mxu0
  %v3270 = vadd.f32 0.0, %v3269
  %v3271 = vpop.f32.mrf.mxu0
  %3272 = vdwg.mxu0
  %3273 = vmatpush.bf16.msra.mxu0 0
  %3274 = vmatpush.bf16.msra.mxu0 0
  %3275 = vmatpush.bf16.msra.mxu0 0
  %3276 = vmatpush.bf16.msra.mxu0 %v3224
  %3277 = vmatpush.bf16.msra.mxu0 %v3222
  %3278 = vmatpush.bf16.msra.mxu0 %v3220
  %3279 = vmatpush.bf16.msra.mxu0 %v3218
  %3280 = vmatpush.bf16.msra.mxu0 %v3216
  %3281 = vmatmul.bf16.gmra.mxu0 %v3258
  %v3282 = vpop.f32.mrf.mxu0
  %v3283 = vadd.f32 0.0, %v3282
  %v3284 = vpop.f32.mrf.mxu0
  %3285 = vdwg.mxu0
  %s3286 = scalar_lea.vmem %s6, 8
  %v3287 = vld [vmem:[%s3286] sm:$0xf]
  %v3289 = vsel %vm3225, %v3287, 0
  %3291 = vmatpush.bf16.msra.mxu0 0
  %3292 = vmatpush.bf16.msra.mxu0 0
  %3293 = vmatpush.bf16.msra.mxu0 0
  %3294 = vmatpush.bf16.msra.mxu0 %v3223
  %3295 = vmatpush.bf16.msra.mxu0 %v3221
  %3296 = vmatpush.bf16.msra.mxu0 %v3219
  %3297 = vmatpush.bf16.msra.mxu0 %v3217
  %3298 = vmatpush.bf16.msra.mxu0 %v3215
  %3299 = vmatmul.bf16.gmra.mxu0 %v3289
  %v3300 = vpop.f32.mrf.mxu0
  %v3301 = vadd.f32 0.0, %v3300
  %v3302 = vpop.f32.mrf.mxu0
  %3303 = vdwg.mxu0
  %3304 = vmatpush.bf16.msra.mxu0 0
  %3305 = vmatpush.bf16.msra.mxu0 0
  %3306 = vmatpush.bf16.msra.mxu0 0
  %3307 = vmatpush.bf16.msra.mxu0 %v3224
  %3308 = vmatpush.bf16.msra.mxu0 %v3222
  %3309 = vmatpush.bf16.msra.mxu0 %v3220
  %3310 = vmatpush.bf16.msra.mxu0 %v3218
  %3311 = vmatpush.bf16.msra.mxu0 %v3216
  %3312 = vmatmul.bf16.gmra.mxu0 %v3289
  %v3313 = vpop.f32.mrf.mxu0
  %v3314 = vadd.f32 0.0, %v3313
  %v3315 = vpop.f32.mrf.mxu0
  %3316 = vdwg.mxu0
  %s3317 = scalar_lea.vmem %s6, 12
  %v3318 = vld [vmem:[%s3317] sm:$0xf]
  %v3320 = vsel %vm3225, %v3318, 0
  %3322 = vmatpush.bf16.msra.mxu0 0
  %3323 = vmatpush.bf16.msra.mxu0 0
  %3324 = vmatpush.bf16.msra.mxu0 0
  %3325 = vmatpush.bf16.msra.mxu0 %v3223
  %3326 = vmatpush.bf16.msra.mxu0 %v3221
  %3327 = vmatpush.bf16.msra.mxu0 %v3219
  %3328 = vmatpush.bf16.msra.mxu0 %v3217
  %3329 = vmatpush.bf16.msra.mxu0 %v3215
  %3330 = vmatmul.bf16.gmra.mxu0 %v3320
  %v3331 = vpop.f32.mrf.mxu0
  %v3332 = vadd.f32 0.0, %v3331
  %v3333 = vpop.f32.mrf.mxu0
  %3334 = vdwg.mxu0
  %3335 = vmatpush.bf16.msra.mxu0 0
  %3336 = vmatpush.bf16.msra.mxu0 0
  %3337 = vmatpush.bf16.msra.mxu0 0
  %3338 = vmatpush.bf16.msra.mxu0 %v3224
  %3339 = vmatpush.bf16.msra.mxu0 %v3222
  %3340 = vmatpush.bf16.msra.mxu0 %v3220
  %3341 = vmatpush.bf16.msra.mxu0 %v3218
  %3342 = vmatpush.bf16.msra.mxu0 %v3216
  %3343 = vmatmul.bf16.gmra.mxu0 %v3320
  %v3344 = vpop.f32.mrf.mxu0
  %v3345 = vadd.f32 0.0, %v3344
  %v3346 = vpop.f32.mrf.mxu0
  %3347 = vdwg.mxu0
  %s3348 = scalar_lea.vmem %s6, 16
  %v3349 = vld [vmem:[%s3348] sm:$0xf]
  %v3351 = vsel %vm3225, %v3349, 0
  %3353 = vmatpush.bf16.msra.mxu0 0
  %3354 = vmatpush.bf16.msra.mxu0 0
  %3355 = vmatpush.bf16.msra.mxu0 0
  %3356 = vmatpush.bf16.msra.mxu0 %v3223
  %3357 = vmatpush.bf16.msra.mxu0 %v3221
  %3358 = vmatpush.bf16.msra.mxu0 %v3219
  %3359 = vmatpush.bf16.msra.mxu0 %v3217
  %3360 = vmatpush.bf16.msra.mxu0 %v3215
  %3361 = vmatmul.bf16.gmra.mxu0 %v3351
  %v3362 = vpop.f32.mrf.mxu0
  %v3363 = vadd.f32 0.0, %v3362
  %v3364 = vpop.f32.mrf.mxu0
  %3365 = vdwg.mxu0
  %3366 = vmatpush.bf16.msra.mxu0 0
  %3367 = vmatpush.bf16.msra.mxu0 0
  %3368 = vmatpush.bf16.msra.mxu0 0
  %3369 = vmatpush.bf16.msra.mxu0 %v3224
  %3370 = vmatpush.bf16.msra.mxu0 %v3222
  %3371 = vmatpush.bf16.msra.mxu0 %v3220
  %3372 = vmatpush.bf16.msra.mxu0 %v3218
  %3373 = vmatpush.bf16.msra.mxu0 %v3216
  %3374 = vmatmul.bf16.gmra.mxu0 %v3351
  %v3375 = vpop.f32.mrf.mxu0
  %v3376 = vadd.f32 0.0, %v3375
  %v3377 = vpop.f32.mrf.mxu0
  %3378 = vdwg.mxu0
  %v3379 = vld [vmem:[%s7] sm:$0xf]
  %v3380 = vld [vmem:[%s7 + $0x4] sm:$0xf]
  %v3381 = vld [vmem:[%s7 + $0x8] sm:$0xf]
  %v3382 = vld [vmem:[%s7 + $0xc] sm:$0xf]
  %v3383 = vld [vmem:[%s7 + $0x10] sm:$0xf]
  %v3384 = vld [vmem:[%s7 + $0x14] sm:$0xf]
  %v3385 = vld [vmem:[%s7 + $0x18] sm:$0xf]
  %v3386 = vld [vmem:[%s7 + $0x1c] sm:$0xf]
  %v3387 = vld [vmem:[%s7 + $0x20] sm:$0xf]
  %v3388 = vld [vmem:[%s7 + $0x24] sm:$0xf]
  %v3389 = vld [vmem:[%s7 + $0x28] sm:$0xf]
  %v3390 = vld [vmem:[%s7 + $0x2c] sm:$0xf]
  %v3391 = vld [vmem:[%s7 + $0x30] sm:$0xf]
  %v3392 = vld [vmem:[%s7 + $0x34] sm:$0xf]
  %v3393 = vld [vmem:[%s7 + $0x38] sm:$0xf]
  %v3394 = vld [vmem:[%s7 + $0x3c] sm:$0xf]
  %v3395 = vld [vmem:[%s7 + $0x40] sm:$0xf]
  %v3396 = vld [vmem:[%s7 + $0x44] sm:$0xf]
  %v3397 = vld [vmem:[%s7 + $0x48] sm:$0xf]
  %v3398 = vld [vmem:[%s7 + $0x4c] sm:$0xf]
  %v3399 = vld [vmem:[%s7 + $0x50] sm:$0xf]
  %v3400 = vld [vmem:[%s7 + $0x54] sm:$0xf]
  %v3401 = vld [vmem:[%s7 + $0x58] sm:$0xf]
  %v3402 = vld [vmem:[%s7 + $0x5c] sm:$0xf]
  %v3403 = vld [vmem:[%s7 + $0x60] sm:$0xf]
  %v3404 = vld [vmem:[%s7 + $0x64] sm:$0xf]
  %v3405 = vld [vmem:[%s7 + $0x68] sm:$0xf]
  %v3406 = vld [vmem:[%s7 + $0x6c] sm:$0xf]
  %v3407 = vld [vmem:[%s7 + $0x70] sm:$0xf]
  %v3408 = vld [vmem:[%s7 + $0x74] sm:$0xf]
  %v3409 = vld [vmem:[%s7 + $0x78] sm:$0xf]
  %v3410 = vld [vmem:[%s7 + $0x7c] sm:$0xf]
  %v3411 = vld [vmem:[%s7 + $0x80] sm:$0xf]
  %v3412 = vld [vmem:[%s7 + $0x84] sm:$0xf]
  %v3413 = vld [vmem:[%s7 + $0x88] sm:$0xf]
  %v3414 = vld [vmem:[%s7 + $0x8c] sm:$0xf]
  %v3415 = vld [vmem:[%s7 + $0x90] sm:$0xf]
  %v3416 = vld [vmem:[%s7 + $0x94] sm:$0xf]
  %v3417 = vld [vmem:[%s7 + $0x98] sm:$0xf]
  %v3418 = vld [vmem:[%s7 + $0x9c] sm:$0xf]
  %v3419 = vld [vmem:[%s7 + $0xa0] sm:$0xf]
  %v3420 = vld [vmem:[%s7 + $0xa4] sm:$0xf]
  %v3421 = vld [vmem:[%s7 + $0xa8] sm:$0xf]
  %v3422 = vld [vmem:[%s7 + $0xac] sm:$0xf]
  %v3423 = vld [vmem:[%s7 + $0xb0] sm:$0xf]
  %v3424 = vld [vmem:[%s7 + $0xb4] sm:$0xf]
  %v3425 = vld [vmem:[%s7 + $0xb8] sm:$0xf]
  %v3426 = vld [vmem:[%s7 + $0xbc] sm:$0xf]
  %v3427 = vld [vmem:[%s7 + $0xc0] sm:$0xf]
  %v3428 = vld [vmem:[%s7 + $0xc4] sm:$0xf]
  %v3429 = vld [vmem:[%s7 + $0xc8] sm:$0xf]
  %v3430 = vld [vmem:[%s7 + $0xcc] sm:$0xf]
  %v3431 = vld [vmem:[%s7 + $0xd0] sm:$0xf]
  %v3432 = vld [vmem:[%s7 + $0xd4] sm:$0xf]
  %v3433 = vld [vmem:[%s7 + $0xd8] sm:$0xf]
  %v3434 = vld [vmem:[%s7 + $0xdc] sm:$0xf]
  %v3435 = vld [vmem:[%s7 + $0xe0] sm:$0xf]
  %v3436 = vld [vmem:[%s7 + $0xe4] sm:$0xf]
  %v3437 = vld [vmem:[%s7 + $0xe8] sm:$0xf]
  %v3438 = vld [vmem:[%s7 + $0xec] sm:$0xf]
  %v3439 = vld [vmem:[%s7 + $0xf0] sm:$0xf]
  %v3440 = vld [vmem:[%s7 + $0xf4] sm:$0xf]
  %v3441 = vld [vmem:[%s7 + $0xf8] sm:$0xf]
  %v3442 = vld [vmem:[%s7 + $0xfc] sm:$0xf]
  %v3443 = vld [vmem:[%s7 + $0x100] sm:$0xf]
  %v3444 = vld [vmem:[%s7 + $0x104] sm:$0xf]
  %v3445 = vld [vmem:[%s7 + $0x108] sm:$0xf]
  %v3446 = vld [vmem:[%s7 + $0x10c] sm:$0xf]
  %v3447 = vld [vmem:[%s7 + $0x110] sm:$0xf]
  %v3448 = vld [vmem:[%s7 + $0x114] sm:$0xf]
  %v3449 = vld [vmem:[%s7 + $0x118] sm:$0xf]
  %v3450 = vld [vmem:[%s7 + $0x11c] sm:$0xf]
  %v3451 = vld [vmem:[%s7 + $0x120] sm:$0xf]
  %v3452 = vld [vmem:[%s7 + $0x124] sm:$0xf]
  %v3453 = vld [vmem:[%s7 + $0x128] sm:$0xf]
  %v3454 = vld [vmem:[%s7 + $0x12c] sm:$0xf]
  %v3455 = vld [vmem:[%s7 + $0x130] sm:$0xf]
  %v3456 = vld [vmem:[%s7 + $0x134] sm:$0xf]
  %v3457 = vld [vmem:[%s7 + $0x138] sm:$0xf]
  %v3458 = vld [vmem:[%s7 + $0x13c] sm:$0xf]
  %v3459 = vld [vmem:[%s7 + $0x140] sm:$0xf]
  %v3460 = vld [vmem:[%s7 + $0x144] sm:$0xf]
  %v3461 = vld [vmem:[%s7 + $0x148] sm:$0xf]
  %v3462 = vld [vmem:[%s7 + $0x14c] sm:$0xf]
  %v3463 = vld [vmem:[%s7 + $0x150] sm:$0xf]
  %v3464 = vld [vmem:[%s7 + $0x154] sm:$0xf]
  %v3465 = vld [vmem:[%s7 + $0x158] sm:$0xf]
  %v3466 = vld [vmem:[%s7 + $0x15c] sm:$0xf]
  %v3467 = vld [vmem:[%s7 + $0x160] sm:$0xf]
  %v3468 = vld [vmem:[%s7 + $0x164] sm:$0xf]
  %v3469 = vld [vmem:[%s7 + $0x168] sm:$0xf]
  %v3470 = vld [vmem:[%s7 + $0x16c] sm:$0xf]
  %v3471 = vld [vmem:[%s7 + $0x170] sm:$0xf]
  %v3472 = vld [vmem:[%s7 + $0x174] sm:$0xf]
  %v3473 = vld [vmem:[%s7 + $0x178] sm:$0xf]
  %v3474 = vld [vmem:[%s7 + $0x17c] sm:$0xf]
  %v3475 = vld [vmem:[%s7 + $0x180] sm:$0xf]
  %v3476 = vld [vmem:[%s7 + $0x184] sm:$0xf]
  %v3477 = vld [vmem:[%s7 + $0x188] sm:$0xf]
  %v3478 = vld [vmem:[%s7 + $0x18c] sm:$0xf]
  %v3479 = vld [vmem:[%s7 + $0x190] sm:$0xf]
  %v3480 = vld [vmem:[%s7 + $0x194] sm:$0xf]
  %v3481 = vld [vmem:[%s7 + $0x198] sm:$0xf]
  %v3482 = vld [vmem:[%s7 + $0x19c] sm:$0xf]
  %v3483 = vld [vmem:[%s7 + $0x1a0] sm:$0xf]
  %v3484 = vld [vmem:[%s7 + $0x1a4] sm:$0xf]
  %v3485 = vld [vmem:[%s7 + $0x1a8] sm:$0xf]
  %v3486 = vld [vmem:[%s7 + $0x1ac] sm:$0xf]
  %v3487 = vld [vmem:[%s7 + $0x1b0] sm:$0xf]
  %v3488 = vld [vmem:[%s7 + $0x1b4] sm:$0xf]
  %v3489 = vld [vmem:[%s7 + $0x1b8] sm:$0xf]
  %v3490 = vld [vmem:[%s7 + $0x1bc] sm:$0xf]
  %v3491 = vld [vmem:[%s7 + $0x1c0] sm:$0xf]
  %v3492 = vld [vmem:[%s7 + $0x1c4] sm:$0xf]
  %v3493 = vld [vmem:[%s7 + $0x1c8] sm:$0xf]
  %v3494 = vld [vmem:[%s7 + $0x1cc] sm:$0xf]
  %v3495 = vld [vmem:[%s7 + $0x1d0] sm:$0xf]
  %v3496 = vld [vmem:[%s7 + $0x1d4] sm:$0xf]
  %v3497 = vld [vmem:[%s7 + $0x1d8] sm:$0xf]
  %v3498 = vld [vmem:[%s7 + $0x1dc] sm:$0xf]
  %v3499 = vld [vmem:[%s7 + $0x1e0] sm:$0xf]
  %v3500 = vld [vmem:[%s7 + $0x1e4] sm:$0xf]
  %v3501 = vld [vmem:[%s7 + $0x1e8] sm:$0xf]
  %v3502 = vld [vmem:[%s7 + $0x1ec] sm:$0xf]
  %v3503 = vld [vmem:[%s7 + $0x1f0] sm:$0xf]
  %v3504 = vld [vmem:[%s7 + $0x1f4] sm:$0xf]
  %v3505 = vld [vmem:[%s7 + $0x1f8] sm:$0xf]
  %v3506 = vld [vmem:[%s7 + $0x1fc] sm:$0xf]
  %v3507 = vld [vmem:[%s7 + $0x200] sm:$0xf]
  %v3508 = vld [vmem:[%s7 + $0x204] sm:$0xf]
  %v3509 = vld [vmem:[%s7 + $0x208] sm:$0xf]
  %v3510 = vld [vmem:[%s7 + $0x20c] sm:$0xf]
  %v3511 = vld [vmem:[%s7 + $0x210] sm:$0xf]
  %v3512 = vld [vmem:[%s7 + $0x214] sm:$0xf]
  %v3513 = vld [vmem:[%s7 + $0x218] sm:$0xf]
  %v3514 = vld [vmem:[%s7 + $0x21c] sm:$0xf]
  %v3515 = vld [vmem:[%s7 + $0x220] sm:$0xf]
  %v3516 = vld [vmem:[%s7 + $0x224] sm:$0xf]
  %v3517 = vld [vmem:[%s7 + $0x228] sm:$0xf]
  %v3518 = vld [vmem:[%s7 + $0x22c] sm:$0xf]
  %v3519 = vld [vmem:[%s7 + $0x230] sm:$0xf]
  %v3520 = vld [vmem:[%s7 + $0x234] sm:$0xf]
  %v3521 = vld [vmem:[%s7 + $0x238] sm:$0xf]
  %v3522 = vld [vmem:[%s7 + $0x23c] sm:$0xf]
  %v3523 = vld [vmem:[%s7 + $0x240] sm:$0xf]
  %v3524 = vld [vmem:[%s7 + $0x244] sm:$0xf]
  %v3525 = vld [vmem:[%s7 + $0x248] sm:$0xf]
  %v3526 = vld [vmem:[%s7 + $0x24c] sm:$0xf]
  %v3527 = vld [vmem:[%s7 + $0x250] sm:$0xf]
  %v3528 = vld [vmem:[%s7 + $0x254] sm:$0xf]
  %v3529 = vld [vmem:[%s7 + $0x258] sm:$0xf]
  %v3530 = vld [vmem:[%s7 + $0x25c] sm:$0xf]
  %v3531 = vld [vmem:[%s7 + $0x260] sm:$0xf]
  %v3532 = vld [vmem:[%s7 + $0x264] sm:$0xf]
  %v3533 = vld [vmem:[%s7 + $0x268] sm:$0xf]
  %v3534 = vld [vmem:[%s7 + $0x26c] sm:$0xf]
  %v3535 = vld [vmem:[%s7 + $0x270] sm:$0xf]
  %v3536 = vld [vmem:[%s7 + $0x274] sm:$0xf]
  %v3537 = vld [vmem:[%s7 + $0x278] sm:$0xf]
  %v3538 = vld [vmem:[%s7 + $0x27c] sm:$0xf]
  %v3539 = vpack.c.bf16 %v3239, %v3239
  %v3540 = vpack.c.bf16 %v3252, %v3252
  %v3541 = vpack.c.bf16 %v3270, %v3270
  %v3542 = vpack.c.bf16 %v3283, %v3283
  %v3543 = vpack.c.bf16 %v3301, %v3301
  %v3544 = vpack.c.bf16 %v3314, %v3314
  %v3545 = vpack.c.bf16 %v3332, %v3332
  %v3546 = vpack.c.bf16 %v3345, %v3345
  %v3547 = vpack.c.bf16 %v3363, %v3363
  %v3548 = vpack.c.bf16 %v3376, %v3376
  %v3549 = vld [vmem:[%s8] sm:$0x1]
  %v3551 = vperm.slane %v3549, 0
  %v3713 = vunpack.c.l.b16 %v3379
  %v3714 = vunpack.c.l.b16 %v3380
  %v3715 = vunpack.c.l.b16 %v3381
  %v3716 = vunpack.c.l.b16 %v3382
  %v3717 = vunpack.c.l.b16 %v3383
  %v3718 = vunpack.c.l.b16 %v3384
  %v3719 = vunpack.c.l.b16 %v3385
  %v3720 = vunpack.c.l.b16 %v3386
  %v3721 = vunpack.c.l.b16 %v3387
  %v3722 = vunpack.c.l.b16 %v3388
  %v3723 = vunpack.c.l.b16 %v3389
  %v3724 = vunpack.c.l.b16 %v3390
  %v3725 = vunpack.c.l.b16 %v3391
  %v3726 = vunpack.c.l.b16 %v3392
  %v3727 = vunpack.c.l.b16 %v3393
  %v3728 = vunpack.c.l.b16 %v3394
  %v3729 = vunpack.c.l.b16 %v3395
  %v3730 = vunpack.c.l.b16 %v3396
  %v3731 = vunpack.c.l.b16 %v3397
  %v3732 = vunpack.c.l.b16 %v3398
  %v3733 = vunpack.c.l.b16 %v3399
  %v3734 = vunpack.c.l.b16 %v3400
  %v3735 = vunpack.c.l.b16 %v3401
  %v3736 = vunpack.c.l.b16 %v3402
  %v3737 = vunpack.c.l.b16 %v3403
  %v3738 = vunpack.c.l.b16 %v3404
  %v3739 = vunpack.c.l.b16 %v3405
  %v3740 = vunpack.c.l.b16 %v3406
  %v3741 = vunpack.c.l.b16 %v3407
  %v3742 = vunpack.c.l.b16 %v3408
  %v3743 = vunpack.c.l.b16 %v3409
  %v3744 = vunpack.c.l.b16 %v3410
  %v3745 = vunpack.c.l.b16 %v3411
  %v3746 = vunpack.c.l.b16 %v3412
  %v3747 = vunpack.c.l.b16 %v3413
  %v3748 = vunpack.c.l.b16 %v3414
  %v3749 = vunpack.c.l.b16 %v3415
  %v3750 = vunpack.c.l.b16 %v3416
  %v3751 = vunpack.c.l.b16 %v3417
  %v3752 = vunpack.c.l.b16 %v3418
  %v3753 = vunpack.c.l.b16 %v3419
  %v3754 = vunpack.c.l.b16 %v3420
  %v3755 = vunpack.c.l.b16 %v3421
  %v3756 = vunpack.c.l.b16 %v3422
  %v3757 = vunpack.c.l.b16 %v3423
  %v3758 = vunpack.c.l.b16 %v3424
  %v3759 = vunpack.c.l.b16 %v3425
  %v3760 = vunpack.c.l.b16 %v3426
  %v3761 = vunpack.c.l.b16 %v3427
  %v3762 = vunpack.c.l.b16 %v3428
  %v3763 = vunpack.c.l.b16 %v3429
  %v3764 = vunpack.c.l.b16 %v3430
  %v3765 = vunpack.c.l.b16 %v3431
  %v3766 = vunpack.c.l.b16 %v3432
  %v3767 = vunpack.c.l.b16 %v3433
  %v3768 = vunpack.c.l.b16 %v3434
  %v3769 = vunpack.c.l.b16 %v3435
  %v3770 = vunpack.c.l.b16 %v3436
  %v3771 = vunpack.c.l.b16 %v3437
  %v3772 = vunpack.c.l.b16 %v3438
  %v3773 = vunpack.c.l.b16 %v3439
  %v3774 = vunpack.c.l.b16 %v3440
  %v3775 = vunpack.c.l.b16 %v3441
  %v3776 = vunpack.c.l.b16 %v3442
  %v3777 = vunpack.c.l.b16 %v3443
  %v3778 = vunpack.c.l.b16 %v3444
  %v3779 = vunpack.c.l.b16 %v3445
  %v3780 = vunpack.c.l.b16 %v3446
  %v3781 = vunpack.c.l.b16 %v3447
  %v3782 = vunpack.c.l.b16 %v3448
  %v3783 = vunpack.c.l.b16 %v3449
  %v3784 = vunpack.c.l.b16 %v3450
  %v3785 = vunpack.c.l.b16 %v3451
  %v3786 = vunpack.c.l.b16 %v3452
  %v3787 = vunpack.c.l.b16 %v3453
  %v3788 = vunpack.c.l.b16 %v3454
  %v3789 = vunpack.c.l.b16 %v3455
  %v3790 = vunpack.c.l.b16 %v3456
  %v3791 = vunpack.c.l.b16 %v3457
  %v3792 = vunpack.c.l.b16 %v3458
  %v3793 = vunpack.c.l.b16 %v3459
  %v3794 = vunpack.c.l.b16 %v3460
  %v3795 = vunpack.c.l.b16 %v3461
  %v3796 = vunpack.c.l.b16 %v3462
  %v3797 = vunpack.c.l.b16 %v3463
  %v3798 = vunpack.c.l.b16 %v3464
  %v3799 = vunpack.c.l.b16 %v3465
  %v3800 = vunpack.c.l.b16 %v3466
  %v3801 = vunpack.c.l.b16 %v3467
  %v3802 = vunpack.c.l.b16 %v3468
  %v3803 = vunpack.c.l.b16 %v3469
  %v3804 = vunpack.c.l.b16 %v3470
  %v3805 = vunpack.c.l.b16 %v3471
  %v3806 = vunpack.c.l.b16 %v3472
  %v3807 = vunpack.c.l.b16 %v3473
  %v3808 = vunpack.c.l.b16 %v3474
  %v3809 = vunpack.c.l.b16 %v3475
  %v3810 = vunpack.c.l.b16 %v3476
  %v3811 = vunpack.c.l.b16 %v3477
  %v3812 = vunpack.c.l.b16 %v3478
  %v3813 = vunpack.c.l.b16 %v3479
  %v3814 = vunpack.c.l.b16 %v3480
  %v3815 = vunpack.c.l.b16 %v3481
  %v3816 = vunpack.c.l.b16 %v3482
  %v3817 = vunpack.c.l.b16 %v3483
  %v3818 = vunpack.c.l.b16 %v3484
  %v3819 = vunpack.c.l.b16 %v3485
  %v3820 = vunpack.c.l.b16 %v3486
  %v3821 = vunpack.c.l.b16 %v3487
  %v3822 = vunpack.c.l.b16 %v3488
  %v3823 = vunpack.c.l.b16 %v3489
  %v3824 = vunpack.c.l.b16 %v3490
  %v3825 = vunpack.c.l.b16 %v3491
  %v3826 = vunpack.c.l.b16 %v3492
  %v3827 = vunpack.c.l.b16 %v3493
  %v3828 = vunpack.c.l.b16 %v3494
  %v3829 = vunpack.c.l.b16 %v3495
  %v3830 = vunpack.c.l.b16 %v3496
  %v3831 = vunpack.c.l.b16 %v3497
  %v3832 = vunpack.c.l.b16 %v3498
  %v3833 = vunpack.c.l.b16 %v3499
  %v3834 = vunpack.c.l.b16 %v3500
  %v3835 = vunpack.c.l.b16 %v3501
  %v3836 = vunpack.c.l.b16 %v3502
  %v3837 = vunpack.c.l.b16 %v3503
  %v3838 = vunpack.c.l.b16 %v3504
  %v3839 = vunpack.c.l.b16 %v3505
  %v3840 = vunpack.c.l.b16 %v3506
  %v3841 = vunpack.c.l.b16 %v3507
  %v3842 = vunpack.c.l.b16 %v3508
  %v3843 = vunpack.c.l.b16 %v3509
  %v3844 = vunpack.c.l.b16 %v3510
  %v3845 = vunpack.c.l.b16 %v3511
  %v3846 = vunpack.c.l.b16 %v3512
  %v3847 = vunpack.c.l.b16 %v3513
  %v3848 = vunpack.c.l.b16 %v3514
  %v3849 = vunpack.c.l.b16 %v3515
  %v3850 = vunpack.c.l.b16 %v3516
  %v3851 = vunpack.c.l.b16 %v3517
  %v3852 = vunpack.c.l.b16 %v3518
  %v3853 = vunpack.c.l.b16 %v3519
  %v3854 = vunpack.c.l.b16 %v3520
  %v3855 = vunpack.c.l.b16 %v3521
  %v3856 = vunpack.c.l.b16 %v3522
  %v3857 = vunpack.c.l.b16 %v3523
  %v3858 = vunpack.c.l.b16 %v3524
  %v3859 = vunpack.c.l.b16 %v3525
  %v3860 = vunpack.c.l.b16 %v3526
  %v3861 = vunpack.c.l.b16 %v3527
  %v3862 = vunpack.c.l.b16 %v3528
  %v3863 = vunpack.c.l.b16 %v3529
  %v3864 = vunpack.c.l.b16 %v3530
  %v3865 = vunpack.c.l.b16 %v3531
  %v3866 = vunpack.c.l.b16 %v3532
  %v3867 = vunpack.c.l.b16 %v3533
  %v3868 = vunpack.c.l.b16 %v3534
  %v3869 = vunpack.c.l.b16 %v3535
  %v3870 = vunpack.c.l.b16 %v3536
  %v3871 = vunpack.c.l.b16 %v3537
  %v3872 = vunpack.c.l.b16 %v3538
  %v3873 = vpack.c.b16 %v3714, %v3713
  %v3874 = vpack.c.b16 %v3716, %v3715
  %v3875 = vpack.c.b16 %v3718, %v3717
  %v3876 = vpack.c.b16 %v3720, %v3719
  %v3877 = vpack.c.b16 %v3722, %v3721
  %v3878 = vpack.c.b16 %v3724, %v3723
  %v3879 = vpack.c.b16 %v3726, %v3725
  %v3880 = vpack.c.b16 %v3728, %v3727
  %v3881 = vpack.c.b16 %v3730, %v3729
  %v3882 = vpack.c.b16 %v3732, %v3731
  %v3883 = vpack.c.b16 %v3734, %v3733
  %v3884 = vpack.c.b16 %v3736, %v3735
  %v3885 = vpack.c.b16 %v3738, %v3737
  %v3886 = vpack.c.b16 %v3740, %v3739
  %v3887 = vpack.c.b16 %v3742, %v3741
  %v3888 = vpack.c.b16 %v3744, %v3743
  %v3889 = vpack.c.b16 %v3746, %v3745
  %v3890 = vpack.c.b16 %v3748, %v3747
  %v3891 = vpack.c.b16 %v3750, %v3749
  %v3892 = vpack.c.b16 %v3752, %v3751
  %v3893 = vpack.c.b16 %v3754, %v3753
  %v3894 = vpack.c.b16 %v3756, %v3755
  %v3895 = vpack.c.b16 %v3758, %v3757
  %v3896 = vpack.c.b16 %v3760, %v3759
  %v3897 = vpack.c.b16 %v3762, %v3761
  %v3898 = vpack.c.b16 %v3764, %v3763
  %v3899 = vpack.c.b16 %v3766, %v3765
  %v3900 = vpack.c.b16 %v3768, %v3767
  %v3901 = vpack.c.b16 %v3770, %v3769
  %v3902 = vpack.c.b16 %v3772, %v3771
  %v3903 = vpack.c.b16 %v3774, %v3773
  %v3904 = vpack.c.b16 %v3776, %v3775
  %v3905 = vpack.c.b16 %v3778, %v3777
  %v3906 = vpack.c.b16 %v3780, %v3779
  %v3907 = vpack.c.b16 %v3782, %v3781
  %v3908 = vpack.c.b16 %v3784, %v3783
  %v3909 = vpack.c.b16 %v3786, %v3785
  %v3910 = vpack.c.b16 %v3788, %v3787
  %v3911 = vpack.c.b16 %v3790, %v3789
  %v3912 = vpack.c.b16 %v3792, %v3791
  %v3913 = vpack.c.b16 %v3794, %v3793
  %v3914 = vpack.c.b16 %v3796, %v3795
  %v3915 = vpack.c.b16 %v3798, %v3797
  %v3916 = vpack.c.b16 %v3800, %v3799
  %v3917 = vpack.c.b16 %v3802, %v3801
  %v3918 = vpack.c.b16 %v3804, %v3803
  %v3919 = vpack.c.b16 %v3806, %v3805
  %v3920 = vpack.c.b16 %v3808, %v3807
  %v3921 = vpack.c.b16 %v3810, %v3809
  %v3922 = vpack.c.b16 %v3812, %v3811
  %v3923 = vpack.c.b16 %v3814, %v3813
  %v3924 = vpack.c.b16 %v3816, %v3815
  %v3925 = vpack.c.b16 %v3818, %v3817
  %v3926 = vpack.c.b16 %v3820, %v3819
  %v3927 = vpack.c.b16 %v3822, %v3821
  %v3928 = vpack.c.b16 %v3824, %v3823
  %v3929 = vpack.c.b16 %v3826, %v3825
  %v3930 = vpack.c.b16 %v3828, %v3827
  %v3931 = vpack.c.b16 %v3830, %v3829
  %v3932 = vpack.c.b16 %v3832, %v3831
  %v3933 = vpack.c.b16 %v3834, %v3833
  %v3934 = vpack.c.b16 %v3836, %v3835
  %v3935 = vpack.c.b16 %v3838, %v3837
  %v3936 = vpack.c.b16 %v3840, %v3839
  %v3937 = vpack.c.b16 %v3842, %v3841
  %v3938 = vpack.c.b16 %v3844, %v3843
  %v3939 = vpack.c.b16 %v3846, %v3845
  %v3940 = vpack.c.b16 %v3848, %v3847
  %v3941 = vpack.c.b16 %v3850, %v3849
  %v3942 = vpack.c.b16 %v3852, %v3851
  %v3943 = vpack.c.b16 %v3854, %v3853
  %v3944 = vpack.c.b16 %v3856, %v3855
  %v3945 = vpack.c.b16 %v3858, %v3857
  %v3946 = vpack.c.b16 %v3860, %v3859
  %v3947 = vpack.c.b16 %v3862, %v3861
  %v3948 = vpack.c.b16 %v3864, %v3863
  %v3949 = vpack.c.b16 %v3866, %v3865
  %v3950 = vpack.c.b16 %v3868, %v3867
  %v3951 = vpack.c.b16 %v3870, %v3869
  %v3952 = vpack.c.b16 %v3872, %v3871
  %4033 = vmatpush.bf16.msra.mxu0 %v3880
  %4034 = vmatpush.bf16.msra.mxu0 %v3879
  %4035 = vmatpush.bf16.msra.mxu0 %v3878
  %4036 = vmatpush.bf16.msra.mxu0 %v3877
  %4037 = vmatpush.bf16.msra.mxu0 %v3876
  %4038 = vmatpush.bf16.msra.mxu0 %v3875
  %4039 = vmatpush.bf16.msra.mxu0 %v3874
  %4040 = vmatpush.bf16.msra.mxu0 %v3873
  %4041 = vmatmul.bf16.gmra.mxu0 %v3539
  %v4042 = vpop.f32.mrf.mxu0
  %v4043 = vadd.f32 %v3551, %v4042
  %v4044 = vpop.f32.mrf.mxu0
  %4045 = vdwg.mxu0
  %4046 = vmatpush.bf16.msra.mxu0 %v3888
  %4047 = vmatpush.bf16.msra.mxu0 %v3887
  %4048 = vmatpush.bf16.msra.mxu0 %v3886
  %4049 = vmatpush.bf16.msra.mxu0 %v3885
  %4050 = vmatpush.bf16.msra.mxu0 %v3884
  %4051 = vmatpush.bf16.msra.mxu0 %v3883
  %4052 = vmatpush.bf16.msra.mxu0 %v3882
  %4053 = vmatpush.bf16.msra.mxu0 %v3881
  %4054 = vmatmul.bf16.gmra.mxu0 %v3540
  %v4055 = vpop.f32.mrf.mxu0
  %v4056 = vadd.f32 %v4043, %v4055
  %v4057 = vpop.f32.mrf.mxu0
  %4058 = vdwg.mxu0
  %4059 = vmatpush.bf16.msra.mxu0 %v3896
  %4060 = vmatpush.bf16.msra.mxu0 %v3895
  %4061 = vmatpush.bf16.msra.mxu0 %v3894
  %4062 = vmatpush.bf16.msra.mxu0 %v3893
  %4063 = vmatpush.bf16.msra.mxu0 %v3892
  %4064 = vmatpush.bf16.msra.mxu0 %v3891
  %4065 = vmatpush.bf16.msra.mxu0 %v3890
  %4066 = vmatpush.bf16.msra.mxu0 %v3889
  %4067 = vmatmul.bf16.gmra.mxu0 %v3541
  %v4068 = vpop.f32.mrf.mxu0
  %v4069 = vadd.f32 %v4056, %v4068
  %v4070 = vpop.f32.mrf.mxu0
  %4071 = vdwg.mxu0
  %4072 = vmatpush.bf16.msra.mxu0 %v3904
  %4073 = vmatpush.bf16.msra.mxu0 %v3903
  %4074 = vmatpush.bf16.msra.mxu0 %v3902
  %4075 = vmatpush.bf16.msra.mxu0 %v3901
  %4076 = vmatpush.bf16.msra.mxu0 %v3900
  %4077 = vmatpush.bf16.msra.mxu0 %v3899
  %4078 = vmatpush.bf16.msra.mxu0 %v3898
  %4079 = vmatpush.bf16.msra.mxu0 %v3897
  %4080 = vmatmul.bf16.gmra.mxu0 %v3542
  %v4081 = vpop.f32.mrf.mxu0
  %v4082 = vadd.f32 %v4069, %v4081
  %v4083 = vpop.f32.mrf.mxu0
  %4084 = vdwg.mxu0
  %4085 = vmatpush.bf16.msra.mxu0 %v3912
  %4086 = vmatpush.bf16.msra.mxu0 %v3911
  %4087 = vmatpush.bf16.msra.mxu0 %v3910
  %4088 = vmatpush.bf16.msra.mxu0 %v3909
  %4089 = vmatpush.bf16.msra.mxu0 %v3908
  %4090 = vmatpush.bf16.msra.mxu0 %v3907
  %4091 = vmatpush.bf16.msra.mxu0 %v3906
  %4092 = vmatpush.bf16.msra.mxu0 %v3905
  %4093 = vmatmul.bf16.gmra.mxu0 %v3543
  %v4094 = vpop.f32.mrf.mxu0
  %v4095 = vadd.f32 %v4082, %v4094
  %v4096 = vpop.f32.mrf.mxu0
  %4097 = vdwg.mxu0
  %4098 = vmatpush.bf16.msra.mxu0 %v3920
  %4099 = vmatpush.bf16.msra.mxu0 %v3919
  %4100 = vmatpush.bf16.msra.mxu0 %v3918
  %4101 = vmatpush.bf16.msra.mxu0 %v3917
  %4102 = vmatpush.bf16.msra.mxu0 %v3916
  %4103 = vmatpush.bf16.msra.mxu0 %v3915
  %4104 = vmatpush.bf16.msra.mxu0 %v3914
  %4105 = vmatpush.bf16.msra.mxu0 %v3913
  %4106 = vmatmul.bf16.gmra.mxu0 %v3544
  %v4107 = vpop.f32.mrf.mxu0
  %v4108 = vadd.f32 %v4095, %v4107
  %v4109 = vpop.f32.mrf.mxu0
  %4110 = vdwg.mxu0
  %4111 = vmatpush.bf16.msra.mxu0 %v3928
  %4112 = vmatpush.bf16.msra.mxu0 %v3927
  %4113 = vmatpush.bf16.msra.mxu0 %v3926
  %4114 = vmatpush.bf16.msra.mxu0 %v3925
  %4115 = vmatpush.bf16.msra.mxu0 %v3924
  %4116 = vmatpush.bf16.msra.mxu0 %v3923
  %4117 = vmatpush.bf16.msra.mxu0 %v3922
  %4118 = vmatpush.bf16.msra.mxu0 %v3921
  %4119 = vmatmul.bf16.gmra.mxu0 %v3545
  %v4120 = vpop.f32.mrf.mxu0
  %v4121 = vadd.f32 %v4108, %v4120
  %v4122 = vpop.f32.mrf.mxu0
  %4123 = vdwg.mxu0
  %4124 = vmatpush.bf16.msra.mxu0 %v3936
  %4125 = vmatpush.bf16.msra.mxu0 %v3935
  %4126 = vmatpush.bf16.msra.mxu0 %v3934
  %4127 = vmatpush.bf16.msra.mxu0 %v3933
  %4128 = vmatpush.bf16.msra.mxu0 %v3932
  %4129 = vmatpush.bf16.msra.mxu0 %v3931
  %4130 = vmatpush.bf16.msra.mxu0 %v3930
  %4131 = vmatpush.bf16.msra.mxu0 %v3929
  %4132 = vmatmul.bf16.gmra.mxu0 %v3546
  %v4133 = vpop.f32.mrf.mxu0
  %v4134 = vadd.f32 %v4121, %v4133
  %v4135 = vpop.f32.mrf.mxu0
  %4136 = vdwg.mxu0
  %4137 = vmatpush.bf16.msra.mxu0 %v3944
  %4138 = vmatpush.bf16.msra.mxu0 %v3943
  %4139 = vmatpush.bf16.msra.mxu0 %v3942
  %4140 = vmatpush.bf16.msra.mxu0 %v3941
  %4141 = vmatpush.bf16.msra.mxu0 %v3940
  %4142 = vmatpush.bf16.msra.mxu0 %v3939
  %4143 = vmatpush.bf16.msra.mxu0 %v3938
  %4144 = vmatpush.bf16.msra.mxu0 %v3937
  %4145 = vmatmul.bf16.gmra.mxu0 %v3547
  %v4146 = vpop.f32.mrf.mxu0
  %v4147 = vadd.f32 %v4134, %v4146
  %v4148 = vpop.f32.mrf.mxu0
  %4149 = vdwg.mxu0
  %4150 = vmatpush.bf16.msra.mxu0 %v3952
  %4151 = vmatpush.bf16.msra.mxu0 %v3951
  %4152 = vmatpush.bf16.msra.mxu0 %v3950
  %4153 = vmatpush.bf16.msra.mxu0 %v3949
  %4154 = vmatpush.bf16.msra.mxu0 %v3948
  %4155 = vmatpush.bf16.msra.mxu0 %v3947
  %4156 = vmatpush.bf16.msra.mxu0 %v3946
  %4157 = vmatpush.bf16.msra.mxu0 %v3945
  %4158 = vmatmul.bf16.gmra.mxu0 %v3548
  %v4159 = vpop.f32.mrf.mxu0
  %v4160 = vadd.f32 %v4147, %v4159
  %v4161 = vpop.f32.mrf.mxu0
  %4162 = vdwg.mxu0
  %v4163 = vmax.f32 %v4160, 0.0
  %v4164 = vld [vmem:[%s9] sm:$0xf]
  %v4165 = vld [vmem:[%s9 + $0x4] sm:$0xf]
  %v4166 = vld [vmem:[%s9 + $0x8] sm:$0xf]
  %v4167 = vld [vmem:[%s9 + $0xc] sm:$0xf]
  %v4168 = vld [vmem:[%s9 + $0x10] sm:$0xf]
  %v4169 = vld [vmem:[%s9 + $0x14] sm:$0xf]
  %v4170 = vld [vmem:[%s9 + $0x18] sm:$0xf]
  %v4171 = vld [vmem:[%s9 + $0x1c] sm:$0xf]
  %v4172 = vld [vmem:[%s9 + $0x20] sm:$0xf]
  %v4173 = vld [vmem:[%s9 + $0x24] sm:$0xf]
  %v4174 = vld [vmem:[%s9 + $0x28] sm:$0xf]
  %v4175 = vld [vmem:[%s9 + $0x2c] sm:$0xf]
  %v4176 = vld [vmem:[%s9 + $0x30] sm:$0xf]
  %v4177 = vld [vmem:[%s9 + $0x34] sm:$0xf]
  %v4178 = vld [vmem:[%s9 + $0x38] sm:$0xf]
  %v4179 = vld [vmem:[%s9 + $0x3c] sm:$0xf]
  %v4180 = vpack.c.bf16 %v4163, %v4163
  %v4181 = vld [vmem:[%s10] sm:$0x1]
  %v4183 = vperm.slane %v4181, 0
  %v4201 = vunpack.c.l.b16 %v4164
  %v4202 = vunpack.c.l.b16 %v4165
  %v4203 = vunpack.c.l.b16 %v4166
  %v4204 = vunpack.c.l.b16 %v4167
  %v4205 = vunpack.c.l.b16 %v4168
  %v4206 = vunpack.c.l.b16 %v4169
  %v4207 = vunpack.c.l.b16 %v4170
  %v4208 = vunpack.c.l.b16 %v4171
  %v4209 = vunpack.c.l.b16 %v4172
  %v4210 = vunpack.c.l.b16 %v4173
  %v4211 = vunpack.c.l.b16 %v4174
  %v4212 = vunpack.c.l.b16 %v4175
  %v4213 = vunpack.c.l.b16 %v4176
  %v4214 = vunpack.c.l.b16 %v4177
  %v4215 = vunpack.c.l.b16 %v4178
  %v4216 = vunpack.c.l.b16 %v4179
  %v4217 = vpack.c.b16 %v4202, %v4201
  %v4218 = vpack.c.b16 %v4204, %v4203
  %v4219 = vpack.c.b16 %v4206, %v4205
  %v4220 = vpack.c.b16 %v4208, %v4207
  %v4221 = vpack.c.b16 %v4210, %v4209
  %v4222 = vpack.c.b16 %v4212, %v4211
  %v4223 = vpack.c.b16 %v4214, %v4213
  %v4224 = vpack.c.b16 %v4216, %v4215
  %4233 = vmatpush.bf16.msra.mxu0 %v4224
  %4234 = vmatpush.bf16.msra.mxu0 %v4223
  %4235 = vmatpush.bf16.msra.mxu0 %v4222
  %4236 = vmatpush.bf16.msra.mxu0 %v4221
  %4237 = vmatpush.bf16.msra.mxu0 %v4220
  %4238 = vmatpush.bf16.msra.mxu0 %v4219
  %4239 = vmatpush.bf16.msra.mxu0 %v4218
  %4240 = vmatpush.bf16.msra.mxu0 %v4217
  %4241 = vmatmul.bf16.gmra.mxu0 %v4180
  %v4242 = vpop.f32.mrf.mxu0
  %v4243 = vadd.f32 %v4183, %v4242
  %v4244 = vpop.f32.mrf.mxu0
  %4245 = vdwg.mxu0
  %v4246 = vmax.f32 %v4243, 0.0
  %v4247 = vld [vmem:[%s11] sm:$0xf]
  %v4248 = vld [vmem:[%s11 + $0x4] sm:$0xf]
  %v4249 = vld [vmem:[%s11 + $0x8] sm:$0xf]
  %v4250 = vld [vmem:[%s11 + $0xc] sm:$0xf]
  %v4251 = vld [vmem:[%s11 + $0x10] sm:$0xf]
  %v4252 = vld [vmem:[%s11 + $0x14] sm:$0xf]
  %v4253 = vld [vmem:[%s11 + $0x18] sm:$0xf]
  %v4254 = vld [vmem:[%s11 + $0x1c] sm:$0xf]
  %v4255 = vld [vmem:[%s11 + $0x20] sm:$0xf]
  %v4256 = vld [vmem:[%s11 + $0x24] sm:$0xf]
  %v4257 = vld [vmem:[%s11 + $0x28] sm:$0xf]
  %v4258 = vld [vmem:[%s11 + $0x2c] sm:$0xf]
  %v4259 = vld [vmem:[%s11 + $0x30] sm:$0xf]
  %v4260 = vld [vmem:[%s11 + $0x34] sm:$0xf]
  %v4261 = vld [vmem:[%s11 + $0x38] sm:$0xf]
  %v4262 = vld [vmem:[%s11 + $0x3c] sm:$0xf]
  %v4263 = vpack.c.bf16 %v4246, %v4246
  %v4264 = vld [vmem:[%s12] sm:$0x1]
  %v4266 = vperm.slane %v4264, 0
  %v4284 = vunpack.c.l.b16 %v4247
  %v4285 = vunpack.c.l.b16 %v4248
  %v4286 = vunpack.c.l.b16 %v4249
  %v4287 = vunpack.c.l.b16 %v4250
  %v4288 = vunpack.c.l.b16 %v4251
  %v4289 = vunpack.c.l.b16 %v4252
  %v4290 = vunpack.c.l.b16 %v4253
  %v4291 = vunpack.c.l.b16 %v4254
  %v4292 = vunpack.c.l.b16 %v4255
  %v4293 = vunpack.c.l.b16 %v4256
  %v4294 = vunpack.c.l.b16 %v4257
  %v4295 = vunpack.c.l.b16 %v4258
  %v4296 = vunpack.c.l.b16 %v4259
  %v4297 = vunpack.c.l.b16 %v4260
  %v4298 = vunpack.c.l.b16 %v4261
  %v4299 = vunpack.c.l.b16 %v4262
  %v4300 = vpack.c.b16 %v4285, %v4284
  %v4301 = vpack.c.b16 %v4287, %v4286
  %v4302 = vpack.c.b16 %v4289, %v4288
  %v4303 = vpack.c.b16 %v4291, %v4290
  %v4304 = vpack.c.b16 %v4293, %v4292
  %v4305 = vpack.c.b16 %v4295, %v4294
  %v4306 = vpack.c.b16 %v4297, %v4296
  %v4307 = vpack.c.b16 %v4299, %v4298
  %4316 = vmatpush.bf16.msra.mxu0 %v4307
  %4317 = vmatpush.bf16.msra.mxu0 %v4306
  %4318 = vmatpush.bf16.msra.mxu0 %v4305
  %4319 = vmatpush.bf16.msra.mxu0 %v4304
  %4320 = vmatpush.bf16.msra.mxu0 %v4303
  %4321 = vmatpush.bf16.msra.mxu0 %v4302
  %4322 = vmatpush.bf16.msra.mxu0 %v4301
  %4323 = vmatpush.bf16.msra.mxu0 %v4300
  %4324 = vmatmul.bf16.gmra.mxu0 %v4263
  %v4325 = vpop.f32.mrf.mxu0
  %v4326 = vadd.f32 %v4266, %v4325
  %v4327 = vpop.f32.mrf.mxu0
  %4328 = vdwg.mxu0
  %v4329 = vlaneseq
  %v4330 = vand.u32 %v4329, 127
  %vm4331 = vcmp.lt.s32.totalorder %v4330, 10
  %v4332 = vsel %vm4331, %v4326, -1e+30
  %4333 = vmax.xlane.f32.xlu0 %v4332
  %v4334 = vpop.xlane.xlu0 %4333
  %v4335 = vsub.f32 %v4332, %v4334
  %v4336 = vmul.f32 %v4335, 1.442695
  %v4337 = vpow.pop %v4336
  %4338 = vadd.xlane.f32.xlu0 %v4337
  %v4339 = vpop.xlane.xlu0 %4338
  %v4340 = vlog2.pop %v4339
  %v4341 = vmul.f32 %v4340, 0.6931472
  %v4342 = vsub.f32 %v4335, %v4341
  %4343 = vst [vmem:[%s13] sm:$0xff] %v4342
  // Predicated region
  $region54: #{lenet5_forward.1} parent=0 // pred_check
    _
  $region55: #{lenet5_forward.1} parent=0 // pred_check_branch
    %4345 = sbr.rel (0) target = $region57
  $region56: #{lenet5_forward.1} parent=0 // pred_region
    _
  $region57: #{lenet5_forward.1} parent=0 // pred_fallthru
    _
  // Predicated region
  $region58: #{lenet5_forward.1} parent=0 // pred_check
    _
  $region59: #{lenet5_forward.1} parent=0 // pred_check_branch
    %4347 = sbr.rel (0) target = $region61
  $region60: #{lenet5_forward.1} parent=0 // pred_region
    _
  $region61: #{lenet5_forward.1} parent=0 // pred_fallthru
    _

</llo_original>
